<compile_context>
chip_gen: v7x
topology: tpu7x:2x2x1
jax: 0.10.0
libtpu: 0.0.40
codegen_flags: <defaults>
</compile_context>

<pallas_src>
import math
from functools import partial

import jax
import jax.numpy as jnp
from jax import lax
from jax.experimental import pallas as pl
from jax.experimental.pallas import tpu as pltpu


def mha_kernel(x_ref, z_ref,
               w_toq_ref, b_toq_ref,
               wq_ref, wk_ref, wv_ref,
               bq_ref, bk_ref, bv_ref,
               wo_ref, bo_ref,
               out_ref, attnw_ref=None,
               *, n_heads, compute_dtype):
    Bt, S, L = x_ref.shape
    D = wq_ref.shape[1]
    hd = D // n_heads
    need_weights = attnw_ref is not None

    # Flatten (Bt, S) so every projection matmul sees Bt*S rows on the MXU.
    x = x_ref[...].reshape(Bt * S, L).astype(compute_dtype)
    z = z_ref[...].reshape(Bt * S, D).astype(compute_dtype)

    # to_q linear (bf16 operands, f32 accumulation).
    q0 = jnp.dot(x, w_toq_ref[...], preferred_element_type=jnp.float32) + b_toq_ref[...]
    q0 = q0.astype(compute_dtype)

    # MultiheadAttention in-projection; query = key = q0, value = z.
    # The 1/sqrt(hd) softmax scale is already folded into wq / bq host-side.
    Q = (jnp.dot(q0, wq_ref[...], preferred_element_type=jnp.float32)
         + bq_ref[...]).astype(compute_dtype).reshape(Bt, S, D)
    K = (jnp.dot(q0, wk_ref[...], preferred_element_type=jnp.float32)
         + bk_ref[...]).astype(compute_dtype).reshape(Bt, S, D)
    V = (jnp.dot(z, wv_ref[...], preferred_element_type=jnp.float32)
         + bv_ref[...]).astype(compute_dtype).reshape(Bt, S, D)

    acc = jnp.zeros((Bt * S, D), jnp.float32)          # fused (softmax @ V) @ Wo
    if need_weights:
        w_sum = jnp.zeros((Bt, S, S), jnp.float32)

    dn_qk = (((2,), (2,)), ((0,), (0,)))   # (Bt,S,hd) x (Bt,S,hd) -> (Bt,S,S), no .T
    dn_pv = (((2,), (1,)), ((0,), (0,)))   # (Bt,S,S)  x (Bt,S,hd) -> (Bt,S,hd)

    for h in range(n_heads):               # static unroll; hd is tiny
        sl = slice(h * hd, (h + 1) * hd)
        Qh = Q[:, :, sl]
        Kh = K[:, :, sl]
        Vh = V[:, :, sl]

        s = lax.dot_general(Qh, Kh, dn_qk, preferred_element_type=jnp.float32)
        s = s - jnp.max(s, axis=-1, keepdims=True)
        e = jnp.exp(s)
        p = e * pl.reciprocal(jnp.sum(e, axis=-1, keepdims=True), approx=True)
        if need_weights:
            w_sum = w_sum + p

        oh = lax.dot_general(p.astype(compute_dtype), Vh, dn_pv,
                             preferred_element_type=jnp.float32)      # (Bt,S,hd)
        # Fused output projection: accumulate this head's contribution directly
        # into the (Bt*S, D) accumulator -- no concatenate over heads.
        acc = acc + jnp.dot(oh.reshape(Bt * S, hd).astype(compute_dtype),
                            wo_ref[h], preferred_element_type=jnp.float32)

    out = (acc + bo_ref[...]).reshape(Bt, S, D)
    out_ref[...] = out.astype(out_ref.dtype)
    if need_weights:
        attnw_ref[...] = (w_sum * (1.0 / n_heads)).astype(attnw_ref.dtype)


def _block_bytes(bt, S, D, L):
    """Rough f32-equivalent VMEM footprint of one grid step."""
    rows = bt * S
    io = 2 * 4 * (rows * L + 2 * rows * D + bt * S * S)       # double-buffered blocks
    tmp = 4 * (rows * (L + 6 * D) + 4 * bt * S * S)           # q0/Q/K/V/acc + score temps
    wts = 4 * (L * D + 4 * D * D + 6 * D)                     # weights + biases
    return io + tmp + wts


def _choose_batch_block(B, S, D, L, budget_bytes=12 * 2**20):
    """Largest divisor of B whose per-step working set fits a conservative
    VMEM budget (also safe for v7x's smaller 64 MiB VMEM)."""
    best = 1
    for bt in range(1, B + 1):
        if B % bt == 0 and _block_bytes(bt, S, D, L) <= budget_bytes:
            best = bt
    return best


def mha_forward(x, z, params, n_heads, *, need_weights=True,
                compute_dtype=jnp.bfloat16, batch_block=None):
    B, S, L = x.shape
    D = z.shape[-1]
    assert D % n_heads == 0, "latent_dim must be divisible by n_heads"
    hd = D // n_heads
    scale = 1.0 / math.sqrt(hd)
    f32 = jnp.float32

    # PyTorch-convention (out, in) -> (in, out) so the kernel computes x @ W.
    # The softmax scale is folded into the query projection here (free).
    w_toq = params["to_q_w"].T.astype(compute_dtype)                       # (L, D)
    b_toq = params["to_q_b"].reshape(1, D).astype(f32)
    wq = (params["in_proj_w"][0 * D:1 * D].T * scale).astype(compute_dtype)
    wk = params["in_proj_w"][1 * D:2 * D].T.astype(compute_dtype)
    wv = params["in_proj_w"][2 * D:3 * D].T.astype(compute_dtype)
    bq = (params["in_proj_b"][0 * D:1 * D] * scale).reshape(1, D).astype(f32)
    bk = params["in_proj_b"][1 * D:2 * D].reshape(1, D).astype(f32)
    bv = params["in_proj_b"][2 * D:3 * D].reshape(1, D).astype(f32)
    # out_proj reshaped per head so the kernel indexes wo_ref[h] (no sublane slicing).
    wo = params["out_proj_w"].T.reshape(n_heads, hd, D).astype(compute_dtype)
    bo = params["out_proj_b"].reshape(1, D).astype(f32)

    if batch_block is None:
        batch_block = _choose_batch_block(B, S, D, L)
    Bt = batch_block
    assert B % Bt == 0, "batch_block must divide the batch size"

    def const_spec(shape):
        nd = len(shape)
        return pl.BlockSpec(shape, lambda b, _n=nd: (0,) * _n)

    in_specs = [
        pl.BlockSpec((Bt, S, L), lambda b: (b, 0, 0)),                 # x
        pl.BlockSpec((Bt, S, D), lambda b: (b, 0, 0)),                 # z
        const_spec((L, D)), const_spec((1, D)),                        # to_q
        const_spec((D, D)), const_spec((D, D)), const_spec((D, D)),    # Wq, Wk, Wv
        const_spec((1, D)), const_spec((1, D)), const_spec((1, D)),    # bq, bk, bv
        const_spec((n_heads, hd, D)), const_spec((1, D)),              # Wo, bo
    ]

    out_shape_o = jax.ShapeDtypeStruct((B, S, D), f32)
    out_spec_o = pl.BlockSpec((Bt, S, D), lambda b: (b, 0, 0))
    if need_weights:
        out_shape = (out_shape_o, jax.ShapeDtypeStruct((B, S, S), f32))
        out_specs = (out_spec_o, pl.BlockSpec((Bt, S, S), lambda b: (b, 0, 0)))
    else:
        out_shape = out_shape_o
        out_specs = out_spec_o

    vmem_limit = int(min(48 * 2**20, max(16 * 2**20, 2 * _block_bytes(Bt, S, D, L))))

    kernel = partial(mha_kernel, n_heads=n_heads, compute_dtype=compute_dtype)
    result = pl.pallas_call(
        kernel,
        out_shape=out_shape,
        grid=(B // Bt,),
        in_specs=in_specs,
        out_specs=out_specs,
        compiler_params=pltpu.CompilerParams(
            dimension_semantics=("parallel",),   # batch blocks are independent
            vmem_limit_bytes=vmem_limit,
        ),
    )(x, z, w_toq, b_toq, wq, wk, wv, bq, bk, bv, wo, bo)

    if need_weights:
        attn_out, attn_weights = result
        return attn_out, attn_weights
    return result, None


def init_params(key, n_leads, latent_dim):
    ks = jax.random.split(key, 6)
    scale = 0.1
    return {
        # PyTorch-convention shapes (out_features, in_features)
        "to_q_w": scale * jax.random.normal(ks[0], (latent_dim, n_leads), jnp.float32),
        "to_q_b": scale * jax.random.normal(ks[1], (latent_dim,), jnp.float32),
        "in_proj_w": scale * jax.random.normal(ks[2], (3 * latent_dim, latent_dim), jnp.float32),
        "in_proj_b": scale * jax.random.normal(ks[3], (3 * latent_dim,), jnp.float32),
        "out_proj_w": scale * jax.random.normal(ks[4], (latent_dim, latent_dim), jnp.float32),
        "out_proj_b": scale * jax.random.normal(ks[5], (latent_dim,), jnp.float32),
    }


if __name__ == "__main__":
    B, S = 2, 8
    n_leads, latent_dim, n_heads = 4, 32, 8

    key = jax.random.PRNGKey(0)
    kx, kz, kp = jax.random.split(key, 3)
    x = jax.random.normal(kx, (B, S, n_leads), jnp.float32)
    z = jax.random.normal(kz, (B, S, latent_dim), jnp.float32)
    params = init_params(kp, n_leads, latent_dim)

    attn_out, attn_weights = mha_forward(x, z, params, n_heads)
    jax.block_until_ready((attn_out, attn_weights))

    assert attn_out.shape == (B, S, latent_dim)
    assert attn_weights.shape == (B, S, S)
    assert bool(jnp.all(jnp.isfinite(attn_out)))
    # Averaged softmax rows should sum to ~1 (loose tol: approx reciprocal + bf16).
    row_sums = jnp.sum(attn_weights, axis=-1)
    assert bool(jnp.all(jnp.abs(row_sums - 1.0) < 5e-2))
    print("KERNEL_OK")
</pallas_src>

<mosaic_0001>
module attributes {stable_mosaic.version = 11 : i64} {
  func.func @mha_kernel(%arg0: i32, %arg1: memref<2x8x4xf32, #tpu.memory_space<vmem>>, %arg2: memref<2x8x32xf32, #tpu.memory_space<vmem>>, %arg3: memref<4x32xbf16, #tpu.memory_space<vmem>>, %arg4: memref<1x32xf32, #tpu.memory_space<vmem>>, %arg5: memref<32x32xbf16, #tpu.memory_space<vmem>>, %arg6: memref<32x32xbf16, #tpu.memory_space<vmem>>, %arg7: memref<32x32xbf16, #tpu.memory_space<vmem>>, %arg8: memref<1x32xf32, #tpu.memory_space<vmem>>, %arg9: memref<1x32xf32, #tpu.memory_space<vmem>>, %arg10: memref<1x32xf32, #tpu.memory_space<vmem>>, %arg11: memref<8x4x32xbf16, #tpu.memory_space<vmem>>, %arg12: memref<1x32xf32, #tpu.memory_space<vmem>>, %arg13: memref<2x8x32xf32, #tpu.memory_space<vmem>>, %arg14: memref<2x8x8xf32, #tpu.memory_space<vmem>>) attributes {dimension_semantics = [#tpu.dimension_semantics<parallel>], iteration_bounds = array<i64: 1>, scalar_prefetch = 0 : i64, scratch_operands = 0 : i64, tpu.core_type = #tpu.core_type<tc>, window_params = [{transform_indices = @transform_0, window_bounds = array<i64: 2, 8, 4>}, {transform_indices = @transform_1, window_bounds = array<i64: 2, 8, 32>}, {pipeline_mode = #tpu.pipeline_mode<synchronous>, transform_indices = @transform_2, window_bounds = array<i64: 4, 32>}, {pipeline_mode = #tpu.pipeline_mode<synchronous>, transform_indices = @transform_3, window_bounds = array<i64: 1, 32>}, {pipeline_mode = #tpu.pipeline_mode<synchronous>, transform_indices = @transform_4, window_bounds = array<i64: 32, 32>}, {pipeline_mode = #tpu.pipeline_mode<synchronous>, transform_indices = @transform_5, window_bounds = array<i64: 32, 32>}, {pipeline_mode = #tpu.pipeline_mode<synchronous>, transform_indices = @transform_6, window_bounds = array<i64: 32, 32>}, {pipeline_mode = #tpu.pipeline_mode<synchronous>, transform_indices = @transform_7, window_bounds = array<i64: 1, 32>}, {pipeline_mode = #tpu.pipeline_mode<synchronous>, transform_indices = @transform_8, window_bounds = array<i64: 1, 32>}, {pipeline_mode = #tpu.pipeline_mode<synchronous>, transform_indices = @transform_9, window_bounds = array<i64: 1, 32>}, {pipeline_mode = #tpu.pipeline_mode<synchronous>, transform_indices = @transform_10, window_bounds = array<i64: 8, 4, 32>}, {pipeline_mode = #tpu.pipeline_mode<synchronous>, transform_indices = @transform_11, window_bounds = array<i64: 1, 32>}, {transform_indices = @transform_12, window_bounds = array<i64: 2, 8, 32>}, {transform_indices = @transform_13, window_bounds = array<i64: 2, 8, 8>}]} {
    %c0 = arith.constant 0 : index
    %c0_0 = arith.constant 0 : index
    %c0_1 = arith.constant 0 : index
    %0 = vector.load %arg1[%c0, %c0_0, %c0_1] : memref<2x8x4xf32, #tpu.memory_space<vmem>>, vector<2x8x4xf32>
    %1 = vector.shape_cast %0 : vector<2x8x4xf32> to vector<16x4xf32>
    %2 = arith.truncf %1 : vector<16x4xf32> to vector<16x4xbf16>
    %c0_2 = arith.constant 0 : index
    %c0_3 = arith.constant 0 : index
    %c0_4 = arith.constant 0 : index
    %3 = vector.load %arg2[%c0_2, %c0_3, %c0_4] : memref<2x8x32xf32, #tpu.memory_space<vmem>>, vector<2x8x32xf32>
    %4 = vector.shape_cast %3 : vector<2x8x32xf32> to vector<16x32xf32>
    %5 = arith.truncf %4 : vector<16x32xf32> to vector<16x32xbf16>
    %c0_5 = arith.constant 0 : index
    %c0_6 = arith.constant 0 : index
    %6 = vector.load %arg3[%c0_5, %c0_6] : memref<4x32xbf16, #tpu.memory_space<vmem>>, vector<4x32xbf16>
    %cst = arith.constant dense<0.000000e+00> : vector<16x32xf32>
    %7 = tpu.matmul %2, %6, %cst {dimension_numbers = #tpu.dot_dimension_numbers<[1], [0], [0], [1], [0, 0, 1, 1], [], []>} : vector<16x4xbf16>, vector<4x32xbf16>, vector<16x32xf32> -> vector<16x32xf32>
    %c0_7 = arith.constant 0 : index
    %c0_8 = arith.constant 0 : index
    %8 = vector.load %arg4[%c0_7, %c0_8] : memref<1x32xf32, #tpu.memory_space<vmem>>, vector<1x32xf32>
    %9 = vector.broadcast %8 : vector<1x32xf32> to vector<16x32xf32>
    %10 = arith.addf %7, %9 : vector<16x32xf32>
    %11 = arith.truncf %10 : vector<16x32xf32> to vector<16x32xbf16>
    %c0_9 = arith.constant 0 : index
    %c0_10 = arith.constant 0 : index
    %12 = vector.load %arg5[%c0_9, %c0_10] : memref<32x32xbf16, #tpu.memory_space<vmem>>, vector<32x32xbf16>
    %cst_11 = arith.constant dense<0.000000e+00> : vector<16x32xf32>
    %13 = tpu.matmul %11, %12, %cst_11 {dimension_numbers = #tpu.dot_dimension_numbers<[1], [0], [0], [1], [0, 0, 1, 1], [], []>} : vector<16x32xbf16>, vector<32x32xbf16>, vector<16x32xf32> -> vector<16x32xf32>
    %c0_12 = arith.constant 0 : index
    %c0_13 = arith.constant 0 : index
    %14 = vector.load %arg8[%c0_12, %c0_13] : memref<1x32xf32, #tpu.memory_space<vmem>>, vector<1x32xf32>
    %15 = vector.broadcast %14 : vector<1x32xf32> to vector<16x32xf32>
    %16 = arith.addf %13, %15 : vector<16x32xf32>
    %17 = arith.truncf %16 : vector<16x32xf32> to vector<16x32xbf16>
    %18 = vector.shape_cast %17 : vector<16x32xbf16> to vector<2x8x32xbf16>
    %c0_14 = arith.constant 0 : index
    %c0_15 = arith.constant 0 : index
    %19 = vector.load %arg6[%c0_14, %c0_15] : memref<32x32xbf16, #tpu.memory_space<vmem>>, vector<32x32xbf16>
    %cst_16 = arith.constant dense<0.000000e+00> : vector<16x32xf32>
    %20 = tpu.matmul %11, %19, %cst_16 {dimension_numbers = #tpu.dot_dimension_numbers<[1], [0], [0], [1], [0, 0, 1, 1], [], []>} : vector<16x32xbf16>, vector<32x32xbf16>, vector<16x32xf32> -> vector<16x32xf32>
    %c0_17 = arith.constant 0 : index
    %c0_18 = arith.constant 0 : index
    %21 = vector.load %arg9[%c0_17, %c0_18] : memref<1x32xf32, #tpu.memory_space<vmem>>, vector<1x32xf32>
    %22 = vector.broadcast %21 : vector<1x32xf32> to vector<16x32xf32>
    %23 = arith.addf %20, %22 : vector<16x32xf32>
    %24 = arith.truncf %23 : vector<16x32xf32> to vector<16x32xbf16>
    %25 = vector.shape_cast %24 : vector<16x32xbf16> to vector<2x8x32xbf16>
    %c0_19 = arith.constant 0 : index
    %c0_20 = arith.constant 0 : index
    %26 = vector.load %arg7[%c0_19, %c0_20] : memref<32x32xbf16, #tpu.memory_space<vmem>>, vector<32x32xbf16>
    %cst_21 = arith.constant dense<0.000000e+00> : vector<16x32xf32>
    %27 = tpu.matmul %5, %26, %cst_21 {dimension_numbers = #tpu.dot_dimension_numbers<[1], [0], [0], [1], [0, 0, 1, 1], [], []>} : vector<16x32xbf16>, vector<32x32xbf16>, vector<16x32xf32> -> vector<16x32xf32>
    %c0_22 = arith.constant 0 : index
    %c0_23 = arith.constant 0 : index
    %28 = vector.load %arg10[%c0_22, %c0_23] : memref<1x32xf32, #tpu.memory_space<vmem>>, vector<1x32xf32>
    %29 = vector.broadcast %28 : vector<1x32xf32> to vector<16x32xf32>
    %30 = arith.addf %27, %29 : vector<16x32xf32>
    %31 = arith.truncf %30 : vector<16x32xf32> to vector<16x32xbf16>
    %32 = vector.shape_cast %31 : vector<16x32xbf16> to vector<2x8x32xbf16>
    %cst_24 = arith.constant 0.000000e+00 : f32
    %33 = vector.broadcast %cst_24 : f32 to vector<16x32xf32>
    %cst_25 = arith.constant 0.000000e+00 : f32
    %34 = vector.broadcast %cst_25 : f32 to vector<2x8x8xf32>
    %35 = vector.extract_strided_slice %18 {offsets = [0, 0, 0], sizes = [2, 8, 4], strides = [1, 1, 1]} : vector<2x8x32xbf16> to vector<2x8x4xbf16>
    %36 = vector.extract_strided_slice %25 {offsets = [0, 0, 0], sizes = [2, 8, 4], strides = [1, 1, 1]} : vector<2x8x32xbf16> to vector<2x8x4xbf16>
    %37 = vector.extract_strided_slice %32 {offsets = [0, 0, 0], sizes = [2, 8, 4], strides = [1, 1, 1]} : vector<2x8x32xbf16> to vector<2x8x4xbf16>
    %cst_26 = arith.constant dense<0.000000e+00> : vector<2x8x8xf32>
    %38 = tpu.matmul %35, %36, %cst_26 {dimension_numbers = #tpu.dot_dimension_numbers<[2], [2], [1], [1], [0, 0, 0, 1, 1, 1], [0], [0]>} : vector<2x8x4xbf16>, vector<2x8x4xbf16>, vector<2x8x8xf32> -> vector<2x8x8xf32>
    %cst_27 = arith.constant dense<0xFF800000> : vector<2x8xf32>
    %39 = vector.multi_reduction <maximumf>, %38, %cst_27 [2] : vector<2x8x8xf32> to vector<2x8xf32>
    %40 = vector.shape_cast %39 : vector<2x8xf32> to vector<2x8x1xf32>
    %41 = vector.broadcast %40 : vector<2x8x1xf32> to vector<2x8x8xf32>
    %42 = arith.subf %38, %41 : vector<2x8x8xf32>
    %43 = math.exp %42 : vector<2x8x8xf32>
    %cst_28 = arith.constant dense<0.000000e+00> : vector<2x8xf32>
    %44 = vector.multi_reduction <add>, %43, %cst_28 [2] : vector<2x8x8xf32> to vector<2x8xf32>
    %45 = vector.shape_cast %44 : vector<2x8xf32> to vector<2x8x1xf32>
    %46 = tpu.reciprocal %45 {approx = true} : vector<2x8x1xf32> -> vector<2x8x1xf32>
    %47 = vector.broadcast %46 : vector<2x8x1xf32> to vector<2x8x8xf32>
    %48 = arith.mulf %43, %47 : vector<2x8x8xf32>
    %49 = arith.addf %34, %48 : vector<2x8x8xf32>
    %50 = arith.truncf %48 : vector<2x8x8xf32> to vector<2x8x8xbf16>
    %cst_29 = arith.constant dense<0.000000e+00> : vector<2x8x4xf32>
    %51 = tpu.matmul %50, %37, %cst_29 {dimension_numbers = #tpu.dot_dimension_numbers<[2], [1], [1], [2], [0, 0, 0, 1, 1, 2], [0], [0]>} : vector<2x8x8xbf16>, vector<2x8x4xbf16>, vector<2x8x4xf32> -> vector<2x8x4xf32>
    %52 = vector.shape_cast %51 : vector<2x8x4xf32> to vector<16x4xf32>
    %53 = arith.truncf %52 : vector<16x4xf32> to vector<16x4xbf16>
    %c0_30 = arith.constant 0 : index
    %c0_31 = arith.constant 0 : index
    %c0_32 = arith.constant 0 : index
    %54 = vector.load %arg11[%c0_30, %c0_31, %c0_32] : memref<8x4x32xbf16, #tpu.memory_space<vmem>>, vector<1x4x32xbf16>
    %55 = vector.shape_cast %54 : vector<1x4x32xbf16> to vector<4x32xbf16>
    %cst_33 = arith.constant dense<0.000000e+00> : vector<16x32xf32>
    %56 = tpu.matmul %53, %55, %cst_33 {dimension_numbers = #tpu.dot_dimension_numbers<[1], [0], [0], [1], [0, 0, 1, 1], [], []>} : vector<16x4xbf16>, vector<4x32xbf16>, vector<16x32xf32> -> vector<16x32xf32>
    %57 = arith.addf %33, %56 : vector<16x32xf32>
    %58 = vector.extract_strided_slice %18 {offsets = [0, 0, 4], sizes = [2, 8, 4], strides = [1, 1, 1]} : vector<2x8x32xbf16> to vector<2x8x4xbf16>
    %59 = vector.extract_strided_slice %25 {offsets = [0, 0, 4], sizes = [2, 8, 4], strides = [1, 1, 1]} : vector<2x8x32xbf16> to vector<2x8x4xbf16>
    %60 = vector.extract_strided_slice %32 {offsets = [0, 0, 4], sizes = [2, 8, 4], strides = [1, 1, 1]} : vector<2x8x32xbf16> to vector<2x8x4xbf16>
    %cst_34 = arith.constant dense<0.000000e+00> : vector<2x8x8xf32>
    %61 = tpu.matmul %58, %59, %cst_34 {dimension_numbers = #tpu.dot_dimension_numbers<[2], [2], [1], [1], [0, 0, 0, 1, 1, 1], [0], [0]>} : vector<2x8x4xbf16>, vector<2x8x4xbf16>, vector<2x8x8xf32> -> vector<2x8x8xf32>
    %cst_35 = arith.constant dense<0xFF800000> : vector<2x8xf32>
    %62 = vector.multi_reduction <maximumf>, %61, %cst_35 [2] : vector<2x8x8xf32> to vector<2x8xf32>
    %63 = vector.shape_cast %62 : vector<2x8xf32> to vector<2x8x1xf32>
    %64 = vector.broadcast %63 : vector<2x8x1xf32> to vector<2x8x8xf32>
    %65 = arith.subf %61, %64 : vector<2x8x8xf32>
    %66 = math.exp %65 : vector<2x8x8xf32>
    %cst_36 = arith.constant dense<0.000000e+00> : vector<2x8xf32>
    %67 = vector.multi_reduction <add>, %66, %cst_36 [2] : vector<2x8x8xf32> to vector<2x8xf32>
    %68 = vector.shape_cast %67 : vector<2x8xf32> to vector<2x8x1xf32>
    %69 = tpu.reciprocal %68 {approx = true} : vector<2x8x1xf32> -> vector<2x8x1xf32>
    %70 = vector.broadcast %69 : vector<2x8x1xf32> to vector<2x8x8xf32>
    %71 = arith.mulf %66, %70 : vector<2x8x8xf32>
    %72 = arith.addf %49, %71 : vector<2x8x8xf32>
    %73 = arith.truncf %71 : vector<2x8x8xf32> to vector<2x8x8xbf16>
    %cst_37 = arith.constant dense<0.000000e+00> : vector<2x8x4xf32>
    %74 = tpu.matmul %73, %60, %cst_37 {dimension_numbers = #tpu.dot_dimension_numbers<[2], [1], [1], [2], [0, 0, 0, 1, 1, 2], [0], [0]>} : vector<2x8x8xbf16>, vector<2x8x4xbf16>, vector<2x8x4xf32> -> vector<2x8x4xf32>
    %75 = vector.shape_cast %74 : vector<2x8x4xf32> to vector<16x4xf32>
    %76 = arith.truncf %75 : vector<16x4xf32> to vector<16x4xbf16>
    %c1 = arith.constant 1 : index
    %c0_38 = arith.constant 0 : index
    %c0_39 = arith.constant 0 : index
    %77 = vector.load %arg11[%c1, %c0_38, %c0_39] : memref<8x4x32xbf16, #tpu.memory_space<vmem>>, vector<1x4x32xbf16>
    %78 = vector.shape_cast %77 : vector<1x4x32xbf16> to vector<4x32xbf16>
    %cst_40 = arith.constant dense<0.000000e+00> : vector<16x32xf32>
    %79 = tpu.matmul %76, %78, %cst_40 {dimension_numbers = #tpu.dot_dimension_numbers<[1], [0], [0], [1], [0, 0, 1, 1], [], []>} : vector<16x4xbf16>, vector<4x32xbf16>, vector<16x32xf32> -> vector<16x32xf32>
    %80 = arith.addf %57, %79 : vector<16x32xf32>
    %81 = vector.extract_strided_slice %18 {offsets = [0, 0, 8], sizes = [2, 8, 4], strides = [1, 1, 1]} : vector<2x8x32xbf16> to vector<2x8x4xbf16>
    %82 = vector.extract_strided_slice %25 {offsets = [0, 0, 8], sizes = [2, 8, 4], strides = [1, 1, 1]} : vector<2x8x32xbf16> to vector<2x8x4xbf16>
    %83 = vector.extract_strided_slice %32 {offsets = [0, 0, 8], sizes = [2, 8, 4], strides = [1, 1, 1]} : vector<2x8x32xbf16> to vector<2x8x4xbf16>
    %cst_41 = arith.constant dense<0.000000e+00> : vector<2x8x8xf32>
    %84 = tpu.matmul %81, %82, %cst_41 {dimension_numbers = #tpu.dot_dimension_numbers<[2], [2], [1], [1], [0, 0, 0, 1, 1, 1], [0], [0]>} : vector<2x8x4xbf16>, vector<2x8x4xbf16>, vector<2x8x8xf32> -> vector<2x8x8xf32>
    %cst_42 = arith.constant dense<0xFF800000> : vector<2x8xf32>
    %85 = vector.multi_reduction <maximumf>, %84, %cst_42 [2] : vector<2x8x8xf32> to vector<2x8xf32>
    %86 = vector.shape_cast %85 : vector<2x8xf32> to vector<2x8x1xf32>
    %87 = vector.broadcast %86 : vector<2x8x1xf32> to vector<2x8x8xf32>
    %88 = arith.subf %84, %87 : vector<2x8x8xf32>
    %89 = math.exp %88 : vector<2x8x8xf32>
    %cst_43 = arith.constant dense<0.000000e+00> : vector<2x8xf32>
    %90 = vector.multi_reduction <add>, %89, %cst_43 [2] : vector<2x8x8xf32> to vector<2x8xf32>
    %91 = vector.shape_cast %90 : vector<2x8xf32> to vector<2x8x1xf32>
    %92 = tpu.reciprocal %91 {approx = true} : vector<2x8x1xf32> -> vector<2x8x1xf32>
    %93 = vector.broadcast %92 : vector<2x8x1xf32> to vector<2x8x8xf32>
    %94 = arith.mulf %89, %93 : vector<2x8x8xf32>
    %95 = arith.addf %72, %94 : vector<2x8x8xf32>
    %96 = arith.truncf %94 : vector<2x8x8xf32> to vector<2x8x8xbf16>
    %cst_44 = arith.constant dense<0.000000e+00> : vector<2x8x4xf32>
    %97 = tpu.matmul %96, %83, %cst_44 {dimension_numbers = #tpu.dot_dimension_numbers<[2], [1], [1], [2], [0, 0, 0, 1, 1, 2], [0], [0]>} : vector<2x8x8xbf16>, vector<2x8x4xbf16>, vector<2x8x4xf32> -> vector<2x8x4xf32>
    %98 = vector.shape_cast %97 : vector<2x8x4xf32> to vector<16x4xf32>
    %99 = arith.truncf %98 : vector<16x4xf32> to vector<16x4xbf16>
    %c2 = arith.constant 2 : index
    %c0_45 = arith.constant 0 : index
    %c0_46 = arith.constant 0 : index
    %100 = vector.load %arg11[%c2, %c0_45, %c0_46] : memref<8x4x32xbf16, #tpu.memory_space<vmem>>, vector<1x4x32xbf16>
    %101 = vector.shape_cast %100 : vector<1x4x32xbf16> to vector<4x32xbf16>
    %cst_47 = arith.constant dense<0.000000e+00> : vector<16x32xf32>
    %102 = tpu.matmul %99, %101, %cst_47 {dimension_numbers = #tpu.dot_dimension_numbers<[1], [0], [0], [1], [0, 0, 1, 1], [], []>} : vector<16x4xbf16>, vector<4x32xbf16>, vector<16x32xf32> -> vector<16x32xf32>
    %103 = arith.addf %80, %102 : vector<16x32xf32>
    %104 = vector.extract_strided_slice %18 {offsets = [0, 0, 12], sizes = [2, 8, 4], strides = [1, 1, 1]} : vector<2x8x32xbf16> to vector<2x8x4xbf16>
    %105 = vector.extract_strided_slice %25 {offsets = [0, 0, 12], sizes = [2, 8, 4], strides = [1, 1, 1]} : vector<2x8x32xbf16> to vector<2x8x4xbf16>
    %106 = vector.extract_strided_slice %32 {offsets = [0, 0, 12], sizes = [2, 8, 4], strides = [1, 1, 1]} : vector<2x8x32xbf16> to vector<2x8x4xbf16>
    %cst_48 = arith.constant dense<0.000000e+00> : vector<2x8x8xf32>
    %107 = tpu.matmul %104, %105, %cst_48 {dimension_numbers = #tpu.dot_dimension_numbers<[2], [2], [1], [1], [0, 0, 0, 1, 1, 1], [0], [0]>} : vector<2x8x4xbf16>, vector<2x8x4xbf16>, vector<2x8x8xf32> -> vector<2x8x8xf32>
    %cst_49 = arith.constant dense<0xFF800000> : vector<2x8xf32>
    %108 = vector.multi_reduction <maximumf>, %107, %cst_49 [2] : vector<2x8x8xf32> to vector<2x8xf32>
    %109 = vector.shape_cast %108 : vector<2x8xf32> to vector<2x8x1xf32>
    %110 = vector.broadcast %109 : vector<2x8x1xf32> to vector<2x8x8xf32>
    %111 = arith.subf %107, %110 : vector<2x8x8xf32>
    %112 = math.exp %111 : vector<2x8x8xf32>
    %cst_50 = arith.constant dense<0.000000e+00> : vector<2x8xf32>
    %113 = vector.multi_reduction <add>, %112, %cst_50 [2] : vector<2x8x8xf32> to vector<2x8xf32>
    %114 = vector.shape_cast %113 : vector<2x8xf32> to vector<2x8x1xf32>
    %115 = tpu.reciprocal %114 {approx = true} : vector<2x8x1xf32> -> vector<2x8x1xf32>
    %116 = vector.broadcast %115 : vector<2x8x1xf32> to vector<2x8x8xf32>
    %117 = arith.mulf %112, %116 : vector<2x8x8xf32>
    %118 = arith.addf %95, %117 : vector<2x8x8xf32>
    %119 = arith.truncf %117 : vector<2x8x8xf32> to vector<2x8x8xbf16>
    %cst_51 = arith.constant dense<0.000000e+00> : vector<2x8x4xf32>
    %120 = tpu.matmul %119, %106, %cst_51 {dimension_numbers = #tpu.dot_dimension_numbers<[2], [1], [1], [2], [0, 0, 0, 1, 1, 2], [0], [0]>} : vector<2x8x8xbf16>, vector<2x8x4xbf16>, vector<2x8x4xf32> -> vector<2x8x4xf32>
    %121 = vector.shape_cast %120 : vector<2x8x4xf32> to vector<16x4xf32>
    %122 = arith.truncf %121 : vector<16x4xf32> to vector<16x4xbf16>
    %c3 = arith.constant 3 : index
    %c0_52 = arith.constant 0 : index
    %c0_53 = arith.constant 0 : index
    %123 = vector.load %arg11[%c3, %c0_52, %c0_53] : memref<8x4x32xbf16, #tpu.memory_space<vmem>>, vector<1x4x32xbf16>
    %124 = vector.shape_cast %123 : vector<1x4x32xbf16> to vector<4x32xbf16>
    %cst_54 = arith.constant dense<0.000000e+00> : vector<16x32xf32>
    %125 = tpu.matmul %122, %124, %cst_54 {dimension_numbers = #tpu.dot_dimension_numbers<[1], [0], [0], [1], [0, 0, 1, 1], [], []>} : vector<16x4xbf16>, vector<4x32xbf16>, vector<16x32xf32> -> vector<16x32xf32>
    %126 = arith.addf %103, %125 : vector<16x32xf32>
    %127 = vector.extract_strided_slice %18 {offsets = [0, 0, 16], sizes = [2, 8, 4], strides = [1, 1, 1]} : vector<2x8x32xbf16> to vector<2x8x4xbf16>
    %128 = vector.extract_strided_slice %25 {offsets = [0, 0, 16], sizes = [2, 8, 4], strides = [1, 1, 1]} : vector<2x8x32xbf16> to vector<2x8x4xbf16>
    %129 = vector.extract_strided_slice %32 {offsets = [0, 0, 16], sizes = [2, 8, 4], strides = [1, 1, 1]} : vector<2x8x32xbf16> to vector<2x8x4xbf16>
    %cst_55 = arith.constant dense<0.000000e+00> : vector<2x8x8xf32>
    %130 = tpu.matmul %127, %128, %cst_55 {dimension_numbers = #tpu.dot_dimension_numbers<[2], [2], [1], [1], [0, 0, 0, 1, 1, 1], [0], [0]>} : vector<2x8x4xbf16>, vector<2x8x4xbf16>, vector<2x8x8xf32> -> vector<2x8x8xf32>
    %cst_56 = arith.constant dense<0xFF800000> : vector<2x8xf32>
    %131 = vector.multi_reduction <maximumf>, %130, %cst_56 [2] : vector<2x8x8xf32> to vector<2x8xf32>
    %132 = vector.shape_cast %131 : vector<2x8xf32> to vector<2x8x1xf32>
    %133 = vector.broadcast %132 : vector<2x8x1xf32> to vector<2x8x8xf32>
    %134 = arith.subf %130, %133 : vector<2x8x8xf32>
    %135 = math.exp %134 : vector<2x8x8xf32>
    %cst_57 = arith.constant dense<0.000000e+00> : vector<2x8xf32>
    %136 = vector.multi_reduction <add>, %135, %cst_57 [2] : vector<2x8x8xf32> to vector<2x8xf32>
    %137 = vector.shape_cast %136 : vector<2x8xf32> to vector<2x8x1xf32>
    %138 = tpu.reciprocal %137 {approx = true} : vector<2x8x1xf32> -> vector<2x8x1xf32>
    %139 = vector.broadcast %138 : vector<2x8x1xf32> to vector<2x8x8xf32>
    %140 = arith.mulf %135, %139 : vector<2x8x8xf32>
    %141 = arith.addf %118, %140 : vector<2x8x8xf32>
    %142 = arith.truncf %140 : vector<2x8x8xf32> to vector<2x8x8xbf16>
    %cst_58 = arith.constant dense<0.000000e+00> : vector<2x8x4xf32>
    %143 = tpu.matmul %142, %129, %cst_58 {dimension_numbers = #tpu.dot_dimension_numbers<[2], [1], [1], [2], [0, 0, 0, 1, 1, 2], [0], [0]>} : vector<2x8x8xbf16>, vector<2x8x4xbf16>, vector<2x8x4xf32> -> vector<2x8x4xf32>
    %144 = vector.shape_cast %143 : vector<2x8x4xf32> to vector<16x4xf32>
    %145 = arith.truncf %144 : vector<16x4xf32> to vector<16x4xbf16>
    %c4 = arith.constant 4 : index
    %c0_59 = arith.constant 0 : index
    %c0_60 = arith.constant 0 : index
    %146 = vector.load %arg11[%c4, %c0_59, %c0_60] : memref<8x4x32xbf16, #tpu.memory_space<vmem>>, vector<1x4x32xbf16>
    %147 = vector.shape_cast %146 : vector<1x4x32xbf16> to vector<4x32xbf16>
    %cst_61 = arith.constant dense<0.000000e+00> : vector<16x32xf32>
    %148 = tpu.matmul %145, %147, %cst_61 {dimension_numbers = #tpu.dot_dimension_numbers<[1], [0], [0], [1], [0, 0, 1, 1], [], []>} : vector<16x4xbf16>, vector<4x32xbf16>, vector<16x32xf32> -> vector<16x32xf32>
    %149 = arith.addf %126, %148 : vector<16x32xf32>
    %150 = vector.extract_strided_slice %18 {offsets = [0, 0, 20], sizes = [2, 8, 4], strides = [1, 1, 1]} : vector<2x8x32xbf16> to vector<2x8x4xbf16>
    %151 = vector.extract_strided_slice %25 {offsets = [0, 0, 20], sizes = [2, 8, 4], strides = [1, 1, 1]} : vector<2x8x32xbf16> to vector<2x8x4xbf16>
    %152 = vector.extract_strided_slice %32 {offsets = [0, 0, 20], sizes = [2, 8, 4], strides = [1, 1, 1]} : vector<2x8x32xbf16> to vector<2x8x4xbf16>
    %cst_62 = arith.constant dense<0.000000e+00> : vector<2x8x8xf32>
    %153 = tpu.matmul %150, %151, %cst_62 {dimension_numbers = #tpu.dot_dimension_numbers<[2], [2], [1], [1], [0, 0, 0, 1, 1, 1], [0], [0]>} : vector<2x8x4xbf16>, vector<2x8x4xbf16>, vector<2x8x8xf32> -> vector<2x8x8xf32>
    %cst_63 = arith.constant dense<0xFF800000> : vector<2x8xf32>
    %154 = vector.multi_reduction <maximumf>, %153, %cst_63 [2] : vector<2x8x8xf32> to vector<2x8xf32>
    %155 = vector.shape_cast %154 : vector<2x8xf32> to vector<2x8x1xf32>
    %156 = vector.broadcast %155 : vector<2x8x1xf32> to vector<2x8x8xf32>
    %157 = arith.subf %153, %156 : vector<2x8x8xf32>
    %158 = math.exp %157 : vector<2x8x8xf32>
    %cst_64 = arith.constant dense<0.000000e+00> : vector<2x8xf32>
    %159 = vector.multi_reduction <add>, %158, %cst_64 [2] : vector<2x8x8xf32> to vector<2x8xf32>
    %160 = vector.shape_cast %159 : vector<2x8xf32> to vector<2x8x1xf32>
    %161 = tpu.reciprocal %160 {approx = true} : vector<2x8x1xf32> -> vector<2x8x1xf32>
    %162 = vector.broadcast %161 : vector<2x8x1xf32> to vector<2x8x8xf32>
    %163 = arith.mulf %158, %162 : vector<2x8x8xf32>
    %164 = arith.addf %141, %163 : vector<2x8x8xf32>
    %165 = arith.truncf %163 : vector<2x8x8xf32> to vector<2x8x8xbf16>
    %cst_65 = arith.constant dense<0.000000e+00> : vector<2x8x4xf32>
    %166 = tpu.matmul %165, %152, %cst_65 {dimension_numbers = #tpu.dot_dimension_numbers<[2], [1], [1], [2], [0, 0, 0, 1, 1, 2], [0], [0]>} : vector<2x8x8xbf16>, vector<2x8x4xbf16>, vector<2x8x4xf32> -> vector<2x8x4xf32>
    %167 = vector.shape_cast %166 : vector<2x8x4xf32> to vector<16x4xf32>
    %168 = arith.truncf %167 : vector<16x4xf32> to vector<16x4xbf16>
    %c5 = arith.constant 5 : index
    %c0_66 = arith.constant 0 : index
    %c0_67 = arith.constant 0 : index
    %169 = vector.load %arg11[%c5, %c0_66, %c0_67] : memref<8x4x32xbf16, #tpu.memory_space<vmem>>, vector<1x4x32xbf16>
    %170 = vector.shape_cast %169 : vector<1x4x32xbf16> to vector<4x32xbf16>
    %cst_68 = arith.constant dense<0.000000e+00> : vector<16x32xf32>
    %171 = tpu.matmul %168, %170, %cst_68 {dimension_numbers = #tpu.dot_dimension_numbers<[1], [0], [0], [1], [0, 0, 1, 1], [], []>} : vector<16x4xbf16>, vector<4x32xbf16>, vector<16x32xf32> -> vector<16x32xf32>
    %172 = arith.addf %149, %171 : vector<16x32xf32>
    %173 = vector.extract_strided_slice %18 {offsets = [0, 0, 24], sizes = [2, 8, 4], strides = [1, 1, 1]} : vector<2x8x32xbf16> to vector<2x8x4xbf16>
    %174 = vector.extract_strided_slice %25 {offsets = [0, 0, 24], sizes = [2, 8, 4], strides = [1, 1, 1]} : vector<2x8x32xbf16> to vector<2x8x4xbf16>
    %175 = vector.extract_strided_slice %32 {offsets = [0, 0, 24], sizes = [2, 8, 4], strides = [1, 1, 1]} : vector<2x8x32xbf16> to vector<2x8x4xbf16>
    %cst_69 = arith.constant dense<0.000000e+00> : vector<2x8x8xf32>
    %176 = tpu.matmul %173, %174, %cst_69 {dimension_numbers = #tpu.dot_dimension_numbers<[2], [2], [1], [1], [0, 0, 0, 1, 1, 1], [0], [0]>} : vector<2x8x4xbf16>, vector<2x8x4xbf16>, vector<2x8x8xf32> -> vector<2x8x8xf32>
    %cst_70 = arith.constant dense<0xFF800000> : vector<2x8xf32>
    %177 = vector.multi_reduction <maximumf>, %176, %cst_70 [2] : vector<2x8x8xf32> to vector<2x8xf32>
    %178 = vector.shape_cast %177 : vector<2x8xf32> to vector<2x8x1xf32>
    %179 = vector.broadcast %178 : vector<2x8x1xf32> to vector<2x8x8xf32>
    %180 = arith.subf %176, %179 : vector<2x8x8xf32>
    %181 = math.exp %180 : vector<2x8x8xf32>
    %cst_71 = arith.constant dense<0.000000e+00> : vector<2x8xf32>
    %182 = vector.multi_reduction <add>, %181, %cst_71 [2] : vector<2x8x8xf32> to vector<2x8xf32>
    %183 = vector.shape_cast %182 : vector<2x8xf32> to vector<2x8x1xf32>
    %184 = tpu.reciprocal %183 {approx = true} : vector<2x8x1xf32> -> vector<2x8x1xf32>
    %185 = vector.broadcast %184 : vector<2x8x1xf32> to vector<2x8x8xf32>
    %186 = arith.mulf %181, %185 : vector<2x8x8xf32>
    %187 = arith.addf %164, %186 : vector<2x8x8xf32>
    %188 = arith.truncf %186 : vector<2x8x8xf32> to vector<2x8x8xbf16>
    %cst_72 = arith.constant dense<0.000000e+00> : vector<2x8x4xf32>
    %189 = tpu.matmul %188, %175, %cst_72 {dimension_numbers = #tpu.dot_dimension_numbers<[2], [1], [1], [2], [0, 0, 0, 1, 1, 2], [0], [0]>} : vector<2x8x8xbf16>, vector<2x8x4xbf16>, vector<2x8x4xf32> -> vector<2x8x4xf32>
    %190 = vector.shape_cast %189 : vector<2x8x4xf32> to vector<16x4xf32>
    %191 = arith.truncf %190 : vector<16x4xf32> to vector<16x4xbf16>
    %c6 = arith.constant 6 : index
    %c0_73 = arith.constant 0 : index
    %c0_74 = arith.constant 0 : index
    %192 = vector.load %arg11[%c6, %c0_73, %c0_74] : memref<8x4x32xbf16, #tpu.memory_space<vmem>>, vector<1x4x32xbf16>
    %193 = vector.shape_cast %192 : vector<1x4x32xbf16> to vector<4x32xbf16>
    %cst_75 = arith.constant dense<0.000000e+00> : vector<16x32xf32>
    %194 = tpu.matmul %191, %193, %cst_75 {dimension_numbers = #tpu.dot_dimension_numbers<[1], [0], [0], [1], [0, 0, 1, 1], [], []>} : vector<16x4xbf16>, vector<4x32xbf16>, vector<16x32xf32> -> vector<16x32xf32>
    %195 = arith.addf %172, %194 : vector<16x32xf32>
    %196 = vector.extract_strided_slice %18 {offsets = [0, 0, 28], sizes = [2, 8, 4], strides = [1, 1, 1]} : vector<2x8x32xbf16> to vector<2x8x4xbf16>
    %197 = vector.extract_strided_slice %25 {offsets = [0, 0, 28], sizes = [2, 8, 4], strides = [1, 1, 1]} : vector<2x8x32xbf16> to vector<2x8x4xbf16>
    %198 = vector.extract_strided_slice %32 {offsets = [0, 0, 28], sizes = [2, 8, 4], strides = [1, 1, 1]} : vector<2x8x32xbf16> to vector<2x8x4xbf16>
    %cst_76 = arith.constant dense<0.000000e+00> : vector<2x8x8xf32>
    %199 = tpu.matmul %196, %197, %cst_76 {dimension_numbers = #tpu.dot_dimension_numbers<[2], [2], [1], [1], [0, 0, 0, 1, 1, 1], [0], [0]>} : vector<2x8x4xbf16>, vector<2x8x4xbf16>, vector<2x8x8xf32> -> vector<2x8x8xf32>
    %cst_77 = arith.constant dense<0xFF800000> : vector<2x8xf32>
    %200 = vector.multi_reduction <maximumf>, %199, %cst_77 [2] : vector<2x8x8xf32> to vector<2x8xf32>
    %201 = vector.shape_cast %200 : vector<2x8xf32> to vector<2x8x1xf32>
    %202 = vector.broadcast %201 : vector<2x8x1xf32> to vector<2x8x8xf32>
    %203 = arith.subf %199, %202 : vector<2x8x8xf32>
    %204 = math.exp %203 : vector<2x8x8xf32>
    %cst_78 = arith.constant dense<0.000000e+00> : vector<2x8xf32>
    %205 = vector.multi_reduction <add>, %204, %cst_78 [2] : vector<2x8x8xf32> to vector<2x8xf32>
    %206 = vector.shape_cast %205 : vector<2x8xf32> to vector<2x8x1xf32>
    %207 = tpu.reciprocal %206 {approx = true} : vector<2x8x1xf32> -> vector<2x8x1xf32>
    %208 = vector.broadcast %207 : vector<2x8x1xf32> to vector<2x8x8xf32>
    %209 = arith.mulf %204, %208 : vector<2x8x8xf32>
    %210 = arith.addf %187, %209 : vector<2x8x8xf32>
    %211 = arith.truncf %209 : vector<2x8x8xf32> to vector<2x8x8xbf16>
    %cst_79 = arith.constant dense<0.000000e+00> : vector<2x8x4xf32>
    %212 = tpu.matmul %211, %198, %cst_79 {dimension_numbers = #tpu.dot_dimension_numbers<[2], [1], [1], [2], [0, 0, 0, 1, 1, 2], [0], [0]>} : vector<2x8x8xbf16>, vector<2x8x4xbf16>, vector<2x8x4xf32> -> vector<2x8x4xf32>
    %213 = vector.shape_cast %212 : vector<2x8x4xf32> to vector<16x4xf32>
    %214 = arith.truncf %213 : vector<16x4xf32> to vector<16x4xbf16>
    %c7 = arith.constant 7 : index
    %c0_80 = arith.constant 0 : index
    %c0_81 = arith.constant 0 : index
    %215 = vector.load %arg11[%c7, %c0_80, %c0_81] : memref<8x4x32xbf16, #tpu.memory_space<vmem>>, vector<1x4x32xbf16>
    %216 = vector.shape_cast %215 : vector<1x4x32xbf16> to vector<4x32xbf16>
    %cst_82 = arith.constant dense<0.000000e+00> : vector<16x32xf32>
    %217 = tpu.matmul %214, %216, %cst_82 {dimension_numbers = #tpu.dot_dimension_numbers<[1], [0], [0], [1], [0, 0, 1, 1], [], []>} : vector<16x4xbf16>, vector<4x32xbf16>, vector<16x32xf32> -> vector<16x32xf32>
    %218 = arith.addf %195, %217 : vector<16x32xf32>
    %c0_83 = arith.constant 0 : index
    %c0_84 = arith.constant 0 : index
    %219 = vector.load %arg12[%c0_83, %c0_84] : memref<1x32xf32, #tpu.memory_space<vmem>>, vector<1x32xf32>
    %220 = vector.broadcast %219 : vector<1x32xf32> to vector<16x32xf32>
    %221 = arith.addf %218, %220 : vector<16x32xf32>
    %222 = vector.shape_cast %221 : vector<16x32xf32> to vector<2x8x32xf32>
    %c0_85 = arith.constant 0 : index
    %c0_86 = arith.constant 0 : index
    %c0_87 = arith.constant 0 : index
    %223 = vector.load %arg13[%c0_85, %c0_86, %c0_87] : memref<2x8x32xf32, #tpu.memory_space<vmem>>, vector<2x8x32xf32>
    tpu.vector_store %arg13[%c0_85, %c0_86, %c0_87], %222 {strides = array<i32>} : memref<2x8x32xf32, #tpu.memory_space<vmem>>, vector<2x8x32xf32>,
    %cst_88 = arith.constant 1.250000e-01 : f32
    %224 = vector.broadcast %cst_88 : f32 to vector<2x8x8xf32>
    %225 = arith.mulf %210, %224 : vector<2x8x8xf32>
    %c0_89 = arith.constant 0 : index
    %c0_90 = arith.constant 0 : index
    %c0_91 = arith.constant 0 : index
    %226 = vector.load %arg14[%c0_89, %c0_90, %c0_91] : memref<2x8x8xf32, #tpu.memory_space<vmem>>, vector<2x8x8xf32>
    tpu.vector_store %arg14[%c0_89, %c0_90, %c0_91], %225 {strides = array<i32>} : memref<2x8x8xf32, #tpu.memory_space<vmem>>, vector<2x8x8xf32>,
    return
  }
  func.func @transform_0(%arg0: i32) -> (i32, i32, i32) {
    %c0_i32 = arith.constant 0 : i32
    %c0_i32_0 = arith.constant 0 : i32
    %c0_i32_1 = arith.constant 0 : i32
    return %arg0, %c0_i32, %c0_i32_0 : i32, i32, i32
  }
  func.func @transform_1(%arg0: i32) -> (i32, i32, i32) {
    %c0_i32 = arith.constant 0 : i32
    %c0_i32_0 = arith.constant 0 : i32
    %c0_i32_1 = arith.constant 0 : i32
    return %arg0, %c0_i32, %c0_i32_0 : i32, i32, i32
  }
  func.func @transform_2(%arg0: i32) -> (i32, i32) {
    %c0_i32 = arith.constant 0 : i32
    %c0_i32_0 = arith.constant 0 : i32
    %c0_i32_1 = arith.constant 0 : i32
    return %c0_i32, %c0_i32_0 : i32, i32
  }
  func.func @transform_3(%arg0: i32) -> (i32, i32) {
    %c0_i32 = arith.constant 0 : i32
    %c0_i32_0 = arith.constant 0 : i32
    %c0_i32_1 = arith.constant 0 : i32
    return %c0_i32, %c0_i32_0 : i32, i32
  }
  func.func @transform_4(%arg0: i32) -> (i32, i32) {
    %c0_i32 = arith.constant 0 : i32
    %c0_i32_0 = arith.constant 0 : i32
    %c0_i32_1 = arith.constant 0 : i32
    return %c0_i32, %c0_i32_0 : i32, i32
  }
  func.func @transform_5(%arg0: i32) -> (i32, i32) {
    %c0_i32 = arith.constant 0 : i32
    %c0_i32_0 = arith.constant 0 : i32
    %c0_i32_1 = arith.constant 0 : i32
    return %c0_i32, %c0_i32_0 : i32, i32
  }
  func.func @transform_6(%arg0: i32) -> (i32, i32) {
    %c0_i32 = arith.constant 0 : i32
    %c0_i32_0 = arith.constant 0 : i32
    %c0_i32_1 = arith.constant 0 : i32
    return %c0_i32, %c0_i32_0 : i32, i32
  }
  func.func @transform_7(%arg0: i32) -> (i32, i32) {
    %c0_i32 = arith.constant 0 : i32
    %c0_i32_0 = arith.constant 0 : i32
    %c0_i32_1 = arith.constant 0 : i32
    return %c0_i32, %c0_i32_0 : i32, i32
  }
  func.func @transform_8(%arg0: i32) -> (i32, i32) {
    %c0_i32 = arith.constant 0 : i32
    %c0_i32_0 = arith.constant 0 : i32
    %c0_i32_1 = arith.constant 0 : i32
    return %c0_i32, %c0_i32_0 : i32, i32
  }
  func.func @transform_9(%arg0: i32) -> (i32, i32) {
    %c0_i32 = arith.constant 0 : i32
    %c0_i32_0 = arith.constant 0 : i32
    %c0_i32_1 = arith.constant 0 : i32
    return %c0_i32, %c0_i32_0 : i32, i32
  }
  func.func @transform_10(%arg0: i32) -> (i32, i32, i32) {
    %c0_i32 = arith.constant 0 : i32
    %c0_i32_0 = arith.constant 0 : i32
    %c0_i32_1 = arith.constant 0 : i32
    %c0_i32_2 = arith.constant 0 : i32
    return %c0_i32, %c0_i32_0, %c0_i32_1 : i32, i32, i32
  }
  func.func @transform_11(%arg0: i32) -> (i32, i32) {
    %c0_i32 = arith.constant 0 : i32
    %c0_i32_0 = arith.constant 0 : i32
    %c0_i32_1 = arith.constant 0 : i32
    return %c0_i32, %c0_i32_0 : i32, i32
  }
  func.func @transform_12(%arg0: i32) -> (i32, i32, i32) {
    %c0_i32 = arith.constant 0 : i32
    %c0_i32_0 = arith.constant 0 : i32
    %c0_i32_1 = arith.constant 0 : i32
    return %arg0, %c0_i32, %c0_i32_0 : i32, i32, i32
  }
  func.func @transform_13(%arg0: i32) -> (i32, i32, i32) {
    %c0_i32 = arith.constant 0 : i32
    %c0_i32_0 = arith.constant 0 : i32
    %c0_i32_1 = arith.constant 0 : i32
    return %arg0, %c0_i32, %c0_i32_0 : i32, i32, i32
  }
}

</mosaic_0001>

<llo_original>
// kernel: tpu_custom_call.1
$region0: #{tpu_custom_call.1}
  #allocation0 [shape = 'u32[]', space=smem, size = 0x4, offset = 0x4, fixed_abs, tag = 'smem constant byte address 0x4 - core index']
  #allocation1 [shape = 'u32[144,128]{1,0:T(1,128)}', space=vmem, size = 0x12000, scoped, tag = 'internal scratch']
  %s0 = inlined_call_operand.vmem [shape: f32[2,8,4], index: 0, kind: input, shape index: {}]
  %s1 = inlined_call_operand.vmem [shape: f32[2,8,32], index: 1, kind: input, shape index: {}]
  %s2 = inlined_call_operand.vmem [shape: bf16[4,32], index: 2, kind: input, shape index: {}]
  %s3 = inlined_call_operand.hbm [shape: f32[1,32], index: 3, kind: input, shape index: {}]
  %s4 = inlined_call_operand.vmem [shape: bf16[32,32], index: 4, kind: input, shape index: {}]
  %s5 = inlined_call_operand.hbm [shape: bf16[32,32], index: 5, kind: input, shape index: {}]
  %s6 = inlined_call_operand.hbm [shape: bf16[32,32], index: 6, kind: input, shape index: {}]
  %s7 = inlined_call_operand.hbm [shape: f32[1,32], index: 7, kind: input, shape index: {}]
  %s8 = inlined_call_operand.vmem [shape: f32[1,32], index: 8, kind: input, shape index: {}]
  %s9 = inlined_call_operand.vmem [shape: f32[1,32], index: 9, kind: input, shape index: {}]
  %s10 = inlined_call_operand.vmem [shape: bf16[8,4,32], index: 10, kind: input, shape index: {}]
  %s11 = inlined_call_operand.vmem [shape: f32[1,32], index: 11, kind: input, shape index: {}]
  %s12 = inlined_call_operand.hbm [shape: f32[2,8,32], index: 12, kind: output, shape index: {0}]
  %s13 = inlined_call_operand.hbm [shape: f32[2,8,8], index: 13, kind: output, shape index: {1}]
  %14 = xla_tuple %s12, %s13
  %s15 = sld [smem:[#allocation0]]
  $region82: #{tpu_custom_call.1} parent=0
    _
  %s17 = ssub.s32 1, %s15
  %s18 = scalar_select 0, %s17, %s15
  $region1: #{tpu_custom_call.1} parent=0
    #allocation2 [shape = 'u8[512]{0}', space=vmem, size = 0x400, scoped, tag = 'input window, operand 3, single buffered']
    #allocation3 [shape = 's32[1]{0}', space=sflag, size = 0x4, scoped, tag = 'scoped memory for tpu_custom_call.1']
    #allocation4 [shape = 's32[1]{0}', space=sflag, size = 0x4, scoped, tag = 'scoped memory for tpu_custom_call.1']
    #allocation5 [shape = 'u8[8192]{0}', space=vmem, size = 0x2000, scoped, tag = 'input window, operand 5, single buffered']
    #allocation6 [shape = 's32[1]{0}', space=sflag, size = 0x4, scoped, tag = 'scoped memory for tpu_custom_call.1']
    #allocation7 [shape = 'u8[8192]{0}', space=vmem, size = 0x2000, scoped, tag = 'input window, operand 6, single buffered']
    #allocation8 [shape = 'u8[512]{0}', space=vmem, size = 0x400, scoped, tag = 'input window, operand 7, single buffered']
    #allocation9 [shape = 's32[1]{0}', space=sflag, size = 0x4, scoped, tag = 'scoped memory for tpu_custom_call.1']
    #allocation10 [shape = 'u8[8192]{0}', space=vmem, size = 0x2000, scoped, tag = 'output window, operand 0, single buffered']
    #allocation11 [shape = 'u8[8192]{0}', space=vmem, size = 0x2000, scoped, tag = 'output window, operand 1, single buffered']
    #allocation12 [shape = 's32[1]{0}', space=sflag, size = 0x4, scoped, tag = 'scoped memory for tpu_custom_call.1']
    %19 = vsyncpa [#allocation3], 0
    %20 = vsyncpa [#allocation6], 0
    %21 = vsyncpa [#allocation9], 0
    %22 = vsyncpa [#allocation4], 0
    %23 = vsyncpa [#allocation12], 0
    // Predicated region
    $region2: #{tpu_custom_call.1} parent=1 // pred_check
      _
    $region3: #{tpu_custom_call.1} parent=1 // pred_check_branch
      %25 = sbr.rel (0) target = $region5
    $region4: #{tpu_custom_call.1} parent=1 // pred_region
      _
    $region5: #{tpu_custom_call.1} parent=1 // pred_fallthru
      _
    // Predicated region
    $region6: #{tpu_custom_call.1} parent=1 // pred_check
      _
    $region7: #{tpu_custom_call.1} parent=1 // pred_check_branch
      %27 = sbr.rel (0) target = $region9
    $region8: #{tpu_custom_call.1} parent=1 // pred_region
      _
    $region9: #{tpu_custom_call.1} parent=1 // pred_fallthru
      _
    // Predicated region
    $region10: #{tpu_custom_call.1} parent=1 // pred_check
      _
    $region11: #{tpu_custom_call.1} parent=1 // pred_check_branch
      %29 = sbr.rel (0) target = $region13
    $region12: #{tpu_custom_call.1} parent=1 // pred_region
      _
    $region13: #{tpu_custom_call.1} parent=1 // pred_fallthru
      _
    // Predicated region
    $region14: #{tpu_custom_call.1} parent=1 // pred_check
      _
    $region15: #{tpu_custom_call.1} parent=1 // pred_check_branch
      %31 = sbr.rel (0) target = $region17
    $region16: #{tpu_custom_call.1} parent=1 // pred_region
      %s33 = ssub.s32 16, 16
      %34 = vsyncadd [#allocation3], %s33
      %s36 = sshll.u32 [#allocation2], 4
      %s37 = int_to_ptr.vmem [resolvable:$true] %s36
      %39 = dma.hbm_to_vmem [thread:$0]  %s3, 16, %s37, [#allocation3]
    $region17: #{tpu_custom_call.1} parent=1 // pred_fallthru
      _
    // Predicated region
    $region18: #{tpu_custom_call.1} parent=1 // pred_check
      _
    $region19: #{tpu_custom_call.1} parent=1 // pred_check_branch
      %41 = sbr.rel (0) target = $region21
    $region20: #{tpu_custom_call.1} parent=1 // pred_region
      _
    $region21: #{tpu_custom_call.1} parent=1 // pred_fallthru
      _
    // Predicated region
    $region22: #{tpu_custom_call.1} parent=1 // pred_check
      _
    $region23: #{tpu_custom_call.1} parent=1 // pred_check_branch
      %43 = sbr.rel (0) target = $region25
    $region24: #{tpu_custom_call.1} parent=1 // pred_region
      %s45 = ssub.s32 256, 256
      %46 = vsyncadd [#allocation6], %s45
      %s47 = sshll.u32 [#allocation5], 4
      %s48 = int_to_ptr.vmem [resolvable:$true] %s47
      %53 = dma.hbm_to_vmem [thread:$0]  %s5, 256, %s48, [#allocation6], 64, 64, 4
    $region25: #{tpu_custom_call.1} parent=1 // pred_fallthru
      _
    // Predicated region
    $region26: #{tpu_custom_call.1} parent=1 // pred_check
      _
    $region27: #{tpu_custom_call.1} parent=1 // pred_check_branch
      %55 = sbr.rel (0) target = $region29
    $region28: #{tpu_custom_call.1} parent=1 // pred_region
      %s57 = ssub.s32 256, 256
      %58 = vsyncadd [#allocation6], %s57
      %s59 = sshll.u32 [#allocation7], 4
      %s60 = int_to_ptr.vmem [resolvable:$true] %s59
      %65 = dma.hbm_to_vmem [thread:$0]  %s6, 256, %s60, [#allocation6], 64, 64, 4
    $region29: #{tpu_custom_call.1} parent=1 // pred_fallthru
      _
    // Predicated region
    $region30: #{tpu_custom_call.1} parent=1 // pred_check
      _
    $region31: #{tpu_custom_call.1} parent=1 // pred_check_branch
      %67 = sbr.rel (0) target = $region33
    $region32: #{tpu_custom_call.1} parent=1 // pred_region
      %s69 = ssub.s32 16, 16
      %70 = vsyncadd [#allocation9], %s69
      %s72 = sshll.u32 [#allocation8], 4
      %s73 = int_to_ptr.vmem [resolvable:$true] %s72
      %75 = dma.hbm_to_vmem [thread:$0]  %s7, 16, %s73, [#allocation9]
    $region33: #{tpu_custom_call.1} parent=1 // pred_fallthru
      _
    // Predicated region
    $region34: #{tpu_custom_call.1} parent=1 // pred_check
      _
    $region35: #{tpu_custom_call.1} parent=1 // pred_check_branch
      %77 = sbr.rel (0) target = $region37
    $region36: #{tpu_custom_call.1} parent=1 // pred_region
      _
    $region37: #{tpu_custom_call.1} parent=1 // pred_fallthru
      _
    // Predicated region
    $region38: #{tpu_custom_call.1} parent=1 // pred_check
      _
    $region39: #{tpu_custom_call.1} parent=1 // pred_check_branch
      %79 = sbr.rel (0) target = $region41
    $region40: #{tpu_custom_call.1} parent=1 // pred_region
      _
    $region41: #{tpu_custom_call.1} parent=1 // pred_fallthru
      _
    // Predicated region
    $region42: #{tpu_custom_call.1} parent=1 // pred_check
      _
    $region43: #{tpu_custom_call.1} parent=1 // pred_check_branch
      %81 = sbr.rel (0) target = $region45
    $region44: #{tpu_custom_call.1} parent=1 // pred_region
      _
    $region45: #{tpu_custom_call.1} parent=1 // pred_fallthru
      _
    // Predicated region
    $region46: #{tpu_custom_call.1} parent=1 // pred_check
      _
    $region47: #{tpu_custom_call.1} parent=1 // pred_check_branch
      %83 = sbr.rel (0) target = $region49
    $region48: #{tpu_custom_call.1} parent=1 // pred_region
      _
    $region49: #{tpu_custom_call.1} parent=1 // pred_fallthru
      _
    // Predicated region
    $region50: #{tpu_custom_call.1} parent=1 // pred_check
      _
    $region51: #{tpu_custom_call.1} parent=1 // pred_check_branch
      %85 = sbr.rel (0) target = $region53
    $region52: #{tpu_custom_call.1} parent=1 // pred_region
      %86 = dma.done [#allocation3], 16
    $region53: #{tpu_custom_call.1} parent=1 // pred_fallthru
      _
    // Predicated region
    $region54: #{tpu_custom_call.1} parent=1 // pred_check
      _
    $region55: #{tpu_custom_call.1} parent=1 // pred_check_branch
      %88 = sbr.rel (0) target = $region57
    $region56: #{tpu_custom_call.1} parent=1 // pred_region
      %89 = dma.done [#allocation6], 256
    $region57: #{tpu_custom_call.1} parent=1 // pred_fallthru
      _
    // Predicated region
    $region58: #{tpu_custom_call.1} parent=1 // pred_check
      _
    $region59: #{tpu_custom_call.1} parent=1 // pred_check_branch
      %91 = sbr.rel (0) target = $region61
    $region60: #{tpu_custom_call.1} parent=1 // pred_region
      %92 = dma.done [#allocation6], 256
    $region61: #{tpu_custom_call.1} parent=1 // pred_fallthru
      _
    // Predicated region
    $region62: #{tpu_custom_call.1} parent=1 // pred_check
      _
    $region63: #{tpu_custom_call.1} parent=1 // pred_check_branch
      %94 = sbr.rel (0) target = $region65
    $region64: #{tpu_custom_call.1} parent=1 // pred_region
      %95 = dma.done [#allocation9], 16
    $region65: #{tpu_custom_call.1} parent=1 // pred_fallthru
      _
    %v97 = vld [vmem:[%s0] sm:$0xff]
    %v98 = vld [vmem:[%s0 + $0x8] sm:$0xff]
    %v99 = vpack.c.bf16 %v98, %v97
    %v100 = vld [vmem:[%s1] sm:$0xff]
    %v101 = vld [vmem:[%s1 + $0x8] sm:$0xff]
    %v102 = vpack.c.bf16 %v101, %v100
    %v103 = vld [vmem:[%s2] sm:$0x3]
    %v104 = vld [vmem:[#allocation2] sm:$0x1]
    %v106 = vlaneseq
    %v107 = vshrl.u32 %v106, 7
    %v108 = vsub.s32 0, %v107
    %v109 = vrot.slane %v104, %v108
    %vm111 = vcmask 31744
    %v113 = vsel %vm111, %v99, 0
    %vm115 = vcmask 1041408
    %v117 = vsel %vm115, %v103, 0
    %119 = vmatprep.subr.bf16.mxu0 0
    %120 = vmatpush1.bf16.msra.mxu0 %v117
    %121 = vmatprep.subr.bf16.mxu0 0
    %122 = vmatpush1.bf16.msra.mxu0 0
    %123 = vmatprep.subr.bf16.mxu0 0
    %124 = vmatpush1.bf16.msra.mxu0 0
    %125 = vmatprep.subr.bf16.mxu0 0
    %126 = vmatpush1.bf16.msra.mxu0 0
    %127 = vmatprep.subr.bf16.mxu0 0
    %128 = vmatpush1.bf16.msra.mxu0 0
    %129 = vmatprep.subr.bf16.mxu0 0
    %130 = vmatpush1.bf16.msra.mxu0 0
    %131 = vmatprep.subr.bf16.mxu0 0
    %132 = vmatpush1.bf16.msra.mxu0 0
    %133 = vmatprep.subr.bf16.mxu0 0
    %134 = vmatpush1.bf16.msra.mxu0 0
    %135 = vmatprep.subr.bf16.mxu0 0
    %136 = vmatpush1.bf16.msra.mxu0 0
    %137 = vmatprep.subr.bf16.mxu0 0
    %138 = vmatpush1.bf16.msra.mxu0 0
    %139 = vmatprep.subr.bf16.mxu0 0
    %140 = vmatpush1.bf16.msra.mxu0 0
    %141 = vmatprep.subr.bf16.mxu0 0
    %142 = vmatpush1.bf16.msra.mxu0 0
    %143 = vmatprep.subr.bf16.mxu0 0
    %144 = vmatpush1.bf16.msra.mxu0 0
    %145 = vmatprep.subr.bf16.mxu0 0
    %146 = vmatpush1.bf16.msra.mxu0 0
    %147 = vmatprep.subr.bf16.mxu0 0
    %148 = vmatpush1.bf16.msra.mxu0 0
    %149 = vmatprep.subr.bf16.mxu0 0
    %150 = vmatpush1.bf16.msra.mxu0 0
    %151 = vmatprep.mubr.bf16.mxu0 0
    %152 = vmatmul.mubr.bf16.gmra.mrb[0].mxu0 %v113
    %v153 = vpop.f32.mrb[0].mxu0
    %v154 = vadd.f32 %v109, %v153
    %v155 = vpop.f32.mrb[0].mxu0
    %v156 = vpop.f32.mrb[0].mxu0
    %v157 = vadd.f32 %v109, %v156
    %v158 = vpop.f32.mrb[0].mxu0
    %159 = vdwg.mxu0
    %v160 = vpack.c.bf16 %v157, %v154
    %v161 = vld [vmem:[%s4] sm:$0xf]
    %v162 = vld [vmem:[%s4 + $0x4] sm:$0xf]
    %v163 = vld [vmem:[%s4 + $0x8] sm:$0xf]
    %v164 = vld [vmem:[%s4 + $0xc] sm:$0xf]
    %v165 = vld [vmem:[#allocation8] sm:$0x1]
    %v167 = vlaneseq
    %v168 = vshrl.u32 %v167, 7
    %v169 = vsub.s32 0, %v168
    %v170 = vrot.slane %v165, %v169
    %v176 = vunpack.c.l.b16 %v161
    %v177 = vunpack.c.l.b16 %v162
    %v178 = vunpack.c.l.b16 %v163
    %v179 = vunpack.c.l.b16 %v164
    %v180 = vpack.c.b16 %v177, %v176
    %v181 = vpack.c.b16 %v179, %v178
    %vm184 = vcmask 261120
    %v186 = vsel %vm184, %v160, 0
    %188 = vmatprep.subr.bf16.mxu0 0
    %189 = vmatpush1.bf16.msra.mxu0 %v180
    %190 = vmatprep.subr.bf16.mxu0 0
    %191 = vmatpush1.bf16.msra.mxu0 %v181
    %192 = vmatprep.subr.bf16.mxu0 0
    %193 = vmatpush1.bf16.msra.mxu0 0
    %194 = vmatprep.subr.bf16.mxu0 0
    %195 = vmatpush1.bf16.msra.mxu0 0
    %196 = vmatprep.subr.bf16.mxu0 0
    %197 = vmatpush1.bf16.msra.mxu0 0
    %198 = vmatprep.subr.bf16.mxu0 0
    %199 = vmatpush1.bf16.msra.mxu0 0
    %200 = vmatprep.subr.bf16.mxu0 0
    %201 = vmatpush1.bf16.msra.mxu0 0
    %202 = vmatprep.subr.bf16.mxu0 0
    %203 = vmatpush1.bf16.msra.mxu0 0
    %204 = vmatprep.subr.bf16.mxu0 0
    %205 = vmatpush1.bf16.msra.mxu0 0
    %206 = vmatprep.subr.bf16.mxu0 0
    %207 = vmatpush1.bf16.msra.mxu0 0
    %208 = vmatprep.subr.bf16.mxu0 0
    %209 = vmatpush1.bf16.msra.mxu0 0
    %210 = vmatprep.subr.bf16.mxu0 0
    %211 = vmatpush1.bf16.msra.mxu0 0
    %212 = vmatprep.subr.bf16.mxu0 0
    %213 = vmatpush1.bf16.msra.mxu0 0
    %214 = vmatprep.subr.bf16.mxu0 0
    %215 = vmatpush1.bf16.msra.mxu0 0
    %216 = vmatprep.subr.bf16.mxu0 0
    %217 = vmatpush1.bf16.msra.mxu0 0
    %218 = vmatprep.subr.bf16.mxu0 0
    %219 = vmatpush1.bf16.msra.mxu0 0
    %220 = vmatprep.mubr.bf16.mxu0 0
    %221 = vmatmul.mubr.bf16.gmra.mrb[0].mxu0 %v186
    %v222 = vpop.f32.mrb[0].mxu0
    %v223 = vadd.f32 %v170, %v222
    %v224 = vpop.f32.mrb[0].mxu0
    %v225 = vpop.f32.mrb[0].mxu0
    %v226 = vadd.f32 %v170, %v225
    %v227 = vpop.f32.mrb[0].mxu0
    %228 = vdwg.mxu0
    %v229 = vpack.c.bf16 %v226, %v223
    %v231 = vunpack.c.l.b16 %v229
    %v232 = vunpack.c.h.b16 %v229
    %v233 = vpack.c.b16 %v231, %v231
    %v234 = vpack.c.b16 %v232, %v232
    %v235 = vld [vmem:[#allocation5] sm:$0xf]
    %v236 = vld [vmem:[#allocation5 + $0x4] sm:$0xf]
    %v237 = vld [vmem:[#allocation5 + $0x8] sm:$0xf]
    %v238 = vld [vmem:[#allocation5 + $0xc] sm:$0xf]
    %v239 = vld [vmem:[%s8] sm:$0x1]
    %v241 = vlaneseq
    %v242 = vshrl.u32 %v241, 7
    %v243 = vsub.s32 0, %v242
    %v244 = vrot.slane %v239, %v243
    %v250 = vunpack.c.l.b16 %v235
    %v251 = vunpack.c.l.b16 %v236
    %v252 = vunpack.c.l.b16 %v237
    %v253 = vunpack.c.l.b16 %v238
    %v254 = vpack.c.b16 %v251, %v250
    %v255 = vpack.c.b16 %v253, %v252
    %258 = vmatprep.subr.bf16.mxu0 0
    %259 = vmatpush1.bf16.msra.mxu0 %v254
    %260 = vmatprep.subr.bf16.mxu0 0
    %261 = vmatpush1.bf16.msra.mxu0 %v255
    %262 = vmatprep.subr.bf16.mxu0 0
    %263 = vmatpush1.bf16.msra.mxu0 0
    %264 = vmatprep.subr.bf16.mxu0 0
    %265 = vmatpush1.bf16.msra.mxu0 0
    %266 = vmatprep.subr.bf16.mxu0 0
    %267 = vmatpush1.bf16.msra.mxu0 0
    %268 = vmatprep.subr.bf16.mxu0 0
    %269 = vmatpush1.bf16.msra.mxu0 0
    %270 = vmatprep.subr.bf16.mxu0 0
    %271 = vmatpush1.bf16.msra.mxu0 0
    %272 = vmatprep.subr.bf16.mxu0 0
    %273 = vmatpush1.bf16.msra.mxu0 0
    %274 = vmatprep.subr.bf16.mxu0 0
    %275 = vmatpush1.bf16.msra.mxu0 0
    %276 = vmatprep.subr.bf16.mxu0 0
    %277 = vmatpush1.bf16.msra.mxu0 0
    %278 = vmatprep.subr.bf16.mxu0 0
    %279 = vmatpush1.bf16.msra.mxu0 0
    %280 = vmatprep.subr.bf16.mxu0 0
    %281 = vmatpush1.bf16.msra.mxu0 0
    %282 = vmatprep.subr.bf16.mxu0 0
    %283 = vmatpush1.bf16.msra.mxu0 0
    %284 = vmatprep.subr.bf16.mxu0 0
    %285 = vmatpush1.bf16.msra.mxu0 0
    %286 = vmatprep.subr.bf16.mxu0 0
    %287 = vmatpush1.bf16.msra.mxu0 0
    %288 = vmatprep.subr.bf16.mxu0 0
    %289 = vmatpush1.bf16.msra.mxu0 0
    %290 = vmatprep.mubr.bf16.mxu0 0
    %291 = vmatmul.mubr.bf16.gmra.mrb[0].mxu0 %v186
    %v292 = vpop.f32.mrb[0].mxu0
    %v293 = vadd.f32 %v244, %v292
    %v294 = vpop.f32.mrb[0].mxu0
    %v295 = vpop.f32.mrb[0].mxu0
    %v296 = vadd.f32 %v244, %v295
    %v297 = vpop.f32.mrb[0].mxu0
    %298 = vdwg.mxu0
    %v299 = vpack.c.bf16 %v296, %v293
    %v301 = vunpack.c.l.b16 %v299
    %v302 = vunpack.c.h.b16 %v299
    %v303 = vpack.c.b16 %v301, %v301
    %v304 = vpack.c.b16 %v302, %v302
    %v305 = vld [vmem:[#allocation7] sm:$0xf]
    %v306 = vld [vmem:[#allocation7 + $0x4] sm:$0xf]
    %v307 = vld [vmem:[#allocation7 + $0x8] sm:$0xf]
    %v308 = vld [vmem:[#allocation7 + $0xc] sm:$0xf]
    %v309 = vld [vmem:[%s9] sm:$0x1]
    %v311 = vlaneseq
    %v312 = vshrl.u32 %v311, 7
    %v313 = vsub.s32 0, %v312
    %v314 = vrot.slane %v309, %v313
    %v320 = vunpack.c.l.b16 %v305
    %v321 = vunpack.c.l.b16 %v306
    %v322 = vunpack.c.l.b16 %v307
    %v323 = vunpack.c.l.b16 %v308
    %v324 = vpack.c.b16 %v321, %v320
    %v325 = vpack.c.b16 %v323, %v322
    %v329 = vsel %vm184, %v102, 0
    %331 = vmatprep.subr.bf16.mxu0 0
    %332 = vmatpush1.bf16.msra.mxu0 %v324
    %333 = vmatprep.subr.bf16.mxu0 0
    %334 = vmatpush1.bf16.msra.mxu0 %v325
    %335 = vmatprep.subr.bf16.mxu0 0
    %336 = vmatpush1.bf16.msra.mxu0 0
    %337 = vmatprep.subr.bf16.mxu0 0
    %338 = vmatpush1.bf16.msra.mxu0 0
    %339 = vmatprep.subr.bf16.mxu0 0
    %340 = vmatpush1.bf16.msra.mxu0 0
    %341 = vmatprep.subr.bf16.mxu0 0
    %342 = vmatpush1.bf16.msra.mxu0 0
    %343 = vmatprep.subr.bf16.mxu0 0
    %344 = vmatpush1.bf16.msra.mxu0 0
    %345 = vmatprep.subr.bf16.mxu0 0
    %346 = vmatpush1.bf16.msra.mxu0 0
    %347 = vmatprep.subr.bf16.mxu0 0
    %348 = vmatpush1.bf16.msra.mxu0 0
    %349 = vmatprep.subr.bf16.mxu0 0
    %350 = vmatpush1.bf16.msra.mxu0 0
    %351 = vmatprep.subr.bf16.mxu0 0
    %352 = vmatpush1.bf16.msra.mxu0 0
    %353 = vmatprep.subr.bf16.mxu0 0
    %354 = vmatpush1.bf16.msra.mxu0 0
    %355 = vmatprep.subr.bf16.mxu0 0
    %356 = vmatpush1.bf16.msra.mxu0 0
    %357 = vmatprep.subr.bf16.mxu0 0
    %358 = vmatpush1.bf16.msra.mxu0 0
    %359 = vmatprep.subr.bf16.mxu0 0
    %360 = vmatpush1.bf16.msra.mxu0 0
    %361 = vmatprep.subr.bf16.mxu0 0
    %362 = vmatpush1.bf16.msra.mxu0 0
    %363 = vmatprep.mubr.bf16.mxu0 0
    %364 = vmatmul.mubr.bf16.gmra.mrb[0].mxu0 %v329
    %v365 = vpop.f32.mrb[0].mxu0
    %v366 = vadd.f32 %v314, %v365
    %v367 = vpop.f32.mrb[0].mxu0
    %v368 = vpop.f32.mrb[0].mxu0
    %v369 = vadd.f32 %v314, %v368
    %v370 = vpop.f32.mrb[0].mxu0
    %371 = vdwg.mxu0
    %v372 = vpack.c.bf16 %v369, %v366
    %v374 = vunpack.c.l.b16 %v372
    %v375 = vunpack.c.h.b16 %v372
    %v376 = vpack.c.b16 %v374, %v374
    %v377 = vpack.c.b16 %v375, %v375
    %v379 = vsel %vm111, %v233, 0
    %v382 = vsel %vm111, %v303, 0
    %384 = vmatprep.subr.bf16.mxu0 0
    %385 = vmatpush1.bf16.xpose.msra.mxu0 %v382
    %386 = vmatprep.subr.bf16.mxu0 0
    %387 = vmatpush1.bf16.xpose.msra.mxu0 0
    %388 = vmatprep.subr.bf16.mxu0 0
    %389 = vmatpush1.bf16.xpose.msra.mxu0 0
    %390 = vmatprep.subr.bf16.mxu0 0
    %391 = vmatpush1.bf16.xpose.msra.mxu0 0
    %392 = vmatprep.subr.bf16.mxu0 0
    %393 = vmatpush1.bf16.xpose.msra.mxu0 0
    %394 = vmatprep.subr.bf16.mxu0 0
    %395 = vmatpush1.bf16.xpose.msra.mxu0 0
    %396 = vmatprep.subr.bf16.mxu0 0
    %397 = vmatpush1.bf16.xpose.msra.mxu0 0
    %398 = vmatprep.subr.bf16.mxu0 0
    %399 = vmatpush1.bf16.xpose.msra.mxu0 0
    %400 = vmatprep.subr.bf16.mxu0 0
    %401 = vmatpush1.bf16.xpose.msra.mxu0 0
    %402 = vmatprep.subr.bf16.mxu0 0
    %403 = vmatpush1.bf16.xpose.msra.mxu0 0
    %404 = vmatprep.subr.bf16.mxu0 0
    %405 = vmatpush1.bf16.xpose.msra.mxu0 0
    %406 = vmatprep.subr.bf16.mxu0 0
    %407 = vmatpush1.bf16.xpose.msra.mxu0 0
    %408 = vmatprep.subr.bf16.mxu0 0
    %409 = vmatpush1.bf16.xpose.msra.mxu0 0
    %410 = vmatprep.subr.bf16.mxu0 0
    %411 = vmatpush1.bf16.xpose.msra.mxu0 0
    %412 = vmatprep.subr.bf16.mxu0 0
    %413 = vmatpush1.bf16.xpose.msra.mxu0 0
    %414 = vmatprep.subr.bf16.mxu0 0
    %415 = vmatpush1.bf16.xpose.msra.mxu0 0
    %416 = vmatprep.mubr.bf16.mxu0 0
    %417 = vmatmul.mubr.bf16.gmra.mrb[0].mxu0 %v379
    %v418 = vpop.f32.mrb[0].mxu0
    %v419 = vadd.f32 0.0, %v418
    %v420 = vpop.f32.mrb[0].mxu0
    %v421 = vpop.f32.mrb[0].mxu0
    %v422 = vpop.f32.mrb[0].mxu0
    %423 = vdwg.mxu0
    %v425 = vsel %vm111, %v234, 0
    %v428 = vsel %vm111, %v304, 0
    %430 = vmatprep.subr.bf16.mxu0 0
    %431 = vmatpush1.bf16.xpose.msra.mxu0 %v428
    %432 = vmatprep.subr.bf16.mxu0 0
    %433 = vmatpush1.bf16.xpose.msra.mxu0 0
    %434 = vmatprep.subr.bf16.mxu0 0
    %435 = vmatpush1.bf16.xpose.msra.mxu0 0
    %436 = vmatprep.subr.bf16.mxu0 0
    %437 = vmatpush1.bf16.xpose.msra.mxu0 0
    %438 = vmatprep.subr.bf16.mxu0 0
    %439 = vmatpush1.bf16.xpose.msra.mxu0 0
    %440 = vmatprep.subr.bf16.mxu0 0
    %441 = vmatpush1.bf16.xpose.msra.mxu0 0
    %442 = vmatprep.subr.bf16.mxu0 0
    %443 = vmatpush1.bf16.xpose.msra.mxu0 0
    %444 = vmatprep.subr.bf16.mxu0 0
    %445 = vmatpush1.bf16.xpose.msra.mxu0 0
    %446 = vmatprep.subr.bf16.mxu0 0
    %447 = vmatpush1.bf16.xpose.msra.mxu0 0
    %448 = vmatprep.subr.bf16.mxu0 0
    %449 = vmatpush1.bf16.xpose.msra.mxu0 0
    %450 = vmatprep.subr.bf16.mxu0 0
    %451 = vmatpush1.bf16.xpose.msra.mxu0 0
    %452 = vmatprep.subr.bf16.mxu0 0
    %453 = vmatpush1.bf16.xpose.msra.mxu0 0
    %454 = vmatprep.subr.bf16.mxu0 0
    %455 = vmatpush1.bf16.xpose.msra.mxu0 0
    %456 = vmatprep.subr.bf16.mxu0 0
    %457 = vmatpush1.bf16.xpose.msra.mxu0 0
    %458 = vmatprep.subr.bf16.mxu0 0
    %459 = vmatpush1.bf16.xpose.msra.mxu0 0
    %460 = vmatprep.subr.bf16.mxu0 0
    %461 = vmatpush1.bf16.xpose.msra.mxu0 0
    %462 = vmatprep.mubr.bf16.mxu0 0
    %463 = vmatmul.mubr.bf16.gmra.mrb[0].mxu0 %v425
    %v464 = vpop.f32.mrb[0].mxu0
    %v465 = vadd.f32 0.0, %v464
    %v466 = vpop.f32.mrb[0].mxu0
    %v467 = vpop.f32.mrb[0].mxu0
    %v468 = vpop.f32.mrb[0].mxu0
    %469 = vdwg.mxu0
    %vm470 = vcmask 64512
    %v471 = vsel %vm470, %v419, -inf
    %472 = vmax.xlane.f32.xlu0 %v471
    %v473 = vpop.xlane.xlu0 %472
    %v474 = vsel %vm470, %v465, -inf
    %475 = vmax.xlane.f32.xlu0 %v474
    %v476 = vpop.xlane.xlu0 %475
    %v477 = vsub.f32 %v419, %v473
    %v478 = vsub.f32 %v465, %v476
    %v479 = vmul.f32 %v477, 1.442695
    %v480 = vpow.pop %v479
    %v481 = vmul.f32 %v478, 1.442695
    %v482 = vpow.pop %v481
    %v483 = vsel %vm470, %v480, 0.0
    %484 = vadd.xlane.f32.xlu0 %v483
    %v485 = vpop.xlane.xlu0 %484
    %v486 = vsel %vm470, %v482, 0.0
    %487 = vadd.xlane.f32.xlu0 %v486
    %v488 = vpop.xlane.xlu0 %487
    %v489 = vrcp.pop %v485
    %v490 = vrcp.pop %v488
    %v491 = vmul.f32 %v480, %v489
    %v492 = vmul.f32 %v482, %v490
    %v493 = vadd.f32 %v491, 0.0
    %v494 = vadd.f32 %v492, 0.0
    %v495 = vpack.c.bf16 %v491, %v491
    %v496 = vpack.c.bf16 %v492, %v492
    %v498 = vsel %vm470, %v495, 0
    %vm500 = vcmask 1043456
    %v502 = vsel %vm500, %v376, 0
    %504 = vmatprep.subr.bf16.mxu0 0
    %505 = vmatpush1.bf16.msra.mxu0 %v502
    %506 = vmatprep.subr.bf16.mxu0 0
    %507 = vmatpush1.bf16.msra.mxu0 0
    %508 = vmatprep.subr.bf16.mxu0 0
    %509 = vmatpush1.bf16.msra.mxu0 0
    %510 = vmatprep.subr.bf16.mxu0 0
    %511 = vmatpush1.bf16.msra.mxu0 0
    %512 = vmatprep.subr.bf16.mxu0 0
    %513 = vmatpush1.bf16.msra.mxu0 0
    %514 = vmatprep.subr.bf16.mxu0 0
    %515 = vmatpush1.bf16.msra.mxu0 0
    %516 = vmatprep.subr.bf16.mxu0 0
    %517 = vmatpush1.bf16.msra.mxu0 0
    %518 = vmatprep.subr.bf16.mxu0 0
    %519 = vmatpush1.bf16.msra.mxu0 0
    %520 = vmatprep.subr.bf16.mxu0 0
    %521 = vmatpush1.bf16.msra.mxu0 0
    %522 = vmatprep.subr.bf16.mxu0 0
    %523 = vmatpush1.bf16.msra.mxu0 0
    %524 = vmatprep.subr.bf16.mxu0 0
    %525 = vmatpush1.bf16.msra.mxu0 0
    %526 = vmatprep.subr.bf16.mxu0 0
    %527 = vmatpush1.bf16.msra.mxu0 0
    %528 = vmatprep.subr.bf16.mxu0 0
    %529 = vmatpush1.bf16.msra.mxu0 0
    %530 = vmatprep.subr.bf16.mxu0 0
    %531 = vmatpush1.bf16.msra.mxu0 0
    %532 = vmatprep.subr.bf16.mxu0 0
    %533 = vmatpush1.bf16.msra.mxu0 0
    %534 = vmatprep.subr.bf16.mxu0 0
    %535 = vmatpush1.bf16.msra.mxu0 0
    %536 = vmatprep.mubr.bf16.mxu0 0
    %537 = vmatmul.mubr.bf16.gmra.mrb[0].mxu0 %v498
    %v538 = vpop.f32.mrb[0].mxu0
    %v539 = vadd.f32 0.0, %v538
    %v540 = vpop.f32.mrb[0].mxu0
    %v541 = vpop.f32.mrb[0].mxu0
    %v542 = vpop.f32.mrb[0].mxu0
    %543 = vdwg.mxu0
    %v545 = vsel %vm470, %v496, 0
    %v548 = vsel %vm500, %v377, 0
    %550 = vmatprep.subr.bf16.mxu0 0
    %551 = vmatpush1.bf16.msra.mxu0 %v548
    %552 = vmatprep.subr.bf16.mxu0 0
    %553 = vmatpush1.bf16.msra.mxu0 0
    %554 = vmatprep.subr.bf16.mxu0 0
    %555 = vmatpush1.bf16.msra.mxu0 0
    %556 = vmatprep.subr.bf16.mxu0 0
    %557 = vmatpush1.bf16.msra.mxu0 0
    %558 = vmatprep.subr.bf16.mxu0 0
    %559 = vmatpush1.bf16.msra.mxu0 0
    %560 = vmatprep.subr.bf16.mxu0 0
    %561 = vmatpush1.bf16.msra.mxu0 0
    %562 = vmatprep.subr.bf16.mxu0 0
    %563 = vmatpush1.bf16.msra.mxu0 0
    %564 = vmatprep.subr.bf16.mxu0 0
    %565 = vmatpush1.bf16.msra.mxu0 0
    %566 = vmatprep.subr.bf16.mxu0 0
    %567 = vmatpush1.bf16.msra.mxu0 0
    %568 = vmatprep.subr.bf16.mxu0 0
    %569 = vmatpush1.bf16.msra.mxu0 0
    %570 = vmatprep.subr.bf16.mxu0 0
    %571 = vmatpush1.bf16.msra.mxu0 0
    %572 = vmatprep.subr.bf16.mxu0 0
    %573 = vmatpush1.bf16.msra.mxu0 0
    %574 = vmatprep.subr.bf16.mxu0 0
    %575 = vmatpush1.bf16.msra.mxu0 0
    %576 = vmatprep.subr.bf16.mxu0 0
    %577 = vmatpush1.bf16.msra.mxu0 0
    %578 = vmatprep.subr.bf16.mxu0 0
    %579 = vmatpush1.bf16.msra.mxu0 0
    %580 = vmatprep.subr.bf16.mxu0 0
    %581 = vmatpush1.bf16.msra.mxu0 0
    %582 = vmatprep.mubr.bf16.mxu0 0
    %583 = vmatmul.mubr.bf16.gmra.mrb[0].mxu0 %v545
    %v584 = vpop.f32.mrb[0].mxu0
    %v585 = vadd.f32 0.0, %v584
    %v586 = vpop.f32.mrb[0].mxu0
    %v587 = vpop.f32.mrb[0].mxu0
    %v588 = vpop.f32.mrb[0].mxu0
    %589 = vdwg.mxu0
    %v590 = vpack.c.bf16 %v585, %v539
    %v591 = vld [vmem:[%s10] sm:$0x3]
    %592 = vrot.lane.b32.xlu0 %v233, 124
    %v593 = vpop.permute.xlu0 %592
    %594 = vrot.lane.b32.xlu0 %v303, 124
    %v595 = vpop.permute.xlu0 %594
    %v597 = vsel %vm111, %v593, 0
    %v600 = vsel %vm111, %v595, 0
    %602 = vmatprep.subr.bf16.mxu0 0
    %603 = vmatpush1.bf16.xpose.msra.mxu0 %v600
    %604 = vmatprep.subr.bf16.mxu0 0
    %605 = vmatpush1.bf16.xpose.msra.mxu0 0
    %606 = vmatprep.subr.bf16.mxu0 0
    %607 = vmatpush1.bf16.xpose.msra.mxu0 0
    %608 = vmatprep.subr.bf16.mxu0 0
    %609 = vmatpush1.bf16.xpose.msra.mxu0 0
    %610 = vmatprep.subr.bf16.mxu0 0
    %611 = vmatpush1.bf16.xpose.msra.mxu0 0
    %612 = vmatprep.subr.bf16.mxu0 0
    %613 = vmatpush1.bf16.xpose.msra.mxu0 0
    %614 = vmatprep.subr.bf16.mxu0 0
    %615 = vmatpush1.bf16.xpose.msra.mxu0 0
    %616 = vmatprep.subr.bf16.mxu0 0
    %617 = vmatpush1.bf16.xpose.msra.mxu0 0
    %618 = vmatprep.subr.bf16.mxu0 0
    %619 = vmatpush1.bf16.xpose.msra.mxu0 0
    %620 = vmatprep.subr.bf16.mxu0 0
    %621 = vmatpush1.bf16.xpose.msra.mxu0 0
    %622 = vmatprep.subr.bf16.mxu0 0
    %623 = vmatpush1.bf16.xpose.msra.mxu0 0
    %624 = vmatprep.subr.bf16.mxu0 0
    %625 = vmatpush1.bf16.xpose.msra.mxu0 0
    %626 = vmatprep.subr.bf16.mxu0 0
    %627 = vmatpush1.bf16.xpose.msra.mxu0 0
    %628 = vmatprep.subr.bf16.mxu0 0
    %629 = vmatpush1.bf16.xpose.msra.mxu0 0
    %630 = vmatprep.subr.bf16.mxu0 0
    %631 = vmatpush1.bf16.xpose.msra.mxu0 0
    %632 = vmatprep.subr.bf16.mxu0 0
    %633 = vmatpush1.bf16.xpose.msra.mxu0 0
    %634 = vmatprep.mubr.bf16.mxu0 0
    %635 = vmatmul.mubr.bf16.gmra.mrb[0].mxu0 %v597
    %v636 = vpop.f32.mrb[0].mxu0
    %v637 = vadd.f32 0.0, %v636
    %v638 = vpop.f32.mrb[0].mxu0
    %v639 = vpop.f32.mrb[0].mxu0
    %v640 = vpop.f32.mrb[0].mxu0
    %641 = vdwg.mxu0
    %642 = vrot.lane.b32.xlu0 %v234, 124
    %v643 = vpop.permute.xlu0 %642
    %644 = vrot.lane.b32.xlu0 %v304, 124
    %v645 = vpop.permute.xlu0 %644
    %v647 = vsel %vm111, %v643, 0
    %v650 = vsel %vm111, %v645, 0
    %652 = vmatprep.subr.bf16.mxu0 0
    %653 = vmatpush1.bf16.xpose.msra.mxu0 %v650
    %654 = vmatprep.subr.bf16.mxu0 0
    %655 = vmatpush1.bf16.xpose.msra.mxu0 0
    %656 = vmatprep.subr.bf16.mxu0 0
    %657 = vmatpush1.bf16.xpose.msra.mxu0 0
    %658 = vmatprep.subr.bf16.mxu0 0
    %659 = vmatpush1.bf16.xpose.msra.mxu0 0
    %660 = vmatprep.subr.bf16.mxu0 0
    %661 = vmatpush1.bf16.xpose.msra.mxu0 0
    %662 = vmatprep.subr.bf16.mxu0 0
    %663 = vmatpush1.bf16.xpose.msra.mxu0 0
    %664 = vmatprep.subr.bf16.mxu0 0
    %665 = vmatpush1.bf16.xpose.msra.mxu0 0
    %666 = vmatprep.subr.bf16.mxu0 0
    %667 = vmatpush1.bf16.xpose.msra.mxu0 0
    %668 = vmatprep.subr.bf16.mxu0 0
    %669 = vmatpush1.bf16.xpose.msra.mxu0 0
    %670 = vmatprep.subr.bf16.mxu0 0
    %671 = vmatpush1.bf16.xpose.msra.mxu0 0
    %672 = vmatprep.subr.bf16.mxu0 0
    %673 = vmatpush1.bf16.xpose.msra.mxu0 0
    %674 = vmatprep.subr.bf16.mxu0 0
    %675 = vmatpush1.bf16.xpose.msra.mxu0 0
    %676 = vmatprep.subr.bf16.mxu0 0
    %677 = vmatpush1.bf16.xpose.msra.mxu0 0
    %678 = vmatprep.subr.bf16.mxu0 0
    %679 = vmatpush1.bf16.xpose.msra.mxu0 0
    %680 = vmatprep.subr.bf16.mxu0 0
    %681 = vmatpush1.bf16.xpose.msra.mxu0 0
    %682 = vmatprep.subr.bf16.mxu0 0
    %683 = vmatpush1.bf16.xpose.msra.mxu0 0
    %684 = vmatprep.mubr.bf16.mxu0 0
    %685 = vmatmul.mubr.bf16.gmra.mrb[0].mxu0 %v647
    %v686 = vpop.f32.mrb[0].mxu0
    %v687 = vadd.f32 0.0, %v686
    %v688 = vpop.f32.mrb[0].mxu0
    %v689 = vpop.f32.mrb[0].mxu0
    %v690 = vpop.f32.mrb[0].mxu0
    %691 = vdwg.mxu0
    %v692 = vsel %vm470, %v637, -inf
    %693 = vmax.xlane.f32.xlu0 %v692
    %v694 = vpop.xlane.xlu0 %693
    %v695 = vsel %vm470, %v687, -inf
    %696 = vmax.xlane.f32.xlu0 %v695
    %v697 = vpop.xlane.xlu0 %696
    %v698 = vsub.f32 %v637, %v694
    %v699 = vsub.f32 %v687, %v697
    %v700 = vmul.f32 %v698, 1.442695
    %v701 = vpow.pop %v700
    %v702 = vmul.f32 %v699, 1.442695
    %v703 = vpow.pop %v702
    %v704 = vsel %vm470, %v701, 0.0
    %705 = vadd.xlane.f32.xlu0 %v704
    %v706 = vpop.xlane.xlu0 %705
    %v707 = vsel %vm470, %v703, 0.0
    %708 = vadd.xlane.f32.xlu0 %v707
    %v709 = vpop.xlane.xlu0 %708
    %v710 = vrcp.pop %v706
    %v711 = vrcp.pop %v709
    %v712 = vmul.f32 %v701, %v710
    %v713 = vmul.f32 %v703, %v711
    %v714 = vadd.f32 %v493, %v712
    %v715 = vadd.f32 %v494, %v713
    %v716 = vpack.c.bf16 %v712, %v712
    %v717 = vpack.c.bf16 %v713, %v713
    %718 = vrot.lane.b32.xlu0 %v376, 124
    %v719 = vpop.permute.xlu0 %718
    %v721 = vsel %vm470, %v716, 0
    %v724 = vsel %vm500, %v719, 0
    %726 = vmatprep.subr.bf16.mxu0 0
    %727 = vmatpush1.bf16.msra.mxu0 %v724
    %728 = vmatprep.subr.bf16.mxu0 0
    %729 = vmatpush1.bf16.msra.mxu0 0
    %730 = vmatprep.subr.bf16.mxu0 0
    %731 = vmatpush1.bf16.msra.mxu0 0
    %732 = vmatprep.subr.bf16.mxu0 0
    %733 = vmatpush1.bf16.msra.mxu0 0
    %734 = vmatprep.subr.bf16.mxu0 0
    %735 = vmatpush1.bf16.msra.mxu0 0
    %736 = vmatprep.subr.bf16.mxu0 0
    %737 = vmatpush1.bf16.msra.mxu0 0
    %738 = vmatprep.subr.bf16.mxu0 0
    %739 = vmatpush1.bf16.msra.mxu0 0
    %740 = vmatprep.subr.bf16.mxu0 0
    %741 = vmatpush1.bf16.msra.mxu0 0
    %742 = vmatprep.subr.bf16.mxu0 0
    %743 = vmatpush1.bf16.msra.mxu0 0
    %744 = vmatprep.subr.bf16.mxu0 0
    %745 = vmatpush1.bf16.msra.mxu0 0
    %746 = vmatprep.subr.bf16.mxu0 0
    %747 = vmatpush1.bf16.msra.mxu0 0
    %748 = vmatprep.subr.bf16.mxu0 0
    %749 = vmatpush1.bf16.msra.mxu0 0
    %750 = vmatprep.subr.bf16.mxu0 0
    %751 = vmatpush1.bf16.msra.mxu0 0
    %752 = vmatprep.subr.bf16.mxu0 0
    %753 = vmatpush1.bf16.msra.mxu0 0
    %754 = vmatprep.subr.bf16.mxu0 0
    %755 = vmatpush1.bf16.msra.mxu0 0
    %756 = vmatprep.subr.bf16.mxu0 0
    %757 = vmatpush1.bf16.msra.mxu0 0
    %758 = vmatprep.mubr.bf16.mxu0 0
    %759 = vmatmul.mubr.bf16.gmra.mrb[0].mxu0 %v721
    %v760 = vpop.f32.mrb[0].mxu0
    %v761 = vadd.f32 0.0, %v760
    %v762 = vpop.f32.mrb[0].mxu0
    %v763 = vpop.f32.mrb[0].mxu0
    %v764 = vpop.f32.mrb[0].mxu0
    %765 = vdwg.mxu0
    %766 = vrot.lane.b32.xlu0 %v377, 124
    %v767 = vpop.permute.xlu0 %766
    %v769 = vsel %vm470, %v717, 0
    %v772 = vsel %vm500, %v767, 0
    %774 = vmatprep.subr.bf16.mxu0 0
    %775 = vmatpush1.bf16.msra.mxu0 %v772
    %776 = vmatprep.subr.bf16.mxu0 0
    %777 = vmatpush1.bf16.msra.mxu0 0
    %778 = vmatprep.subr.bf16.mxu0 0
    %779 = vmatpush1.bf16.msra.mxu0 0
    %780 = vmatprep.subr.bf16.mxu0 0
    %781 = vmatpush1.bf16.msra.mxu0 0
    %782 = vmatprep.subr.bf16.mxu0 0
    %783 = vmatpush1.bf16.msra.mxu0 0
    %784 = vmatprep.subr.bf16.mxu0 0
    %785 = vmatpush1.bf16.msra.mxu0 0
    %786 = vmatprep.subr.bf16.mxu0 0
    %787 = vmatpush1.bf16.msra.mxu0 0
    %788 = vmatprep.subr.bf16.mxu0 0
    %789 = vmatpush1.bf16.msra.mxu0 0
    %790 = vmatprep.subr.bf16.mxu0 0
    %791 = vmatpush1.bf16.msra.mxu0 0
    %792 = vmatprep.subr.bf16.mxu0 0
    %793 = vmatpush1.bf16.msra.mxu0 0
    %794 = vmatprep.subr.bf16.mxu0 0
    %795 = vmatpush1.bf16.msra.mxu0 0
    %796 = vmatprep.subr.bf16.mxu0 0
    %797 = vmatpush1.bf16.msra.mxu0 0
    %798 = vmatprep.subr.bf16.mxu0 0
    %799 = vmatpush1.bf16.msra.mxu0 0
    %800 = vmatprep.subr.bf16.mxu0 0
    %801 = vmatpush1.bf16.msra.mxu0 0
    %802 = vmatprep.subr.bf16.mxu0 0
    %803 = vmatpush1.bf16.msra.mxu0 0
    %804 = vmatprep.subr.bf16.mxu0 0
    %805 = vmatpush1.bf16.msra.mxu0 0
    %806 = vmatprep.mubr.bf16.mxu0 0
    %807 = vmatmul.mubr.bf16.gmra.mrb[0].mxu0 %v769
    %v808 = vpop.f32.mrb[0].mxu0
    %v809 = vadd.f32 0.0, %v808
    %v810 = vpop.f32.mrb[0].mxu0
    %v811 = vpop.f32.mrb[0].mxu0
    %v812 = vpop.f32.mrb[0].mxu0
    %813 = vdwg.mxu0
    %v814 = vpack.c.bf16 %v809, %v761
    %s815 = scalar_lea.vmem %s10, 2
    %v816 = vld [vmem:[%s815] sm:$0x3]
    %v818 = vsel %vm111, %v814, 0
    %v821 = vsel %vm115, %v816, 0
    %823 = vmatprep.subr.bf16.mxu0 0
    %824 = vmatpush1.bf16.msra.mxu0 %v821
    %825 = vmatprep.subr.bf16.mxu0 0
    %826 = vmatpush1.bf16.msra.mxu0 0
    %827 = vmatprep.subr.bf16.mxu0 0
    %828 = vmatpush1.bf16.msra.mxu0 0
    %829 = vmatprep.subr.bf16.mxu0 0
    %830 = vmatpush1.bf16.msra.mxu0 0
    %831 = vmatprep.subr.bf16.mxu0 0
    %832 = vmatpush1.bf16.msra.mxu0 0
    %833 = vmatprep.subr.bf16.mxu0 0
    %834 = vmatpush1.bf16.msra.mxu0 0
    %835 = vmatprep.subr.bf16.mxu0 0
    %836 = vmatpush1.bf16.msra.mxu0 0
    %837 = vmatprep.subr.bf16.mxu0 0
    %838 = vmatpush1.bf16.msra.mxu0 0
    %839 = vmatprep.subr.bf16.mxu0 0
    %840 = vmatpush1.bf16.msra.mxu0 0
    %841 = vmatprep.subr.bf16.mxu0 0
    %842 = vmatpush1.bf16.msra.mxu0 0
    %843 = vmatprep.subr.bf16.mxu0 0
    %844 = vmatpush1.bf16.msra.mxu0 0
    %845 = vmatprep.subr.bf16.mxu0 0
    %846 = vmatpush1.bf16.msra.mxu0 0
    %847 = vmatprep.subr.bf16.mxu0 0
    %848 = vmatpush1.bf16.msra.mxu0 0
    %849 = vmatprep.subr.bf16.mxu0 0
    %850 = vmatpush1.bf16.msra.mxu0 0
    %851 = vmatprep.subr.bf16.mxu0 0
    %852 = vmatpush1.bf16.msra.mxu0 0
    %853 = vmatprep.subr.bf16.mxu0 0
    %854 = vmatpush1.bf16.msra.mxu0 0
    %855 = vmatprep.mubr.bf16.mxu0 0
    %856 = vmatmul.mubr.bf16.gmra.mrb[0].mxu0 %v818
    %v857 = vpop.f32.mrb[0].mxu0
    %v858 = vadd.f32 0.0, %v857
    %v859 = vpop.f32.mrb[0].mxu0
    %v860 = vpop.f32.mrb[0].mxu0
    %v861 = vadd.f32 0.0, %v860
    %v862 = vpop.f32.mrb[0].mxu0
    %863 = vdwg.mxu0
    %v865 = vsel %vm111, %v590, 0
    %v868 = vsel %vm115, %v591, 0
    %870 = vmatprep.subr.bf16.mxu0 0
    %871 = vmatpush1.bf16.msra.mxu0 %v868
    %872 = vmatprep.subr.bf16.mxu0 0
    %873 = vmatpush1.bf16.msra.mxu0 0
    %874 = vmatprep.subr.bf16.mxu0 0
    %875 = vmatpush1.bf16.msra.mxu0 0
    %876 = vmatprep.subr.bf16.mxu0 0
    %877 = vmatpush1.bf16.msra.mxu0 0
    %878 = vmatprep.subr.bf16.mxu0 0
    %879 = vmatpush1.bf16.msra.mxu0 0
    %880 = vmatprep.subr.bf16.mxu0 0
    %881 = vmatpush1.bf16.msra.mxu0 0
    %882 = vmatprep.subr.bf16.mxu0 0
    %883 = vmatpush1.bf16.msra.mxu0 0
    %884 = vmatprep.subr.bf16.mxu0 0
    %885 = vmatpush1.bf16.msra.mxu0 0
    %886 = vmatprep.subr.bf16.mxu0 0
    %887 = vmatpush1.bf16.msra.mxu0 0
    %888 = vmatprep.subr.bf16.mxu0 0
    %889 = vmatpush1.bf16.msra.mxu0 0
    %890 = vmatprep.subr.bf16.mxu0 0
    %891 = vmatpush1.bf16.msra.mxu0 0
    %892 = vmatprep.subr.bf16.mxu0 0
    %893 = vmatpush1.bf16.msra.mxu0 0
    %894 = vmatprep.subr.bf16.mxu0 0
    %895 = vmatpush1.bf16.msra.mxu0 0
    %896 = vmatprep.subr.bf16.mxu0 0
    %897 = vmatpush1.bf16.msra.mxu0 0
    %898 = vmatprep.subr.bf16.mxu0 0
    %899 = vmatpush1.bf16.msra.mxu0 0
    %900 = vmatprep.subr.bf16.mxu0 0
    %901 = vmatpush1.bf16.msra.mxu0 0
    %902 = vmatprep.mubr.bf16.mxu0 0
    %903 = vmatmul.mubr.bf16.gmra.mrb[0].mxu0 %v865
    %v904 = vpop.f32.mrb[0].mxu0
    %v905 = vadd.f32 %v858, %v904
    %v906 = vpop.f32.mrb[0].mxu0
    %v907 = vpop.f32.mrb[0].mxu0
    %v908 = vadd.f32 %v861, %v907
    %v909 = vpop.f32.mrb[0].mxu0
    %910 = vdwg.mxu0
    %911 = vrot.lane.b32.xlu0 %v233, 120
    %v912 = vpop.permute.xlu0 %911
    %913 = vrot.lane.b32.xlu0 %v303, 120
    %v914 = vpop.permute.xlu0 %913
    %v916 = vsel %vm111, %v912, 0
    %v919 = vsel %vm111, %v914, 0
    %921 = vmatprep.subr.bf16.mxu0 0
    %922 = vmatpush1.bf16.xpose.msra.mxu0 %v919
    %923 = vmatprep.subr.bf16.mxu0 0
    %924 = vmatpush1.bf16.xpose.msra.mxu0 0
    %925 = vmatprep.subr.bf16.mxu0 0
    %926 = vmatpush1.bf16.xpose.msra.mxu0 0
    %927 = vmatprep.subr.bf16.mxu0 0
    %928 = vmatpush1.bf16.xpose.msra.mxu0 0
    %929 = vmatprep.subr.bf16.mxu0 0
    %930 = vmatpush1.bf16.xpose.msra.mxu0 0
    %931 = vmatprep.subr.bf16.mxu0 0
    %932 = vmatpush1.bf16.xpose.msra.mxu0 0
    %933 = vmatprep.subr.bf16.mxu0 0
    %934 = vmatpush1.bf16.xpose.msra.mxu0 0
    %935 = vmatprep.subr.bf16.mxu0 0
    %936 = vmatpush1.bf16.xpose.msra.mxu0 0
    %937 = vmatprep.subr.bf16.mxu0 0
    %938 = vmatpush1.bf16.xpose.msra.mxu0 0
    %939 = vmatprep.subr.bf16.mxu0 0
    %940 = vmatpush1.bf16.xpose.msra.mxu0 0
    %941 = vmatprep.subr.bf16.mxu0 0
    %942 = vmatpush1.bf16.xpose.msra.mxu0 0
    %943 = vmatprep.subr.bf16.mxu0 0
    %944 = vmatpush1.bf16.xpose.msra.mxu0 0
    %945 = vmatprep.subr.bf16.mxu0 0
    %946 = vmatpush1.bf16.xpose.msra.mxu0 0
    %947 = vmatprep.subr.bf16.mxu0 0
    %948 = vmatpush1.bf16.xpose.msra.mxu0 0
    %949 = vmatprep.subr.bf16.mxu0 0
    %950 = vmatpush1.bf16.xpose.msra.mxu0 0
    %951 = vmatprep.subr.bf16.mxu0 0
    %952 = vmatpush1.bf16.xpose.msra.mxu0 0
    %953 = vmatprep.mubr.bf16.mxu0 0
    %954 = vmatmul.mubr.bf16.gmra.mrb[0].mxu0 %v916
    %v955 = vpop.f32.mrb[0].mxu0
    %v956 = vadd.f32 0.0, %v955
    %v957 = vpop.f32.mrb[0].mxu0
    %v958 = vpop.f32.mrb[0].mxu0
    %v959 = vpop.f32.mrb[0].mxu0
    %960 = vdwg.mxu0
    %961 = vrot.lane.b32.xlu0 %v234, 120
    %v962 = vpop.permute.xlu0 %961
    %963 = vrot.lane.b32.xlu0 %v304, 120
    %v964 = vpop.permute.xlu0 %963
    %v966 = vsel %vm111, %v962, 0
    %v969 = vsel %vm111, %v964, 0
    %971 = vmatprep.subr.bf16.mxu0 0
    %972 = vmatpush1.bf16.xpose.msra.mxu0 %v969
    %973 = vmatprep.subr.bf16.mxu0 0
    %974 = vmatpush1.bf16.xpose.msra.mxu0 0
    %975 = vmatprep.subr.bf16.mxu0 0
    %976 = vmatpush1.bf16.xpose.msra.mxu0 0
    %977 = vmatprep.subr.bf16.mxu0 0
    %978 = vmatpush1.bf16.xpose.msra.mxu0 0
    %979 = vmatprep.subr.bf16.mxu0 0
    %980 = vmatpush1.bf16.xpose.msra.mxu0 0
    %981 = vmatprep.subr.bf16.mxu0 0
    %982 = vmatpush1.bf16.xpose.msra.mxu0 0
    %983 = vmatprep.subr.bf16.mxu0 0
    %984 = vmatpush1.bf16.xpose.msra.mxu0 0
    %985 = vmatprep.subr.bf16.mxu0 0
    %986 = vmatpush1.bf16.xpose.msra.mxu0 0
    %987 = vmatprep.subr.bf16.mxu0 0
    %988 = vmatpush1.bf16.xpose.msra.mxu0 0
    %989 = vmatprep.subr.bf16.mxu0 0
    %990 = vmatpush1.bf16.xpose.msra.mxu0 0
    %991 = vmatprep.subr.bf16.mxu0 0
    %992 = vmatpush1.bf16.xpose.msra.mxu0 0
    %993 = vmatprep.subr.bf16.mxu0 0
    %994 = vmatpush1.bf16.xpose.msra.mxu0 0
    %995 = vmatprep.subr.bf16.mxu0 0
    %996 = vmatpush1.bf16.xpose.msra.mxu0 0
    %997 = vmatprep.subr.bf16.mxu0 0
    %998 = vmatpush1.bf16.xpose.msra.mxu0 0
    %999 = vmatprep.subr.bf16.mxu0 0
    %1000 = vmatpush1.bf16.xpose.msra.mxu0 0
    %1001 = vmatprep.subr.bf16.mxu0 0
    %1002 = vmatpush1.bf16.xpose.msra.mxu0 0
    %1003 = vmatprep.mubr.bf16.mxu0 0
    %1004 = vmatmul.mubr.bf16.gmra.mrb[0].mxu0 %v966
    %v1005 = vpop.f32.mrb[0].mxu0
    %v1006 = vadd.f32 0.0, %v1005
    %v1007 = vpop.f32.mrb[0].mxu0
    %v1008 = vpop.f32.mrb[0].mxu0
    %v1009 = vpop.f32.mrb[0].mxu0
    %1010 = vdwg.mxu0
    %v1011 = vsel %vm470, %v956, -inf
    %1012 = vmax.xlane.f32.xlu0 %v1011
    %v1013 = vpop.xlane.xlu0 %1012
    %v1014 = vsel %vm470, %v1006, -inf
    %1015 = vmax.xlane.f32.xlu0 %v1014
    %v1016 = vpop.xlane.xlu0 %1015
    %v1017 = vsub.f32 %v956, %v1013
    %v1018 = vsub.f32 %v1006, %v1016
    %v1019 = vmul.f32 %v1017, 1.442695
    %v1020 = vpow.pop %v1019
    %v1021 = vmul.f32 %v1018, 1.442695
    %v1022 = vpow.pop %v1021
    %v1023 = vsel %vm470, %v1020, 0.0
    %1024 = vadd.xlane.f32.xlu0 %v1023
    %v1025 = vpop.xlane.xlu0 %1024
    %v1026 = vsel %vm470, %v1022, 0.0
    %1027 = vadd.xlane.f32.xlu0 %v1026
    %v1028 = vpop.xlane.xlu0 %1027
    %v1029 = vrcp.pop %v1025
    %v1030 = vrcp.pop %v1028
    %v1031 = vmul.f32 %v1020, %v1029
    %v1032 = vmul.f32 %v1022, %v1030
    %v1033 = vadd.f32 %v714, %v1031
    %v1034 = vadd.f32 %v715, %v1032
    %v1035 = vpack.c.bf16 %v1031, %v1031
    %v1036 = vpack.c.bf16 %v1032, %v1032
    %1037 = vrot.lane.b32.xlu0 %v376, 120
    %v1038 = vpop.permute.xlu0 %1037
    %v1040 = vsel %vm470, %v1035, 0
    %v1043 = vsel %vm500, %v1038, 0
    %1045 = vmatprep.subr.bf16.mxu0 0
    %1046 = vmatpush1.bf16.msra.mxu0 %v1043
    %1047 = vmatprep.subr.bf16.mxu0 0
    %1048 = vmatpush1.bf16.msra.mxu0 0
    %1049 = vmatprep.subr.bf16.mxu0 0
    %1050 = vmatpush1.bf16.msra.mxu0 0
    %1051 = vmatprep.subr.bf16.mxu0 0
    %1052 = vmatpush1.bf16.msra.mxu0 0
    %1053 = vmatprep.subr.bf16.mxu0 0
    %1054 = vmatpush1.bf16.msra.mxu0 0
    %1055 = vmatprep.subr.bf16.mxu0 0
    %1056 = vmatpush1.bf16.msra.mxu0 0
    %1057 = vmatprep.subr.bf16.mxu0 0
    %1058 = vmatpush1.bf16.msra.mxu0 0
    %1059 = vmatprep.subr.bf16.mxu0 0
    %1060 = vmatpush1.bf16.msra.mxu0 0
    %1061 = vmatprep.subr.bf16.mxu0 0
    %1062 = vmatpush1.bf16.msra.mxu0 0
    %1063 = vmatprep.subr.bf16.mxu0 0
    %1064 = vmatpush1.bf16.msra.mxu0 0
    %1065 = vmatprep.subr.bf16.mxu0 0
    %1066 = vmatpush1.bf16.msra.mxu0 0
    %1067 = vmatprep.subr.bf16.mxu0 0
    %1068 = vmatpush1.bf16.msra.mxu0 0
    %1069 = vmatprep.subr.bf16.mxu0 0
    %1070 = vmatpush1.bf16.msra.mxu0 0
    %1071 = vmatprep.subr.bf16.mxu0 0
    %1072 = vmatpush1.bf16.msra.mxu0 0
    %1073 = vmatprep.subr.bf16.mxu0 0
    %1074 = vmatpush1.bf16.msra.mxu0 0
    %1075 = vmatprep.subr.bf16.mxu0 0
    %1076 = vmatpush1.bf16.msra.mxu0 0
    %1077 = vmatprep.mubr.bf16.mxu0 0
    %1078 = vmatmul.mubr.bf16.gmra.mrb[0].mxu0 %v1040
    %v1079 = vpop.f32.mrb[0].mxu0
    %v1080 = vadd.f32 0.0, %v1079
    %v1081 = vpop.f32.mrb[0].mxu0
    %v1082 = vpop.f32.mrb[0].mxu0
    %v1083 = vpop.f32.mrb[0].mxu0
    %1084 = vdwg.mxu0
    %1085 = vrot.lane.b32.xlu0 %v377, 120
    %v1086 = vpop.permute.xlu0 %1085
    %v1088 = vsel %vm470, %v1036, 0
    %v1091 = vsel %vm500, %v1086, 0
    %1093 = vmatprep.subr.bf16.mxu0 0
    %1094 = vmatpush1.bf16.msra.mxu0 %v1091
    %1095 = vmatprep.subr.bf16.mxu0 0
    %1096 = vmatpush1.bf16.msra.mxu0 0
    %1097 = vmatprep.subr.bf16.mxu0 0
    %1098 = vmatpush1.bf16.msra.mxu0 0
    %1099 = vmatprep.subr.bf16.mxu0 0
    %1100 = vmatpush1.bf16.msra.mxu0 0
    %1101 = vmatprep.subr.bf16.mxu0 0
    %1102 = vmatpush1.bf16.msra.mxu0 0
    %1103 = vmatprep.subr.bf16.mxu0 0
    %1104 = vmatpush1.bf16.msra.mxu0 0
    %1105 = vmatprep.subr.bf16.mxu0 0
    %1106 = vmatpush1.bf16.msra.mxu0 0
    %1107 = vmatprep.subr.bf16.mxu0 0
    %1108 = vmatpush1.bf16.msra.mxu0 0
    %1109 = vmatprep.subr.bf16.mxu0 0
    %1110 = vmatpush1.bf16.msra.mxu0 0
    %1111 = vmatprep.subr.bf16.mxu0 0
    %1112 = vmatpush1.bf16.msra.mxu0 0
    %1113 = vmatprep.subr.bf16.mxu0 0
    %1114 = vmatpush1.bf16.msra.mxu0 0
    %1115 = vmatprep.subr.bf16.mxu0 0
    %1116 = vmatpush1.bf16.msra.mxu0 0
    %1117 = vmatprep.subr.bf16.mxu0 0
    %1118 = vmatpush1.bf16.msra.mxu0 0
    %1119 = vmatprep.subr.bf16.mxu0 0
    %1120 = vmatpush1.bf16.msra.mxu0 0
    %1121 = vmatprep.subr.bf16.mxu0 0
    %1122 = vmatpush1.bf16.msra.mxu0 0
    %1123 = vmatprep.subr.bf16.mxu0 0
    %1124 = vmatpush1.bf16.msra.mxu0 0
    %1125 = vmatprep.mubr.bf16.mxu0 0
    %1126 = vmatmul.mubr.bf16.gmra.mrb[0].mxu0 %v1088
    %v1127 = vpop.f32.mrb[0].mxu0
    %v1128 = vadd.f32 0.0, %v1127
    %v1129 = vpop.f32.mrb[0].mxu0
    %v1130 = vpop.f32.mrb[0].mxu0
    %v1131 = vpop.f32.mrb[0].mxu0
    %1132 = vdwg.mxu0
    %v1133 = vpack.c.bf16 %v1128, %v1080
    %s1134 = scalar_lea.vmem %s10, 4
    %v1135 = vld [vmem:[%s1134] sm:$0x3]
    %v1137 = vsel %vm111, %v1133, 0
    %v1140 = vsel %vm115, %v1135, 0
    %1142 = vmatprep.subr.bf16.mxu0 0
    %1143 = vmatpush1.bf16.msra.mxu0 %v1140
    %1144 = vmatprep.subr.bf16.mxu0 0
    %1145 = vmatpush1.bf16.msra.mxu0 0
    %1146 = vmatprep.subr.bf16.mxu0 0
    %1147 = vmatpush1.bf16.msra.mxu0 0
    %1148 = vmatprep.subr.bf16.mxu0 0
    %1149 = vmatpush1.bf16.msra.mxu0 0
    %1150 = vmatprep.subr.bf16.mxu0 0
    %1151 = vmatpush1.bf16.msra.mxu0 0
    %1152 = vmatprep.subr.bf16.mxu0 0
    %1153 = vmatpush1.bf16.msra.mxu0 0
    %1154 = vmatprep.subr.bf16.mxu0 0
    %1155 = vmatpush1.bf16.msra.mxu0 0
    %1156 = vmatprep.subr.bf16.mxu0 0
    %1157 = vmatpush1.bf16.msra.mxu0 0
    %1158 = vmatprep.subr.bf16.mxu0 0
    %1159 = vmatpush1.bf16.msra.mxu0 0
    %1160 = vmatprep.subr.bf16.mxu0 0
    %1161 = vmatpush1.bf16.msra.mxu0 0
    %1162 = vmatprep.subr.bf16.mxu0 0
    %1163 = vmatpush1.bf16.msra.mxu0 0
    %1164 = vmatprep.subr.bf16.mxu0 0
    %1165 = vmatpush1.bf16.msra.mxu0 0
    %1166 = vmatprep.subr.bf16.mxu0 0
    %1167 = vmatpush1.bf16.msra.mxu0 0
    %1168 = vmatprep.subr.bf16.mxu0 0
    %1169 = vmatpush1.bf16.msra.mxu0 0
    %1170 = vmatprep.subr.bf16.mxu0 0
    %1171 = vmatpush1.bf16.msra.mxu0 0
    %1172 = vmatprep.subr.bf16.mxu0 0
    %1173 = vmatpush1.bf16.msra.mxu0 0
    %1174 = vmatprep.mubr.bf16.mxu0 0
    %1175 = vmatmul.mubr.bf16.gmra.mrb[0].mxu0 %v1137
    %v1176 = vpop.f32.mrb[0].mxu0
    %v1177 = vadd.f32 0.0, %v1176
    %v1178 = vpop.f32.mrb[0].mxu0
    %v1179 = vpop.f32.mrb[0].mxu0
    %v1180 = vadd.f32 0.0, %v1179
    %v1181 = vpop.f32.mrb[0].mxu0
    %1182 = vdwg.mxu0
    %v1183 = vadd.f32 %v905, %v1177
    %v1184 = vadd.f32 %v908, %v1180
    %1185 = vrot.lane.b32.xlu0 %v233, 116
    %v1186 = vpop.permute.xlu0 %1185
    %1187 = vrot.lane.b32.xlu0 %v303, 116
    %v1188 = vpop.permute.xlu0 %1187
    %v1190 = vsel %vm111, %v1186, 0
    %v1193 = vsel %vm111, %v1188, 0
    %1195 = vmatprep.subr.bf16.mxu0 0
    %1196 = vmatpush1.bf16.xpose.msra.mxu0 %v1193
    %1197 = vmatprep.subr.bf16.mxu0 0
    %1198 = vmatpush1.bf16.xpose.msra.mxu0 0
    %1199 = vmatprep.subr.bf16.mxu0 0
    %1200 = vmatpush1.bf16.xpose.msra.mxu0 0
    %1201 = vmatprep.subr.bf16.mxu0 0
    %1202 = vmatpush1.bf16.xpose.msra.mxu0 0
    %1203 = vmatprep.subr.bf16.mxu0 0
    %1204 = vmatpush1.bf16.xpose.msra.mxu0 0
    %1205 = vmatprep.subr.bf16.mxu0 0
    %1206 = vmatpush1.bf16.xpose.msra.mxu0 0
    %1207 = vmatprep.subr.bf16.mxu0 0
    %1208 = vmatpush1.bf16.xpose.msra.mxu0 0
    %1209 = vmatprep.subr.bf16.mxu0 0
    %1210 = vmatpush1.bf16.xpose.msra.mxu0 0
    %1211 = vmatprep.subr.bf16.mxu0 0
    %1212 = vmatpush1.bf16.xpose.msra.mxu0 0
    %1213 = vmatprep.subr.bf16.mxu0 0
    %1214 = vmatpush1.bf16.xpose.msra.mxu0 0
    %1215 = vmatprep.subr.bf16.mxu0 0
    %1216 = vmatpush1.bf16.xpose.msra.mxu0 0
    %1217 = vmatprep.subr.bf16.mxu0 0
    %1218 = vmatpush1.bf16.xpose.msra.mxu0 0
    %1219 = vmatprep.subr.bf16.mxu0 0
    %1220 = vmatpush1.bf16.xpose.msra.mxu0 0
    %1221 = vmatprep.subr.bf16.mxu0 0
    %1222 = vmatpush1.bf16.xpose.msra.mxu0 0
    %1223 = vmatprep.subr.bf16.mxu0 0
    %1224 = vmatpush1.bf16.xpose.msra.mxu0 0
    %1225 = vmatprep.subr.bf16.mxu0 0
    %1226 = vmatpush1.bf16.xpose.msra.mxu0 0
    %1227 = vmatprep.mubr.bf16.mxu0 0
    %1228 = vmatmul.mubr.bf16.gmra.mrb[0].mxu0 %v1190
    %v1229 = vpop.f32.mrb[0].mxu0
    %v1230 = vadd.f32 0.0, %v1229
    %v1231 = vpop.f32.mrb[0].mxu0
    %v1232 = vpop.f32.mrb[0].mxu0
    %v1233 = vpop.f32.mrb[0].mxu0
    %1234 = vdwg.mxu0
    %1235 = vrot.lane.b32.xlu0 %v234, 116
    %v1236 = vpop.permute.xlu0 %1235
    %1237 = vrot.lane.b32.xlu0 %v304, 116
    %v1238 = vpop.permute.xlu0 %1237
    %v1240 = vsel %vm111, %v1236, 0
    %v1243 = vsel %vm111, %v1238, 0
    %1245 = vmatprep.subr.bf16.mxu0 0
    %1246 = vmatpush1.bf16.xpose.msra.mxu0 %v1243
    %1247 = vmatprep.subr.bf16.mxu0 0
    %1248 = vmatpush1.bf16.xpose.msra.mxu0 0
    %1249 = vmatprep.subr.bf16.mxu0 0
    %1250 = vmatpush1.bf16.xpose.msra.mxu0 0
    %1251 = vmatprep.subr.bf16.mxu0 0
    %1252 = vmatpush1.bf16.xpose.msra.mxu0 0
    %1253 = vmatprep.subr.bf16.mxu0 0
    %1254 = vmatpush1.bf16.xpose.msra.mxu0 0
    %1255 = vmatprep.subr.bf16.mxu0 0
    %1256 = vmatpush1.bf16.xpose.msra.mxu0 0
    %1257 = vmatprep.subr.bf16.mxu0 0
    %1258 = vmatpush1.bf16.xpose.msra.mxu0 0
    %1259 = vmatprep.subr.bf16.mxu0 0
    %1260 = vmatpush1.bf16.xpose.msra.mxu0 0
    %1261 = vmatprep.subr.bf16.mxu0 0
    %1262 = vmatpush1.bf16.xpose.msra.mxu0 0
    %1263 = vmatprep.subr.bf16.mxu0 0
    %1264 = vmatpush1.bf16.xpose.msra.mxu0 0
    %1265 = vmatprep.subr.bf16.mxu0 0
    %1266 = vmatpush1.bf16.xpose.msra.mxu0 0
    %1267 = vmatprep.subr.bf16.mxu0 0
    %1268 = vmatpush1.bf16.xpose.msra.mxu0 0
    %1269 = vmatprep.subr.bf16.mxu0 0
    %1270 = vmatpush1.bf16.xpose.msra.mxu0 0
    %1271 = vmatprep.subr.bf16.mxu0 0
    %1272 = vmatpush1.bf16.xpose.msra.mxu0 0
    %1273 = vmatprep.subr.bf16.mxu0 0
    %1274 = vmatpush1.bf16.xpose.msra.mxu0 0
    %1275 = vmatprep.subr.bf16.mxu0 0
    %1276 = vmatpush1.bf16.xpose.msra.mxu0 0
    %1277 = vmatprep.mubr.bf16.mxu0 0
    %1278 = vmatmul.mubr.bf16.gmra.mrb[0].mxu0 %v1240
    %v1279 = vpop.f32.mrb[0].mxu0
    %v1280 = vadd.f32 0.0, %v1279
    %v1281 = vpop.f32.mrb[0].mxu0
    %v1282 = vpop.f32.mrb[0].mxu0
    %v1283 = vpop.f32.mrb[0].mxu0
    %1284 = vdwg.mxu0
    %v1285 = vsel %vm470, %v1230, -inf
    %1286 = vmax.xlane.f32.xlu0 %v1285
    %v1287 = vpop.xlane.xlu0 %1286
    %v1288 = vsel %vm470, %v1280, -inf
    %1289 = vmax.xlane.f32.xlu0 %v1288
    %v1290 = vpop.xlane.xlu0 %1289
    %v1291 = vsub.f32 %v1230, %v1287
    %v1292 = vsub.f32 %v1280, %v1290
    %v1293 = vmul.f32 %v1291, 1.442695
    %v1294 = vpow.pop %v1293
    %v1295 = vmul.f32 %v1292, 1.442695
    %v1296 = vpow.pop %v1295
    %v1297 = vsel %vm470, %v1294, 0.0
    %1298 = vadd.xlane.f32.xlu0 %v1297
    %v1299 = vpop.xlane.xlu0 %1298
    %v1300 = vsel %vm470, %v1296, 0.0
    %1301 = vadd.xlane.f32.xlu0 %v1300
    %v1302 = vpop.xlane.xlu0 %1301
    %v1303 = vrcp.pop %v1299
    %v1304 = vrcp.pop %v1302
    %v1305 = vmul.f32 %v1294, %v1303
    %v1306 = vmul.f32 %v1296, %v1304
    %v1307 = vadd.f32 %v1033, %v1305
    %v1308 = vadd.f32 %v1034, %v1306
    %v1309 = vpack.c.bf16 %v1305, %v1305
    %v1310 = vpack.c.bf16 %v1306, %v1306
    %1311 = vrot.lane.b32.xlu0 %v376, 116
    %v1312 = vpop.permute.xlu0 %1311
    %v1314 = vsel %vm470, %v1309, 0
    %v1317 = vsel %vm500, %v1312, 0
    %1319 = vmatprep.subr.bf16.mxu0 0
    %1320 = vmatpush1.bf16.msra.mxu0 %v1317
    %1321 = vmatprep.subr.bf16.mxu0 0
    %1322 = vmatpush1.bf16.msra.mxu0 0
    %1323 = vmatprep.subr.bf16.mxu0 0
    %1324 = vmatpush1.bf16.msra.mxu0 0
    %1325 = vmatprep.subr.bf16.mxu0 0
    %1326 = vmatpush1.bf16.msra.mxu0 0
    %1327 = vmatprep.subr.bf16.mxu0 0
    %1328 = vmatpush1.bf16.msra.mxu0 0
    %1329 = vmatprep.subr.bf16.mxu0 0
    %1330 = vmatpush1.bf16.msra.mxu0 0
    %1331 = vmatprep.subr.bf16.mxu0 0
    %1332 = vmatpush1.bf16.msra.mxu0 0
    %1333 = vmatprep.subr.bf16.mxu0 0
    %1334 = vmatpush1.bf16.msra.mxu0 0
    %1335 = vmatprep.subr.bf16.mxu0 0
    %1336 = vmatpush1.bf16.msra.mxu0 0
    %1337 = vmatprep.subr.bf16.mxu0 0
    %1338 = vmatpush1.bf16.msra.mxu0 0
    %1339 = vmatprep.subr.bf16.mxu0 0
    %1340 = vmatpush1.bf16.msra.mxu0 0
    %1341 = vmatprep.subr.bf16.mxu0 0
    %1342 = vmatpush1.bf16.msra.mxu0 0
    %1343 = vmatprep.subr.bf16.mxu0 0
    %1344 = vmatpush1.bf16.msra.mxu0 0
    %1345 = vmatprep.subr.bf16.mxu0 0
    %1346 = vmatpush1.bf16.msra.mxu0 0
    %1347 = vmatprep.subr.bf16.mxu0 0
    %1348 = vmatpush1.bf16.msra.mxu0 0
    %1349 = vmatprep.subr.bf16.mxu0 0
    %1350 = vmatpush1.bf16.msra.mxu0 0
    %1351 = vmatprep.mubr.bf16.mxu0 0
    %1352 = vmatmul.mubr.bf16.gmra.mrb[0].mxu0 %v1314
    %v1353 = vpop.f32.mrb[0].mxu0
    %v1354 = vadd.f32 0.0, %v1353
    %v1355 = vpop.f32.mrb[0].mxu0
    %v1356 = vpop.f32.mrb[0].mxu0
    %v1357 = vpop.f32.mrb[0].mxu0
    %1358 = vdwg.mxu0
    %1359 = vrot.lane.b32.xlu0 %v377, 116
    %v1360 = vpop.permute.xlu0 %1359
    %v1362 = vsel %vm470, %v1310, 0
    %v1365 = vsel %vm500, %v1360, 0
    %1367 = vmatprep.subr.bf16.mxu0 0
    %1368 = vmatpush1.bf16.msra.mxu0 %v1365
    %1369 = vmatprep.subr.bf16.mxu0 0
    %1370 = vmatpush1.bf16.msra.mxu0 0
    %1371 = vmatprep.subr.bf16.mxu0 0
    %1372 = vmatpush1.bf16.msra.mxu0 0
    %1373 = vmatprep.subr.bf16.mxu0 0
    %1374 = vmatpush1.bf16.msra.mxu0 0
    %1375 = vmatprep.subr.bf16.mxu0 0
    %1376 = vmatpush1.bf16.msra.mxu0 0
    %1377 = vmatprep.subr.bf16.mxu0 0
    %1378 = vmatpush1.bf16.msra.mxu0 0
    %1379 = vmatprep.subr.bf16.mxu0 0
    %1380 = vmatpush1.bf16.msra.mxu0 0
    %1381 = vmatprep.subr.bf16.mxu0 0
    %1382 = vmatpush1.bf16.msra.mxu0 0
    %1383 = vmatprep.subr.bf16.mxu0 0
    %1384 = vmatpush1.bf16.msra.mxu0 0
    %1385 = vmatprep.subr.bf16.mxu0 0
    %1386 = vmatpush1.bf16.msra.mxu0 0
    %1387 = vmatprep.subr.bf16.mxu0 0
    %1388 = vmatpush1.bf16.msra.mxu0 0
    %1389 = vmatprep.subr.bf16.mxu0 0
    %1390 = vmatpush1.bf16.msra.mxu0 0
    %1391 = vmatprep.subr.bf16.mxu0 0
    %1392 = vmatpush1.bf16.msra.mxu0 0
    %1393 = vmatprep.subr.bf16.mxu0 0
    %1394 = vmatpush1.bf16.msra.mxu0 0
    %1395 = vmatprep.subr.bf16.mxu0 0
    %1396 = vmatpush1.bf16.msra.mxu0 0
    %1397 = vmatprep.subr.bf16.mxu0 0
    %1398 = vmatpush1.bf16.msra.mxu0 0
    %1399 = vmatprep.mubr.bf16.mxu0 0
    %1400 = vmatmul.mubr.bf16.gmra.mrb[0].mxu0 %v1362
    %v1401 = vpop.f32.mrb[0].mxu0
    %v1402 = vadd.f32 0.0, %v1401
    %v1403 = vpop.f32.mrb[0].mxu0
    %v1404 = vpop.f32.mrb[0].mxu0
    %v1405 = vpop.f32.mrb[0].mxu0
    %1406 = vdwg.mxu0
    %v1407 = vpack.c.bf16 %v1402, %v1354
    %s1408 = scalar_lea.vmem %s10, 6
    %v1409 = vld [vmem:[%s1408] sm:$0x3]
    %v1411 = vsel %vm111, %v1407, 0
    %v1414 = vsel %vm115, %v1409, 0
    %1416 = vmatprep.subr.bf16.mxu0 0
    %1417 = vmatpush1.bf16.msra.mxu0 %v1414
    %1418 = vmatprep.subr.bf16.mxu0 0
    %1419 = vmatpush1.bf16.msra.mxu0 0
    %1420 = vmatprep.subr.bf16.mxu0 0
    %1421 = vmatpush1.bf16.msra.mxu0 0
    %1422 = vmatprep.subr.bf16.mxu0 0
    %1423 = vmatpush1.bf16.msra.mxu0 0
    %1424 = vmatprep.subr.bf16.mxu0 0
    %1425 = vmatpush1.bf16.msra.mxu0 0
    %1426 = vmatprep.subr.bf16.mxu0 0
    %1427 = vmatpush1.bf16.msra.mxu0 0
    %1428 = vmatprep.subr.bf16.mxu0 0
    %1429 = vmatpush1.bf16.msra.mxu0 0
    %1430 = vmatprep.subr.bf16.mxu0 0
    %1431 = vmatpush1.bf16.msra.mxu0 0
    %1432 = vmatprep.subr.bf16.mxu0 0
    %1433 = vmatpush1.bf16.msra.mxu0 0
    %1434 = vmatprep.subr.bf16.mxu0 0
    %1435 = vmatpush1.bf16.msra.mxu0 0
    %1436 = vmatprep.subr.bf16.mxu0 0
    %1437 = vmatpush1.bf16.msra.mxu0 0
    %1438 = vmatprep.subr.bf16.mxu0 0
    %1439 = vmatpush1.bf16.msra.mxu0 0
    %1440 = vmatprep.subr.bf16.mxu0 0
    %1441 = vmatpush1.bf16.msra.mxu0 0
    %1442 = vmatprep.subr.bf16.mxu0 0
    %1443 = vmatpush1.bf16.msra.mxu0 0
    %1444 = vmatprep.subr.bf16.mxu0 0
    %1445 = vmatpush1.bf16.msra.mxu0 0
    %1446 = vmatprep.subr.bf16.mxu0 0
    %1447 = vmatpush1.bf16.msra.mxu0 0
    %1448 = vmatprep.mubr.bf16.mxu0 0
    %1449 = vmatmul.mubr.bf16.gmra.mrb[0].mxu0 %v1411
    %v1450 = vpop.f32.mrb[0].mxu0
    %v1451 = vadd.f32 0.0, %v1450
    %v1452 = vpop.f32.mrb[0].mxu0
    %v1453 = vpop.f32.mrb[0].mxu0
    %v1454 = vadd.f32 0.0, %v1453
    %v1455 = vpop.f32.mrb[0].mxu0
    %1456 = vdwg.mxu0
    %v1457 = vadd.f32 %v1183, %v1451
    %v1458 = vadd.f32 %v1184, %v1454
    %1459 = vrot.lane.b32.xlu0 %v233, 112
    %v1460 = vpop.permute.xlu0 %1459
    %1461 = vrot.lane.b32.xlu0 %v303, 112
    %v1462 = vpop.permute.xlu0 %1461
    %v1464 = vsel %vm111, %v1460, 0
    %v1467 = vsel %vm111, %v1462, 0
    %1469 = vmatprep.subr.bf16.mxu0 0
    %1470 = vmatpush1.bf16.xpose.msra.mxu0 %v1467
    %1471 = vmatprep.subr.bf16.mxu0 0
    %1472 = vmatpush1.bf16.xpose.msra.mxu0 0
    %1473 = vmatprep.subr.bf16.mxu0 0
    %1474 = vmatpush1.bf16.xpose.msra.mxu0 0
    %1475 = vmatprep.subr.bf16.mxu0 0
    %1476 = vmatpush1.bf16.xpose.msra.mxu0 0
    %1477 = vmatprep.subr.bf16.mxu0 0
    %1478 = vmatpush1.bf16.xpose.msra.mxu0 0
    %1479 = vmatprep.subr.bf16.mxu0 0
    %1480 = vmatpush1.bf16.xpose.msra.mxu0 0
    %1481 = vmatprep.subr.bf16.mxu0 0
    %1482 = vmatpush1.bf16.xpose.msra.mxu0 0
    %1483 = vmatprep.subr.bf16.mxu0 0
    %1484 = vmatpush1.bf16.xpose.msra.mxu0 0
    %1485 = vmatprep.subr.bf16.mxu0 0
    %1486 = vmatpush1.bf16.xpose.msra.mxu0 0
    %1487 = vmatprep.subr.bf16.mxu0 0
    %1488 = vmatpush1.bf16.xpose.msra.mxu0 0
    %1489 = vmatprep.subr.bf16.mxu0 0
    %1490 = vmatpush1.bf16.xpose.msra.mxu0 0
    %1491 = vmatprep.subr.bf16.mxu0 0
    %1492 = vmatpush1.bf16.xpose.msra.mxu0 0
    %1493 = vmatprep.subr.bf16.mxu0 0
    %1494 = vmatpush1.bf16.xpose.msra.mxu0 0
    %1495 = vmatprep.subr.bf16.mxu0 0
    %1496 = vmatpush1.bf16.xpose.msra.mxu0 0
    %1497 = vmatprep.subr.bf16.mxu0 0
    %1498 = vmatpush1.bf16.xpose.msra.mxu0 0
    %1499 = vmatprep.subr.bf16.mxu0 0
    %1500 = vmatpush1.bf16.xpose.msra.mxu0 0
    %1501 = vmatprep.mubr.bf16.mxu0 0
    %1502 = vmatmul.mubr.bf16.gmra.mrb[0].mxu0 %v1464
    %v1503 = vpop.f32.mrb[0].mxu0
    %v1504 = vadd.f32 0.0, %v1503
    %v1505 = vpop.f32.mrb[0].mxu0
    %v1506 = vpop.f32.mrb[0].mxu0
    %v1507 = vpop.f32.mrb[0].mxu0
    %1508 = vdwg.mxu0
    %1509 = vrot.lane.b32.xlu0 %v234, 112
    %v1510 = vpop.permute.xlu0 %1509
    %1511 = vrot.lane.b32.xlu0 %v304, 112
    %v1512 = vpop.permute.xlu0 %1511
    %v1514 = vsel %vm111, %v1510, 0
    %v1517 = vsel %vm111, %v1512, 0
    %1519 = vmatprep.subr.bf16.mxu0 0
    %1520 = vmatpush1.bf16.xpose.msra.mxu0 %v1517
    %1521 = vmatprep.subr.bf16.mxu0 0
    %1522 = vmatpush1.bf16.xpose.msra.mxu0 0
    %1523 = vmatprep.subr.bf16.mxu0 0
    %1524 = vmatpush1.bf16.xpose.msra.mxu0 0
    %1525 = vmatprep.subr.bf16.mxu0 0
    %1526 = vmatpush1.bf16.xpose.msra.mxu0 0
    %1527 = vmatprep.subr.bf16.mxu0 0
    %1528 = vmatpush1.bf16.xpose.msra.mxu0 0
    %1529 = vmatprep.subr.bf16.mxu0 0
    %1530 = vmatpush1.bf16.xpose.msra.mxu0 0
    %1531 = vmatprep.subr.bf16.mxu0 0
    %1532 = vmatpush1.bf16.xpose.msra.mxu0 0
    %1533 = vmatprep.subr.bf16.mxu0 0
    %1534 = vmatpush1.bf16.xpose.msra.mxu0 0
    %1535 = vmatprep.subr.bf16.mxu0 0
    %1536 = vmatpush1.bf16.xpose.msra.mxu0 0
    %1537 = vmatprep.subr.bf16.mxu0 0
    %1538 = vmatpush1.bf16.xpose.msra.mxu0 0
    %1539 = vmatprep.subr.bf16.mxu0 0
    %1540 = vmatpush1.bf16.xpose.msra.mxu0 0
    %1541 = vmatprep.subr.bf16.mxu0 0
    %1542 = vmatpush1.bf16.xpose.msra.mxu0 0
    %1543 = vmatprep.subr.bf16.mxu0 0
    %1544 = vmatpush1.bf16.xpose.msra.mxu0 0
    %1545 = vmatprep.subr.bf16.mxu0 0
    %1546 = vmatpush1.bf16.xpose.msra.mxu0 0
    %1547 = vmatprep.subr.bf16.mxu0 0
    %1548 = vmatpush1.bf16.xpose.msra.mxu0 0
    %1549 = vmatprep.subr.bf16.mxu0 0
    %1550 = vmatpush1.bf16.xpose.msra.mxu0 0
    %1551 = vmatprep.mubr.bf16.mxu0 0
    %1552 = vmatmul.mubr.bf16.gmra.mrb[0].mxu0 %v1514
    %v1553 = vpop.f32.mrb[0].mxu0
    %v1554 = vadd.f32 0.0, %v1553
    %v1555 = vpop.f32.mrb[0].mxu0
    %v1556 = vpop.f32.mrb[0].mxu0
    %v1557 = vpop.f32.mrb[0].mxu0
    %1558 = vdwg.mxu0
    %v1559 = vsel %vm470, %v1504, -inf
    %1560 = vmax.xlane.f32.xlu0 %v1559
    %v1561 = vpop.xlane.xlu0 %1560
    %v1562 = vsel %vm470, %v1554, -inf
    %1563 = vmax.xlane.f32.xlu0 %v1562
    %v1564 = vpop.xlane.xlu0 %1563
    %v1565 = vsub.f32 %v1504, %v1561
    %v1566 = vsub.f32 %v1554, %v1564
    %v1567 = vmul.f32 %v1565, 1.442695
    %v1568 = vpow.pop %v1567
    %v1569 = vmul.f32 %v1566, 1.442695
    %v1570 = vpow.pop %v1569
    %v1571 = vsel %vm470, %v1568, 0.0
    %1572 = vadd.xlane.f32.xlu0 %v1571
    %v1573 = vpop.xlane.xlu0 %1572
    %v1574 = vsel %vm470, %v1570, 0.0
    %1575 = vadd.xlane.f32.xlu0 %v1574
    %v1576 = vpop.xlane.xlu0 %1575
    %v1577 = vrcp.pop %v1573
    %v1578 = vrcp.pop %v1576
    %v1579 = vmul.f32 %v1568, %v1577
    %v1580 = vmul.f32 %v1570, %v1578
    %v1581 = vadd.f32 %v1307, %v1579
    %v1582 = vadd.f32 %v1308, %v1580
    %v1583 = vpack.c.bf16 %v1579, %v1579
    %v1584 = vpack.c.bf16 %v1580, %v1580
    %1585 = vrot.lane.b32.xlu0 %v376, 112
    %v1586 = vpop.permute.xlu0 %1585
    %v1588 = vsel %vm470, %v1583, 0
    %v1591 = vsel %vm500, %v1586, 0
    %1593 = vmatprep.subr.bf16.mxu0 0
    %1594 = vmatpush1.bf16.msra.mxu0 %v1591
    %1595 = vmatprep.subr.bf16.mxu0 0
    %1596 = vmatpush1.bf16.msra.mxu0 0
    %1597 = vmatprep.subr.bf16.mxu0 0
    %1598 = vmatpush1.bf16.msra.mxu0 0
    %1599 = vmatprep.subr.bf16.mxu0 0
    %1600 = vmatpush1.bf16.msra.mxu0 0
    %1601 = vmatprep.subr.bf16.mxu0 0
    %1602 = vmatpush1.bf16.msra.mxu0 0
    %1603 = vmatprep.subr.bf16.mxu0 0
    %1604 = vmatpush1.bf16.msra.mxu0 0
    %1605 = vmatprep.subr.bf16.mxu0 0
    %1606 = vmatpush1.bf16.msra.mxu0 0
    %1607 = vmatprep.subr.bf16.mxu0 0
    %1608 = vmatpush1.bf16.msra.mxu0 0
    %1609 = vmatprep.subr.bf16.mxu0 0
    %1610 = vmatpush1.bf16.msra.mxu0 0
    %1611 = vmatprep.subr.bf16.mxu0 0
    %1612 = vmatpush1.bf16.msra.mxu0 0
    %1613 = vmatprep.subr.bf16.mxu0 0
    %1614 = vmatpush1.bf16.msra.mxu0 0
    %1615 = vmatprep.subr.bf16.mxu0 0
    %1616 = vmatpush1.bf16.msra.mxu0 0
    %1617 = vmatprep.subr.bf16.mxu0 0
    %1618 = vmatpush1.bf16.msra.mxu0 0
    %1619 = vmatprep.subr.bf16.mxu0 0
    %1620 = vmatpush1.bf16.msra.mxu0 0
    %1621 = vmatprep.subr.bf16.mxu0 0
    %1622 = vmatpush1.bf16.msra.mxu0 0
    %1623 = vmatprep.subr.bf16.mxu0 0
    %1624 = vmatpush1.bf16.msra.mxu0 0
    %1625 = vmatprep.mubr.bf16.mxu0 0
    %1626 = vmatmul.mubr.bf16.gmra.mrb[0].mxu0 %v1588
    %v1627 = vpop.f32.mrb[0].mxu0
    %v1628 = vadd.f32 0.0, %v1627
    %v1629 = vpop.f32.mrb[0].mxu0
    %v1630 = vpop.f32.mrb[0].mxu0
    %v1631 = vpop.f32.mrb[0].mxu0
    %1632 = vdwg.mxu0
    %1633 = vrot.lane.b32.xlu0 %v377, 112
    %v1634 = vpop.permute.xlu0 %1633
    %v1636 = vsel %vm470, %v1584, 0
    %v1639 = vsel %vm500, %v1634, 0
    %1641 = vmatprep.subr.bf16.mxu0 0
    %1642 = vmatpush1.bf16.msra.mxu0 %v1639
    %1643 = vmatprep.subr.bf16.mxu0 0
    %1644 = vmatpush1.bf16.msra.mxu0 0
    %1645 = vmatprep.subr.bf16.mxu0 0
    %1646 = vmatpush1.bf16.msra.mxu0 0
    %1647 = vmatprep.subr.bf16.mxu0 0
    %1648 = vmatpush1.bf16.msra.mxu0 0
    %1649 = vmatprep.subr.bf16.mxu0 0
    %1650 = vmatpush1.bf16.msra.mxu0 0
    %1651 = vmatprep.subr.bf16.mxu0 0
    %1652 = vmatpush1.bf16.msra.mxu0 0
    %1653 = vmatprep.subr.bf16.mxu0 0
    %1654 = vmatpush1.bf16.msra.mxu0 0
    %1655 = vmatprep.subr.bf16.mxu0 0
    %1656 = vmatpush1.bf16.msra.mxu0 0
    %1657 = vmatprep.subr.bf16.mxu0 0
    %1658 = vmatpush1.bf16.msra.mxu0 0
    %1659 = vmatprep.subr.bf16.mxu0 0
    %1660 = vmatpush1.bf16.msra.mxu0 0
    %1661 = vmatprep.subr.bf16.mxu0 0
    %1662 = vmatpush1.bf16.msra.mxu0 0
    %1663 = vmatprep.subr.bf16.mxu0 0
    %1664 = vmatpush1.bf16.msra.mxu0 0
    %1665 = vmatprep.subr.bf16.mxu0 0
    %1666 = vmatpush1.bf16.msra.mxu0 0
    %1667 = vmatprep.subr.bf16.mxu0 0
    %1668 = vmatpush1.bf16.msra.mxu0 0
    %1669 = vmatprep.subr.bf16.mxu0 0
    %1670 = vmatpush1.bf16.msra.mxu0 0
    %1671 = vmatprep.subr.bf16.mxu0 0
    %1672 = vmatpush1.bf16.msra.mxu0 0
    %1673 = vmatprep.mubr.bf16.mxu0 0
    %1674 = vmatmul.mubr.bf16.gmra.mrb[0].mxu0 %v1636
    %v1675 = vpop.f32.mrb[0].mxu0
    %v1676 = vadd.f32 0.0, %v1675
    %v1677 = vpop.f32.mrb[0].mxu0
    %v1678 = vpop.f32.mrb[0].mxu0
    %v1679 = vpop.f32.mrb[0].mxu0
    %1680 = vdwg.mxu0
    %v1681 = vpack.c.bf16 %v1676, %v1628
    %s1682 = scalar_lea.vmem %s10, 8
    %v1683 = vld [vmem:[%s1682] sm:$0x3]
    %v1685 = vsel %vm111, %v1681, 0
    %v1688 = vsel %vm115, %v1683, 0
    %1690 = vmatprep.subr.bf16.mxu0 0
    %1691 = vmatpush1.bf16.msra.mxu0 %v1688
    %1692 = vmatprep.subr.bf16.mxu0 0
    %1693 = vmatpush1.bf16.msra.mxu0 0
    %1694 = vmatprep.subr.bf16.mxu0 0
    %1695 = vmatpush1.bf16.msra.mxu0 0
    %1696 = vmatprep.subr.bf16.mxu0 0
    %1697 = vmatpush1.bf16.msra.mxu0 0
    %1698 = vmatprep.subr.bf16.mxu0 0
    %1699 = vmatpush1.bf16.msra.mxu0 0
    %1700 = vmatprep.subr.bf16.mxu0 0
    %1701 = vmatpush1.bf16.msra.mxu0 0
    %1702 = vmatprep.subr.bf16.mxu0 0
    %1703 = vmatpush1.bf16.msra.mxu0 0
    %1704 = vmatprep.subr.bf16.mxu0 0
    %1705 = vmatpush1.bf16.msra.mxu0 0
    %1706 = vmatprep.subr.bf16.mxu0 0
    %1707 = vmatpush1.bf16.msra.mxu0 0
    %1708 = vmatprep.subr.bf16.mxu0 0
    %1709 = vmatpush1.bf16.msra.mxu0 0
    %1710 = vmatprep.subr.bf16.mxu0 0
    %1711 = vmatpush1.bf16.msra.mxu0 0
    %1712 = vmatprep.subr.bf16.mxu0 0
    %1713 = vmatpush1.bf16.msra.mxu0 0
    %1714 = vmatprep.subr.bf16.mxu0 0
    %1715 = vmatpush1.bf16.msra.mxu0 0
    %1716 = vmatprep.subr.bf16.mxu0 0
    %1717 = vmatpush1.bf16.msra.mxu0 0
    %1718 = vmatprep.subr.bf16.mxu0 0
    %1719 = vmatpush1.bf16.msra.mxu0 0
    %1720 = vmatprep.subr.bf16.mxu0 0
    %1721 = vmatpush1.bf16.msra.mxu0 0
    %1722 = vmatprep.mubr.bf16.mxu0 0
    %1723 = vmatmul.mubr.bf16.gmra.mrb[0].mxu0 %v1685
    %v1724 = vpop.f32.mrb[0].mxu0
    %v1725 = vadd.f32 0.0, %v1724
    %v1726 = vpop.f32.mrb[0].mxu0
    %v1727 = vpop.f32.mrb[0].mxu0
    %v1728 = vadd.f32 0.0, %v1727
    %v1729 = vpop.f32.mrb[0].mxu0
    %1730 = vdwg.mxu0
    %v1731 = vadd.f32 %v1457, %v1725
    %v1732 = vadd.f32 %v1458, %v1728
    %1733 = vrot.lane.b32.xlu0 %v233, 108
    %v1734 = vpop.permute.xlu0 %1733
    %1735 = vrot.lane.b32.xlu0 %v303, 108
    %v1736 = vpop.permute.xlu0 %1735
    %v1738 = vsel %vm111, %v1734, 0
    %v1741 = vsel %vm111, %v1736, 0
    %1743 = vmatprep.subr.bf16.mxu0 0
    %1744 = vmatpush1.bf16.xpose.msra.mxu0 %v1741
    %1745 = vmatprep.subr.bf16.mxu0 0
    %1746 = vmatpush1.bf16.xpose.msra.mxu0 0
    %1747 = vmatprep.subr.bf16.mxu0 0
    %1748 = vmatpush1.bf16.xpose.msra.mxu0 0
    %1749 = vmatprep.subr.bf16.mxu0 0
    %1750 = vmatpush1.bf16.xpose.msra.mxu0 0
    %1751 = vmatprep.subr.bf16.mxu0 0
    %1752 = vmatpush1.bf16.xpose.msra.mxu0 0
    %1753 = vmatprep.subr.bf16.mxu0 0
    %1754 = vmatpush1.bf16.xpose.msra.mxu0 0
    %1755 = vmatprep.subr.bf16.mxu0 0
    %1756 = vmatpush1.bf16.xpose.msra.mxu0 0
    %1757 = vmatprep.subr.bf16.mxu0 0
    %1758 = vmatpush1.bf16.xpose.msra.mxu0 0
    %1759 = vmatprep.subr.bf16.mxu0 0
    %1760 = vmatpush1.bf16.xpose.msra.mxu0 0
    %1761 = vmatprep.subr.bf16.mxu0 0
    %1762 = vmatpush1.bf16.xpose.msra.mxu0 0
    %1763 = vmatprep.subr.bf16.mxu0 0
    %1764 = vmatpush1.bf16.xpose.msra.mxu0 0
    %1765 = vmatprep.subr.bf16.mxu0 0
    %1766 = vmatpush1.bf16.xpose.msra.mxu0 0
    %1767 = vmatprep.subr.bf16.mxu0 0
    %1768 = vmatpush1.bf16.xpose.msra.mxu0 0
    %1769 = vmatprep.subr.bf16.mxu0 0
    %1770 = vmatpush1.bf16.xpose.msra.mxu0 0
    %1771 = vmatprep.subr.bf16.mxu0 0
    %1772 = vmatpush1.bf16.xpose.msra.mxu0 0
    %1773 = vmatprep.subr.bf16.mxu0 0
    %1774 = vmatpush1.bf16.xpose.msra.mxu0 0
    %1775 = vmatprep.mubr.bf16.mxu0 0
    %1776 = vmatmul.mubr.bf16.gmra.mrb[0].mxu0 %v1738
    %v1777 = vpop.f32.mrb[0].mxu0
    %v1778 = vadd.f32 0.0, %v1777
    %v1779 = vpop.f32.mrb[0].mxu0
    %v1780 = vpop.f32.mrb[0].mxu0
    %v1781 = vpop.f32.mrb[0].mxu0
    %1782 = vdwg.mxu0
    %1783 = vrot.lane.b32.xlu0 %v234, 108
    %v1784 = vpop.permute.xlu0 %1783
    %1785 = vrot.lane.b32.xlu0 %v304, 108
    %v1786 = vpop.permute.xlu0 %1785
    %v1788 = vsel %vm111, %v1784, 0
    %v1791 = vsel %vm111, %v1786, 0
    %1793 = vmatprep.subr.bf16.mxu0 0
    %1794 = vmatpush1.bf16.xpose.msra.mxu0 %v1791
    %1795 = vmatprep.subr.bf16.mxu0 0
    %1796 = vmatpush1.bf16.xpose.msra.mxu0 0
    %1797 = vmatprep.subr.bf16.mxu0 0
    %1798 = vmatpush1.bf16.xpose.msra.mxu0 0
    %1799 = vmatprep.subr.bf16.mxu0 0
    %1800 = vmatpush1.bf16.xpose.msra.mxu0 0
    %1801 = vmatprep.subr.bf16.mxu0 0
    %1802 = vmatpush1.bf16.xpose.msra.mxu0 0
    %1803 = vmatprep.subr.bf16.mxu0 0
    %1804 = vmatpush1.bf16.xpose.msra.mxu0 0
    %1805 = vmatprep.subr.bf16.mxu0 0
    %1806 = vmatpush1.bf16.xpose.msra.mxu0 0
    %1807 = vmatprep.subr.bf16.mxu0 0
    %1808 = vmatpush1.bf16.xpose.msra.mxu0 0
    %1809 = vmatprep.subr.bf16.mxu0 0
    %1810 = vmatpush1.bf16.xpose.msra.mxu0 0
    %1811 = vmatprep.subr.bf16.mxu0 0
    %1812 = vmatpush1.bf16.xpose.msra.mxu0 0
    %1813 = vmatprep.subr.bf16.mxu0 0
    %1814 = vmatpush1.bf16.xpose.msra.mxu0 0
    %1815 = vmatprep.subr.bf16.mxu0 0
    %1816 = vmatpush1.bf16.xpose.msra.mxu0 0
    %1817 = vmatprep.subr.bf16.mxu0 0
    %1818 = vmatpush1.bf16.xpose.msra.mxu0 0
    %1819 = vmatprep.subr.bf16.mxu0 0
    %1820 = vmatpush1.bf16.xpose.msra.mxu0 0
    %1821 = vmatprep.subr.bf16.mxu0 0
    %1822 = vmatpush1.bf16.xpose.msra.mxu0 0
    %1823 = vmatprep.subr.bf16.mxu0 0
    %1824 = vmatpush1.bf16.xpose.msra.mxu0 0
    %1825 = vmatprep.mubr.bf16.mxu0 0
    %1826 = vmatmul.mubr.bf16.gmra.mrb[0].mxu0 %v1788
    %v1827 = vpop.f32.mrb[0].mxu0
    %v1828 = vadd.f32 0.0, %v1827
    %v1829 = vpop.f32.mrb[0].mxu0
    %v1830 = vpop.f32.mrb[0].mxu0
    %v1831 = vpop.f32.mrb[0].mxu0
    %1832 = vdwg.mxu0
    %v1833 = vsel %vm470, %v1778, -inf
    %1834 = vmax.xlane.f32.xlu0 %v1833
    %v1835 = vpop.xlane.xlu0 %1834
    %v1836 = vsel %vm470, %v1828, -inf
    %1837 = vmax.xlane.f32.xlu0 %v1836
    %v1838 = vpop.xlane.xlu0 %1837
    %v1839 = vsub.f32 %v1778, %v1835
    %v1840 = vsub.f32 %v1828, %v1838
    %v1841 = vmul.f32 %v1839, 1.442695
    %v1842 = vpow.pop %v1841
    %v1843 = vmul.f32 %v1840, 1.442695
    %v1844 = vpow.pop %v1843
    %v1845 = vsel %vm470, %v1842, 0.0
    %1846 = vadd.xlane.f32.xlu0 %v1845
    %v1847 = vpop.xlane.xlu0 %1846
    %v1848 = vsel %vm470, %v1844, 0.0
    %1849 = vadd.xlane.f32.xlu0 %v1848
    %v1850 = vpop.xlane.xlu0 %1849
    %v1851 = vrcp.pop %v1847
    %v1852 = vrcp.pop %v1850
    %v1853 = vmul.f32 %v1842, %v1851
    %v1854 = vmul.f32 %v1844, %v1852
    %v1855 = vadd.f32 %v1581, %v1853
    %v1856 = vadd.f32 %v1582, %v1854
    %v1857 = vpack.c.bf16 %v1853, %v1853
    %v1858 = vpack.c.bf16 %v1854, %v1854
    %1859 = vrot.lane.b32.xlu0 %v376, 108
    %v1860 = vpop.permute.xlu0 %1859
    %v1862 = vsel %vm470, %v1857, 0
    %v1865 = vsel %vm500, %v1860, 0
    %1867 = vmatprep.subr.bf16.mxu0 0
    %1868 = vmatpush1.bf16.msra.mxu0 %v1865
    %1869 = vmatprep.subr.bf16.mxu0 0
    %1870 = vmatpush1.bf16.msra.mxu0 0
    %1871 = vmatprep.subr.bf16.mxu0 0
    %1872 = vmatpush1.bf16.msra.mxu0 0
    %1873 = vmatprep.subr.bf16.mxu0 0
    %1874 = vmatpush1.bf16.msra.mxu0 0
    %1875 = vmatprep.subr.bf16.mxu0 0
    %1876 = vmatpush1.bf16.msra.mxu0 0
    %1877 = vmatprep.subr.bf16.mxu0 0
    %1878 = vmatpush1.bf16.msra.mxu0 0
    %1879 = vmatprep.subr.bf16.mxu0 0
    %1880 = vmatpush1.bf16.msra.mxu0 0
    %1881 = vmatprep.subr.bf16.mxu0 0
    %1882 = vmatpush1.bf16.msra.mxu0 0
    %1883 = vmatprep.subr.bf16.mxu0 0
    %1884 = vmatpush1.bf16.msra.mxu0 0
    %1885 = vmatprep.subr.bf16.mxu0 0
    %1886 = vmatpush1.bf16.msra.mxu0 0
    %1887 = vmatprep.subr.bf16.mxu0 0
    %1888 = vmatpush1.bf16.msra.mxu0 0
    %1889 = vmatprep.subr.bf16.mxu0 0
    %1890 = vmatpush1.bf16.msra.mxu0 0
    %1891 = vmatprep.subr.bf16.mxu0 0
    %1892 = vmatpush1.bf16.msra.mxu0 0
    %1893 = vmatprep.subr.bf16.mxu0 0
    %1894 = vmatpush1.bf16.msra.mxu0 0
    %1895 = vmatprep.subr.bf16.mxu0 0
    %1896 = vmatpush1.bf16.msra.mxu0 0
    %1897 = vmatprep.subr.bf16.mxu0 0
    %1898 = vmatpush1.bf16.msra.mxu0 0
    %1899 = vmatprep.mubr.bf16.mxu0 0
    %1900 = vmatmul.mubr.bf16.gmra.mrb[0].mxu0 %v1862
    %v1901 = vpop.f32.mrb[0].mxu0
    %v1902 = vadd.f32 0.0, %v1901
    %v1903 = vpop.f32.mrb[0].mxu0
    %v1904 = vpop.f32.mrb[0].mxu0
    %v1905 = vpop.f32.mrb[0].mxu0
    %1906 = vdwg.mxu0
    %1907 = vrot.lane.b32.xlu0 %v377, 108
    %v1908 = vpop.permute.xlu0 %1907
    %v1910 = vsel %vm470, %v1858, 0
    %v1913 = vsel %vm500, %v1908, 0
    %1915 = vmatprep.subr.bf16.mxu0 0
    %1916 = vmatpush1.bf16.msra.mxu0 %v1913
    %1917 = vmatprep.subr.bf16.mxu0 0
    %1918 = vmatpush1.bf16.msra.mxu0 0
    %1919 = vmatprep.subr.bf16.mxu0 0
    %1920 = vmatpush1.bf16.msra.mxu0 0
    %1921 = vmatprep.subr.bf16.mxu0 0
    %1922 = vmatpush1.bf16.msra.mxu0 0
    %1923 = vmatprep.subr.bf16.mxu0 0
    %1924 = vmatpush1.bf16.msra.mxu0 0
    %1925 = vmatprep.subr.bf16.mxu0 0
    %1926 = vmatpush1.bf16.msra.mxu0 0
    %1927 = vmatprep.subr.bf16.mxu0 0
    %1928 = vmatpush1.bf16.msra.mxu0 0
    %1929 = vmatprep.subr.bf16.mxu0 0
    %1930 = vmatpush1.bf16.msra.mxu0 0
    %1931 = vmatprep.subr.bf16.mxu0 0
    %1932 = vmatpush1.bf16.msra.mxu0 0
    %1933 = vmatprep.subr.bf16.mxu0 0
    %1934 = vmatpush1.bf16.msra.mxu0 0
    %1935 = vmatprep.subr.bf16.mxu0 0
    %1936 = vmatpush1.bf16.msra.mxu0 0
    %1937 = vmatprep.subr.bf16.mxu0 0
    %1938 = vmatpush1.bf16.msra.mxu0 0
    %1939 = vmatprep.subr.bf16.mxu0 0
    %1940 = vmatpush1.bf16.msra.mxu0 0
    %1941 = vmatprep.subr.bf16.mxu0 0
    %1942 = vmatpush1.bf16.msra.mxu0 0
    %1943 = vmatprep.subr.bf16.mxu0 0
    %1944 = vmatpush1.bf16.msra.mxu0 0
    %1945 = vmatprep.subr.bf16.mxu0 0
    %1946 = vmatpush1.bf16.msra.mxu0 0
    %1947 = vmatprep.mubr.bf16.mxu0 0
    %1948 = vmatmul.mubr.bf16.gmra.mrb[0].mxu0 %v1910
    %v1949 = vpop.f32.mrb[0].mxu0
    %v1950 = vadd.f32 0.0, %v1949
    %v1951 = vpop.f32.mrb[0].mxu0
    %v1952 = vpop.f32.mrb[0].mxu0
    %v1953 = vpop.f32.mrb[0].mxu0
    %1954 = vdwg.mxu0
    %v1955 = vpack.c.bf16 %v1950, %v1902
    %s1956 = scalar_lea.vmem %s10, 10
    %v1957 = vld [vmem:[%s1956] sm:$0x3]
    %v1959 = vsel %vm111, %v1955, 0
    %v1962 = vsel %vm115, %v1957, 0
    %1964 = vmatprep.subr.bf16.mxu0 0
    %1965 = vmatpush1.bf16.msra.mxu0 %v1962
    %1966 = vmatprep.subr.bf16.mxu0 0
    %1967 = vmatpush1.bf16.msra.mxu0 0
    %1968 = vmatprep.subr.bf16.mxu0 0
    %1969 = vmatpush1.bf16.msra.mxu0 0
    %1970 = vmatprep.subr.bf16.mxu0 0
    %1971 = vmatpush1.bf16.msra.mxu0 0
    %1972 = vmatprep.subr.bf16.mxu0 0
    %1973 = vmatpush1.bf16.msra.mxu0 0
    %1974 = vmatprep.subr.bf16.mxu0 0
    %1975 = vmatpush1.bf16.msra.mxu0 0
    %1976 = vmatprep.subr.bf16.mxu0 0
    %1977 = vmatpush1.bf16.msra.mxu0 0
    %1978 = vmatprep.subr.bf16.mxu0 0
    %1979 = vmatpush1.bf16.msra.mxu0 0
    %1980 = vmatprep.subr.bf16.mxu0 0
    %1981 = vmatpush1.bf16.msra.mxu0 0
    %1982 = vmatprep.subr.bf16.mxu0 0
    %1983 = vmatpush1.bf16.msra.mxu0 0
    %1984 = vmatprep.subr.bf16.mxu0 0
    %1985 = vmatpush1.bf16.msra.mxu0 0
    %1986 = vmatprep.subr.bf16.mxu0 0
    %1987 = vmatpush1.bf16.msra.mxu0 0
    %1988 = vmatprep.subr.bf16.mxu0 0
    %1989 = vmatpush1.bf16.msra.mxu0 0
    %1990 = vmatprep.subr.bf16.mxu0 0
    %1991 = vmatpush1.bf16.msra.mxu0 0
    %1992 = vmatprep.subr.bf16.mxu0 0
    %1993 = vmatpush1.bf16.msra.mxu0 0
    %1994 = vmatprep.subr.bf16.mxu0 0
    %1995 = vmatpush1.bf16.msra.mxu0 0
    %1996 = vmatprep.mubr.bf16.mxu0 0
    %1997 = vmatmul.mubr.bf16.gmra.mrb[0].mxu0 %v1959
    %v1998 = vpop.f32.mrb[0].mxu0
    %v1999 = vadd.f32 0.0, %v1998
    %v2000 = vpop.f32.mrb[0].mxu0
    %v2001 = vpop.f32.mrb[0].mxu0
    %v2002 = vadd.f32 0.0, %v2001
    %v2003 = vpop.f32.mrb[0].mxu0
    %2004 = vdwg.mxu0
    %v2005 = vadd.f32 %v1731, %v1999
    %v2006 = vadd.f32 %v1732, %v2002
    %2007 = vrot.lane.b32.xlu0 %v233, 104
    %v2008 = vpop.permute.xlu0 %2007
    %2009 = vrot.lane.b32.xlu0 %v303, 104
    %v2010 = vpop.permute.xlu0 %2009
    %v2012 = vsel %vm111, %v2008, 0
    %v2015 = vsel %vm111, %v2010, 0
    %2017 = vmatprep.subr.bf16.mxu0 0
    %2018 = vmatpush1.bf16.xpose.msra.mxu0 %v2015
    %2019 = vmatprep.subr.bf16.mxu0 0
    %2020 = vmatpush1.bf16.xpose.msra.mxu0 0
    %2021 = vmatprep.subr.bf16.mxu0 0
    %2022 = vmatpush1.bf16.xpose.msra.mxu0 0
    %2023 = vmatprep.subr.bf16.mxu0 0
    %2024 = vmatpush1.bf16.xpose.msra.mxu0 0
    %2025 = vmatprep.subr.bf16.mxu0 0
    %2026 = vmatpush1.bf16.xpose.msra.mxu0 0
    %2027 = vmatprep.subr.bf16.mxu0 0
    %2028 = vmatpush1.bf16.xpose.msra.mxu0 0
    %2029 = vmatprep.subr.bf16.mxu0 0
    %2030 = vmatpush1.bf16.xpose.msra.mxu0 0
    %2031 = vmatprep.subr.bf16.mxu0 0
    %2032 = vmatpush1.bf16.xpose.msra.mxu0 0
    %2033 = vmatprep.subr.bf16.mxu0 0
    %2034 = vmatpush1.bf16.xpose.msra.mxu0 0
    %2035 = vmatprep.subr.bf16.mxu0 0
    %2036 = vmatpush1.bf16.xpose.msra.mxu0 0
    %2037 = vmatprep.subr.bf16.mxu0 0
    %2038 = vmatpush1.bf16.xpose.msra.mxu0 0
    %2039 = vmatprep.subr.bf16.mxu0 0
    %2040 = vmatpush1.bf16.xpose.msra.mxu0 0
    %2041 = vmatprep.subr.bf16.mxu0 0
    %2042 = vmatpush1.bf16.xpose.msra.mxu0 0
    %2043 = vmatprep.subr.bf16.mxu0 0
    %2044 = vmatpush1.bf16.xpose.msra.mxu0 0
    %2045 = vmatprep.subr.bf16.mxu0 0
    %2046 = vmatpush1.bf16.xpose.msra.mxu0 0
    %2047 = vmatprep.subr.bf16.mxu0 0
    %2048 = vmatpush1.bf16.xpose.msra.mxu0 0
    %2049 = vmatprep.mubr.bf16.mxu0 0
    %2050 = vmatmul.mubr.bf16.gmra.mrb[0].mxu0 %v2012
    %v2051 = vpop.f32.mrb[0].mxu0
    %v2052 = vadd.f32 0.0, %v2051
    %v2053 = vpop.f32.mrb[0].mxu0
    %v2054 = vpop.f32.mrb[0].mxu0
    %v2055 = vpop.f32.mrb[0].mxu0
    %2056 = vdwg.mxu0
    %2057 = vrot.lane.b32.xlu0 %v234, 104
    %v2058 = vpop.permute.xlu0 %2057
    %2059 = vrot.lane.b32.xlu0 %v304, 104
    %v2060 = vpop.permute.xlu0 %2059
    %v2062 = vsel %vm111, %v2058, 0
    %v2065 = vsel %vm111, %v2060, 0
    %2067 = vmatprep.subr.bf16.mxu0 0
    %2068 = vmatpush1.bf16.xpose.msra.mxu0 %v2065
    %2069 = vmatprep.subr.bf16.mxu0 0
    %2070 = vmatpush1.bf16.xpose.msra.mxu0 0
    %2071 = vmatprep.subr.bf16.mxu0 0
    %2072 = vmatpush1.bf16.xpose.msra.mxu0 0
    %2073 = vmatprep.subr.bf16.mxu0 0
    %2074 = vmatpush1.bf16.xpose.msra.mxu0 0
    %2075 = vmatprep.subr.bf16.mxu0 0
    %2076 = vmatpush1.bf16.xpose.msra.mxu0 0
    %2077 = vmatprep.subr.bf16.mxu0 0
    %2078 = vmatpush1.bf16.xpose.msra.mxu0 0
    %2079 = vmatprep.subr.bf16.mxu0 0
    %2080 = vmatpush1.bf16.xpose.msra.mxu0 0
    %2081 = vmatprep.subr.bf16.mxu0 0
    %2082 = vmatpush1.bf16.xpose.msra.mxu0 0
    %2083 = vmatprep.subr.bf16.mxu0 0
    %2084 = vmatpush1.bf16.xpose.msra.mxu0 0
    %2085 = vmatprep.subr.bf16.mxu0 0
    %2086 = vmatpush1.bf16.xpose.msra.mxu0 0
    %2087 = vmatprep.subr.bf16.mxu0 0
    %2088 = vmatpush1.bf16.xpose.msra.mxu0 0
    %2089 = vmatprep.subr.bf16.mxu0 0
    %2090 = vmatpush1.bf16.xpose.msra.mxu0 0
    %2091 = vmatprep.subr.bf16.mxu0 0
    %2092 = vmatpush1.bf16.xpose.msra.mxu0 0
    %2093 = vmatprep.subr.bf16.mxu0 0
    %2094 = vmatpush1.bf16.xpose.msra.mxu0 0
    %2095 = vmatprep.subr.bf16.mxu0 0
    %2096 = vmatpush1.bf16.xpose.msra.mxu0 0
    %2097 = vmatprep.subr.bf16.mxu0 0
    %2098 = vmatpush1.bf16.xpose.msra.mxu0 0
    %2099 = vmatprep.mubr.bf16.mxu0 0
    %2100 = vmatmul.mubr.bf16.gmra.mrb[0].mxu0 %v2062
    %v2101 = vpop.f32.mrb[0].mxu0
    %v2102 = vadd.f32 0.0, %v2101
    %v2103 = vpop.f32.mrb[0].mxu0
    %v2104 = vpop.f32.mrb[0].mxu0
    %v2105 = vpop.f32.mrb[0].mxu0
    %2106 = vdwg.mxu0
    %v2107 = vsel %vm470, %v2052, -inf
    %2108 = vmax.xlane.f32.xlu0 %v2107
    %v2109 = vpop.xlane.xlu0 %2108
    %v2110 = vsel %vm470, %v2102, -inf
    %2111 = vmax.xlane.f32.xlu0 %v2110
    %v2112 = vpop.xlane.xlu0 %2111
    %v2113 = vsub.f32 %v2052, %v2109
    %v2114 = vsub.f32 %v2102, %v2112
    %v2115 = vmul.f32 %v2113, 1.442695
    %v2116 = vpow.pop %v2115
    %v2117 = vmul.f32 %v2114, 1.442695
    %v2118 = vpow.pop %v2117
    %v2119 = vsel %vm470, %v2116, 0.0
    %2120 = vadd.xlane.f32.xlu0 %v2119
    %v2121 = vpop.xlane.xlu0 %2120
    %v2122 = vsel %vm470, %v2118, 0.0
    %2123 = vadd.xlane.f32.xlu0 %v2122
    %v2124 = vpop.xlane.xlu0 %2123
    %v2125 = vrcp.pop %v2121
    %v2126 = vrcp.pop %v2124
    %v2127 = vmul.f32 %v2116, %v2125
    %v2128 = vmul.f32 %v2118, %v2126
    %v2129 = vadd.f32 %v1855, %v2127
    %v2130 = vadd.f32 %v1856, %v2128
    %v2131 = vpack.c.bf16 %v2127, %v2127
    %v2132 = vpack.c.bf16 %v2128, %v2128
    %2133 = vrot.lane.b32.xlu0 %v376, 104
    %v2134 = vpop.permute.xlu0 %2133
    %v2136 = vsel %vm470, %v2131, 0
    %v2139 = vsel %vm500, %v2134, 0
    %2141 = vmatprep.subr.bf16.mxu0 0
    %2142 = vmatpush1.bf16.msra.mxu0 %v2139
    %2143 = vmatprep.subr.bf16.mxu0 0
    %2144 = vmatpush1.bf16.msra.mxu0 0
    %2145 = vmatprep.subr.bf16.mxu0 0
    %2146 = vmatpush1.bf16.msra.mxu0 0
    %2147 = vmatprep.subr.bf16.mxu0 0
    %2148 = vmatpush1.bf16.msra.mxu0 0
    %2149 = vmatprep.subr.bf16.mxu0 0
    %2150 = vmatpush1.bf16.msra.mxu0 0
    %2151 = vmatprep.subr.bf16.mxu0 0
    %2152 = vmatpush1.bf16.msra.mxu0 0
    %2153 = vmatprep.subr.bf16.mxu0 0
    %2154 = vmatpush1.bf16.msra.mxu0 0
    %2155 = vmatprep.subr.bf16.mxu0 0
    %2156 = vmatpush1.bf16.msra.mxu0 0
    %2157 = vmatprep.subr.bf16.mxu0 0
    %2158 = vmatpush1.bf16.msra.mxu0 0
    %2159 = vmatprep.subr.bf16.mxu0 0
    %2160 = vmatpush1.bf16.msra.mxu0 0
    %2161 = vmatprep.subr.bf16.mxu0 0
    %2162 = vmatpush1.bf16.msra.mxu0 0
    %2163 = vmatprep.subr.bf16.mxu0 0
    %2164 = vmatpush1.bf16.msra.mxu0 0
    %2165 = vmatprep.subr.bf16.mxu0 0
    %2166 = vmatpush1.bf16.msra.mxu0 0
    %2167 = vmatprep.subr.bf16.mxu0 0
    %2168 = vmatpush1.bf16.msra.mxu0 0
    %2169 = vmatprep.subr.bf16.mxu0 0
    %2170 = vmatpush1.bf16.msra.mxu0 0
    %2171 = vmatprep.subr.bf16.mxu0 0
    %2172 = vmatpush1.bf16.msra.mxu0 0
    %2173 = vmatprep.mubr.bf16.mxu0 0
    %2174 = vmatmul.mubr.bf16.gmra.mrb[0].mxu0 %v2136
    %v2175 = vpop.f32.mrb[0].mxu0
    %v2176 = vadd.f32 0.0, %v2175
    %v2177 = vpop.f32.mrb[0].mxu0
    %v2178 = vpop.f32.mrb[0].mxu0
    %v2179 = vpop.f32.mrb[0].mxu0
    %2180 = vdwg.mxu0
    %2181 = vrot.lane.b32.xlu0 %v377, 104
    %v2182 = vpop.permute.xlu0 %2181
    %v2184 = vsel %vm470, %v2132, 0
    %v2187 = vsel %vm500, %v2182, 0
    %2189 = vmatprep.subr.bf16.mxu0 0
    %2190 = vmatpush1.bf16.msra.mxu0 %v2187
    %2191 = vmatprep.subr.bf16.mxu0 0
    %2192 = vmatpush1.bf16.msra.mxu0 0
    %2193 = vmatprep.subr.bf16.mxu0 0
    %2194 = vmatpush1.bf16.msra.mxu0 0
    %2195 = vmatprep.subr.bf16.mxu0 0
    %2196 = vmatpush1.bf16.msra.mxu0 0
    %2197 = vmatprep.subr.bf16.mxu0 0
    %2198 = vmatpush1.bf16.msra.mxu0 0
    %2199 = vmatprep.subr.bf16.mxu0 0
    %2200 = vmatpush1.bf16.msra.mxu0 0
    %2201 = vmatprep.subr.bf16.mxu0 0
    %2202 = vmatpush1.bf16.msra.mxu0 0
    %2203 = vmatprep.subr.bf16.mxu0 0
    %2204 = vmatpush1.bf16.msra.mxu0 0
    %2205 = vmatprep.subr.bf16.mxu0 0
    %2206 = vmatpush1.bf16.msra.mxu0 0
    %2207 = vmatprep.subr.bf16.mxu0 0
    %2208 = vmatpush1.bf16.msra.mxu0 0
    %2209 = vmatprep.subr.bf16.mxu0 0
    %2210 = vmatpush1.bf16.msra.mxu0 0
    %2211 = vmatprep.subr.bf16.mxu0 0
    %2212 = vmatpush1.bf16.msra.mxu0 0
    %2213 = vmatprep.subr.bf16.mxu0 0
    %2214 = vmatpush1.bf16.msra.mxu0 0
    %2215 = vmatprep.subr.bf16.mxu0 0
    %2216 = vmatpush1.bf16.msra.mxu0 0
    %2217 = vmatprep.subr.bf16.mxu0 0
    %2218 = vmatpush1.bf16.msra.mxu0 0
    %2219 = vmatprep.subr.bf16.mxu0 0
    %2220 = vmatpush1.bf16.msra.mxu0 0
    %2221 = vmatprep.mubr.bf16.mxu0 0
    %2222 = vmatmul.mubr.bf16.gmra.mrb[0].mxu0 %v2184
    %v2223 = vpop.f32.mrb[0].mxu0
    %v2224 = vadd.f32 0.0, %v2223
    %v2225 = vpop.f32.mrb[0].mxu0
    %v2226 = vpop.f32.mrb[0].mxu0
    %v2227 = vpop.f32.mrb[0].mxu0
    %2228 = vdwg.mxu0
    %v2229 = vpack.c.bf16 %v2224, %v2176
    %s2230 = scalar_lea.vmem %s10, 12
    %v2231 = vld [vmem:[%s2230] sm:$0x3]
    %v2233 = vsel %vm111, %v2229, 0
    %v2236 = vsel %vm115, %v2231, 0
    %2238 = vmatprep.subr.bf16.mxu0 0
    %2239 = vmatpush1.bf16.msra.mxu0 %v2236
    %2240 = vmatprep.subr.bf16.mxu0 0
    %2241 = vmatpush1.bf16.msra.mxu0 0
    %2242 = vmatprep.subr.bf16.mxu0 0
    %2243 = vmatpush1.bf16.msra.mxu0 0
    %2244 = vmatprep.subr.bf16.mxu0 0
    %2245 = vmatpush1.bf16.msra.mxu0 0
    %2246 = vmatprep.subr.bf16.mxu0 0
    %2247 = vmatpush1.bf16.msra.mxu0 0
    %2248 = vmatprep.subr.bf16.mxu0 0
    %2249 = vmatpush1.bf16.msra.mxu0 0
    %2250 = vmatprep.subr.bf16.mxu0 0
    %2251 = vmatpush1.bf16.msra.mxu0 0
    %2252 = vmatprep.subr.bf16.mxu0 0
    %2253 = vmatpush1.bf16.msra.mxu0 0
    %2254 = vmatprep.subr.bf16.mxu0 0
    %2255 = vmatpush1.bf16.msra.mxu0 0
    %2256 = vmatprep.subr.bf16.mxu0 0
    %2257 = vmatpush1.bf16.msra.mxu0 0
    %2258 = vmatprep.subr.bf16.mxu0 0
    %2259 = vmatpush1.bf16.msra.mxu0 0
    %2260 = vmatprep.subr.bf16.mxu0 0
    %2261 = vmatpush1.bf16.msra.mxu0 0
    %2262 = vmatprep.subr.bf16.mxu0 0
    %2263 = vmatpush1.bf16.msra.mxu0 0
    %2264 = vmatprep.subr.bf16.mxu0 0
    %2265 = vmatpush1.bf16.msra.mxu0 0
    %2266 = vmatprep.subr.bf16.mxu0 0
    %2267 = vmatpush1.bf16.msra.mxu0 0
    %2268 = vmatprep.subr.bf16.mxu0 0
    %2269 = vmatpush1.bf16.msra.mxu0 0
    %2270 = vmatprep.mubr.bf16.mxu0 0
    %2271 = vmatmul.mubr.bf16.gmra.mrb[0].mxu0 %v2233
    %v2272 = vpop.f32.mrb[0].mxu0
    %v2273 = vadd.f32 0.0, %v2272
    %v2274 = vpop.f32.mrb[0].mxu0
    %v2275 = vpop.f32.mrb[0].mxu0
    %v2276 = vadd.f32 0.0, %v2275
    %v2277 = vpop.f32.mrb[0].mxu0
    %2278 = vdwg.mxu0
    %v2279 = vadd.f32 %v2005, %v2273
    %v2280 = vadd.f32 %v2006, %v2276
    %2281 = vrot.lane.b32.xlu0 %v233, 100
    %v2282 = vpop.permute.xlu0 %2281
    %2283 = vrot.lane.b32.xlu0 %v303, 100
    %v2284 = vpop.permute.xlu0 %2283
    %v2286 = vsel %vm111, %v2282, 0
    %v2289 = vsel %vm111, %v2284, 0
    %2291 = vmatprep.subr.bf16.mxu0 0
    %2292 = vmatpush1.bf16.xpose.msra.mxu0 %v2289
    %2293 = vmatprep.subr.bf16.mxu0 0
    %2294 = vmatpush1.bf16.xpose.msra.mxu0 0
    %2295 = vmatprep.subr.bf16.mxu0 0
    %2296 = vmatpush1.bf16.xpose.msra.mxu0 0
    %2297 = vmatprep.subr.bf16.mxu0 0
    %2298 = vmatpush1.bf16.xpose.msra.mxu0 0
    %2299 = vmatprep.subr.bf16.mxu0 0
    %2300 = vmatpush1.bf16.xpose.msra.mxu0 0
    %2301 = vmatprep.subr.bf16.mxu0 0
    %2302 = vmatpush1.bf16.xpose.msra.mxu0 0
    %2303 = vmatprep.subr.bf16.mxu0 0
    %2304 = vmatpush1.bf16.xpose.msra.mxu0 0
    %2305 = vmatprep.subr.bf16.mxu0 0
    %2306 = vmatpush1.bf16.xpose.msra.mxu0 0
    %2307 = vmatprep.subr.bf16.mxu0 0
    %2308 = vmatpush1.bf16.xpose.msra.mxu0 0
    %2309 = vmatprep.subr.bf16.mxu0 0
    %2310 = vmatpush1.bf16.xpose.msra.mxu0 0
    %2311 = vmatprep.subr.bf16.mxu0 0
    %2312 = vmatpush1.bf16.xpose.msra.mxu0 0
    %2313 = vmatprep.subr.bf16.mxu0 0
    %2314 = vmatpush1.bf16.xpose.msra.mxu0 0
    %2315 = vmatprep.subr.bf16.mxu0 0
    %2316 = vmatpush1.bf16.xpose.msra.mxu0 0
    %2317 = vmatprep.subr.bf16.mxu0 0
    %2318 = vmatpush1.bf16.xpose.msra.mxu0 0
    %2319 = vmatprep.subr.bf16.mxu0 0
    %2320 = vmatpush1.bf16.xpose.msra.mxu0 0
    %2321 = vmatprep.subr.bf16.mxu0 0
    %2322 = vmatpush1.bf16.xpose.msra.mxu0 0
    %2323 = vmatprep.mubr.bf16.mxu0 0
    %2324 = vmatmul.mubr.bf16.gmra.mrb[0].mxu0 %v2286
    %v2325 = vpop.f32.mrb[0].mxu0
    %v2326 = vadd.f32 0.0, %v2325
    %v2327 = vpop.f32.mrb[0].mxu0
    %v2328 = vpop.f32.mrb[0].mxu0
    %v2329 = vpop.f32.mrb[0].mxu0
    %2330 = vdwg.mxu0
    %2331 = vrot.lane.b32.xlu0 %v234, 100
    %v2332 = vpop.permute.xlu0 %2331
    %2333 = vrot.lane.b32.xlu0 %v304, 100
    %v2334 = vpop.permute.xlu0 %2333
    %v2336 = vsel %vm111, %v2332, 0
    %v2339 = vsel %vm111, %v2334, 0
    %2341 = vmatprep.subr.bf16.mxu0 0
    %2342 = vmatpush1.bf16.xpose.msra.mxu0 %v2339
    %2343 = vmatprep.subr.bf16.mxu0 0
    %2344 = vmatpush1.bf16.xpose.msra.mxu0 0
    %2345 = vmatprep.subr.bf16.mxu0 0
    %2346 = vmatpush1.bf16.xpose.msra.mxu0 0
    %2347 = vmatprep.subr.bf16.mxu0 0
    %2348 = vmatpush1.bf16.xpose.msra.mxu0 0
    %2349 = vmatprep.subr.bf16.mxu0 0
    %2350 = vmatpush1.bf16.xpose.msra.mxu0 0
    %2351 = vmatprep.subr.bf16.mxu0 0
    %2352 = vmatpush1.bf16.xpose.msra.mxu0 0
    %2353 = vmatprep.subr.bf16.mxu0 0
    %2354 = vmatpush1.bf16.xpose.msra.mxu0 0
    %2355 = vmatprep.subr.bf16.mxu0 0
    %2356 = vmatpush1.bf16.xpose.msra.mxu0 0
    %2357 = vmatprep.subr.bf16.mxu0 0
    %2358 = vmatpush1.bf16.xpose.msra.mxu0 0
    %2359 = vmatprep.subr.bf16.mxu0 0
    %2360 = vmatpush1.bf16.xpose.msra.mxu0 0
    %2361 = vmatprep.subr.bf16.mxu0 0
    %2362 = vmatpush1.bf16.xpose.msra.mxu0 0
    %2363 = vmatprep.subr.bf16.mxu0 0
    %2364 = vmatpush1.bf16.xpose.msra.mxu0 0
    %2365 = vmatprep.subr.bf16.mxu0 0
    %2366 = vmatpush1.bf16.xpose.msra.mxu0 0
    %2367 = vmatprep.subr.bf16.mxu0 0
    %2368 = vmatpush1.bf16.xpose.msra.mxu0 0
    %2369 = vmatprep.subr.bf16.mxu0 0
    %2370 = vmatpush1.bf16.xpose.msra.mxu0 0
    %2371 = vmatprep.subr.bf16.mxu0 0
    %2372 = vmatpush1.bf16.xpose.msra.mxu0 0
    %2373 = vmatprep.mubr.bf16.mxu0 0
    %2374 = vmatmul.mubr.bf16.gmra.mrb[0].mxu0 %v2336
    %v2375 = vpop.f32.mrb[0].mxu0
    %v2376 = vadd.f32 0.0, %v2375
    %v2377 = vpop.f32.mrb[0].mxu0
    %v2378 = vpop.f32.mrb[0].mxu0
    %v2379 = vpop.f32.mrb[0].mxu0
    %2380 = vdwg.mxu0
    %v2381 = vsel %vm470, %v2326, -inf
    %2382 = vmax.xlane.f32.xlu0 %v2381
    %v2383 = vpop.xlane.xlu0 %2382
    %v2384 = vsel %vm470, %v2376, -inf
    %2385 = vmax.xlane.f32.xlu0 %v2384
    %v2386 = vpop.xlane.xlu0 %2385
    %v2387 = vsub.f32 %v2326, %v2383
    %v2388 = vsub.f32 %v2376, %v2386
    %v2389 = vmul.f32 %v2387, 1.442695
    %v2390 = vpow.pop %v2389
    %v2391 = vmul.f32 %v2388, 1.442695
    %v2392 = vpow.pop %v2391
    %v2393 = vsel %vm470, %v2390, 0.0
    %2394 = vadd.xlane.f32.xlu0 %v2393
    %v2395 = vpop.xlane.xlu0 %2394
    %v2396 = vsel %vm470, %v2392, 0.0
    %2397 = vadd.xlane.f32.xlu0 %v2396
    %v2398 = vpop.xlane.xlu0 %2397
    %v2399 = vrcp.pop %v2395
    %v2400 = vrcp.pop %v2398
    %v2401 = vmul.f32 %v2390, %v2399
    %v2402 = vmul.f32 %v2392, %v2400
    %v2403 = vadd.f32 %v2129, %v2401
    %v2404 = vadd.f32 %v2130, %v2402
    %v2405 = vpack.c.bf16 %v2401, %v2401
    %v2406 = vpack.c.bf16 %v2402, %v2402
    %2407 = vrot.lane.b32.xlu0 %v376, 100
    %v2408 = vpop.permute.xlu0 %2407
    %v2410 = vsel %vm470, %v2405, 0
    %v2413 = vsel %vm500, %v2408, 0
    %2415 = vmatprep.subr.bf16.mxu0 0
    %2416 = vmatpush1.bf16.msra.mxu0 %v2413
    %2417 = vmatprep.subr.bf16.mxu0 0
    %2418 = vmatpush1.bf16.msra.mxu0 0
    %2419 = vmatprep.subr.bf16.mxu0 0
    %2420 = vmatpush1.bf16.msra.mxu0 0
    %2421 = vmatprep.subr.bf16.mxu0 0
    %2422 = vmatpush1.bf16.msra.mxu0 0
    %2423 = vmatprep.subr.bf16.mxu0 0
    %2424 = vmatpush1.bf16.msra.mxu0 0
    %2425 = vmatprep.subr.bf16.mxu0 0
    %2426 = vmatpush1.bf16.msra.mxu0 0
    %2427 = vmatprep.subr.bf16.mxu0 0
    %2428 = vmatpush1.bf16.msra.mxu0 0
    %2429 = vmatprep.subr.bf16.mxu0 0
    %2430 = vmatpush1.bf16.msra.mxu0 0
    %2431 = vmatprep.subr.bf16.mxu0 0
    %2432 = vmatpush1.bf16.msra.mxu0 0
    %2433 = vmatprep.subr.bf16.mxu0 0
    %2434 = vmatpush1.bf16.msra.mxu0 0
    %2435 = vmatprep.subr.bf16.mxu0 0
    %2436 = vmatpush1.bf16.msra.mxu0 0
    %2437 = vmatprep.subr.bf16.mxu0 0
    %2438 = vmatpush1.bf16.msra.mxu0 0
    %2439 = vmatprep.subr.bf16.mxu0 0
    %2440 = vmatpush1.bf16.msra.mxu0 0
    %2441 = vmatprep.subr.bf16.mxu0 0
    %2442 = vmatpush1.bf16.msra.mxu0 0
    %2443 = vmatprep.subr.bf16.mxu0 0
    %2444 = vmatpush1.bf16.msra.mxu0 0
    %2445 = vmatprep.subr.bf16.mxu0 0
    %2446 = vmatpush1.bf16.msra.mxu0 0
    %2447 = vmatprep.mubr.bf16.mxu0 0
    %2448 = vmatmul.mubr.bf16.gmra.mrb[0].mxu0 %v2410
    %v2449 = vpop.f32.mrb[0].mxu0
    %v2450 = vadd.f32 0.0, %v2449
    %v2451 = vpop.f32.mrb[0].mxu0
    %v2452 = vpop.f32.mrb[0].mxu0
    %v2453 = vpop.f32.mrb[0].mxu0
    %2454 = vdwg.mxu0
    %2455 = vrot.lane.b32.xlu0 %v377, 100
    %v2456 = vpop.permute.xlu0 %2455
    %v2458 = vsel %vm470, %v2406, 0
    %v2461 = vsel %vm500, %v2456, 0
    %2463 = vmatprep.subr.bf16.mxu0 0
    %2464 = vmatpush1.bf16.msra.mxu0 %v2461
    %2465 = vmatprep.subr.bf16.mxu0 0
    %2466 = vmatpush1.bf16.msra.mxu0 0
    %2467 = vmatprep.subr.bf16.mxu0 0
    %2468 = vmatpush1.bf16.msra.mxu0 0
    %2469 = vmatprep.subr.bf16.mxu0 0
    %2470 = vmatpush1.bf16.msra.mxu0 0
    %2471 = vmatprep.subr.bf16.mxu0 0
    %2472 = vmatpush1.bf16.msra.mxu0 0
    %2473 = vmatprep.subr.bf16.mxu0 0
    %2474 = vmatpush1.bf16.msra.mxu0 0
    %2475 = vmatprep.subr.bf16.mxu0 0
    %2476 = vmatpush1.bf16.msra.mxu0 0
    %2477 = vmatprep.subr.bf16.mxu0 0
    %2478 = vmatpush1.bf16.msra.mxu0 0
    %2479 = vmatprep.subr.bf16.mxu0 0
    %2480 = vmatpush1.bf16.msra.mxu0 0
    %2481 = vmatprep.subr.bf16.mxu0 0
    %2482 = vmatpush1.bf16.msra.mxu0 0
    %2483 = vmatprep.subr.bf16.mxu0 0
    %2484 = vmatpush1.bf16.msra.mxu0 0
    %2485 = vmatprep.subr.bf16.mxu0 0
    %2486 = vmatpush1.bf16.msra.mxu0 0
    %2487 = vmatprep.subr.bf16.mxu0 0
    %2488 = vmatpush1.bf16.msra.mxu0 0
    %2489 = vmatprep.subr.bf16.mxu0 0
    %2490 = vmatpush1.bf16.msra.mxu0 0
    %2491 = vmatprep.subr.bf16.mxu0 0
    %2492 = vmatpush1.bf16.msra.mxu0 0
    %2493 = vmatprep.subr.bf16.mxu0 0
    %2494 = vmatpush1.bf16.msra.mxu0 0
    %2495 = vmatprep.mubr.bf16.mxu0 0
    %2496 = vmatmul.mubr.bf16.gmra.mrb[0].mxu0 %v2458
    %v2497 = vpop.f32.mrb[0].mxu0
    %v2498 = vadd.f32 0.0, %v2497
    %v2499 = vpop.f32.mrb[0].mxu0
    %v2500 = vpop.f32.mrb[0].mxu0
    %v2501 = vpop.f32.mrb[0].mxu0
    %2502 = vdwg.mxu0
    %v2503 = vpack.c.bf16 %v2498, %v2450
    %s2504 = scalar_lea.vmem %s10, 14
    %v2505 = vld [vmem:[%s2504] sm:$0x3]
    %v2507 = vsel %vm111, %v2503, 0
    %v2510 = vsel %vm115, %v2505, 0
    %2512 = vmatprep.subr.bf16.mxu0 0
    %2513 = vmatpush1.bf16.msra.mxu0 %v2510
    %2514 = vmatprep.subr.bf16.mxu0 0
    %2515 = vmatpush1.bf16.msra.mxu0 0
    %2516 = vmatprep.subr.bf16.mxu0 0
    %2517 = vmatpush1.bf16.msra.mxu0 0
    %2518 = vmatprep.subr.bf16.mxu0 0
    %2519 = vmatpush1.bf16.msra.mxu0 0
    %2520 = vmatprep.subr.bf16.mxu0 0
    %2521 = vmatpush1.bf16.msra.mxu0 0
    %2522 = vmatprep.subr.bf16.mxu0 0
    %2523 = vmatpush1.bf16.msra.mxu0 0
    %2524 = vmatprep.subr.bf16.mxu0 0
    %2525 = vmatpush1.bf16.msra.mxu0 0
    %2526 = vmatprep.subr.bf16.mxu0 0
    %2527 = vmatpush1.bf16.msra.mxu0 0
    %2528 = vmatprep.subr.bf16.mxu0 0
    %2529 = vmatpush1.bf16.msra.mxu0 0
    %2530 = vmatprep.subr.bf16.mxu0 0
    %2531 = vmatpush1.bf16.msra.mxu0 0
    %2532 = vmatprep.subr.bf16.mxu0 0
    %2533 = vmatpush1.bf16.msra.mxu0 0
    %2534 = vmatprep.subr.bf16.mxu0 0
    %2535 = vmatpush1.bf16.msra.mxu0 0
    %2536 = vmatprep.subr.bf16.mxu0 0
    %2537 = vmatpush1.bf16.msra.mxu0 0
    %2538 = vmatprep.subr.bf16.mxu0 0
    %2539 = vmatpush1.bf16.msra.mxu0 0
    %2540 = vmatprep.subr.bf16.mxu0 0
    %2541 = vmatpush1.bf16.msra.mxu0 0
    %2542 = vmatprep.subr.bf16.mxu0 0
    %2543 = vmatpush1.bf16.msra.mxu0 0
    %2544 = vmatprep.mubr.bf16.mxu0 0
    %2545 = vmatmul.mubr.bf16.gmra.mrb[0].mxu0 %v2507
    %v2546 = vpop.f32.mrb[0].mxu0
    %v2547 = vadd.f32 0.0, %v2546
    %v2548 = vpop.f32.mrb[0].mxu0
    %v2549 = vpop.f32.mrb[0].mxu0
    %v2550 = vadd.f32 0.0, %v2549
    %v2551 = vpop.f32.mrb[0].mxu0
    %2552 = vdwg.mxu0
    %v2553 = vadd.f32 %v2279, %v2547
    %v2554 = vadd.f32 %v2280, %v2550
    %v2555 = vld [vmem:[%s11] sm:$0x1]
    %v2557 = vlaneseq
    %v2558 = vshrl.u32 %v2557, 7
    %v2559 = vsub.s32 0, %v2558
    %v2560 = vrot.slane %v2555, %v2559
    %v2562 = vadd.f32 %v2553, %v2560
    %v2563 = vadd.f32 %v2554, %v2560
    %2564 = vst.msk [vmem:[#allocation10] sm:$0xff] %vm184, %v2562
    %2565 = vst.msk [vmem:[#allocation10 + $0x8] sm:$0xff] %vm184, %v2563
    %v2566 = vmul.f32 %v2403, 0.125
    %v2567 = vmul.f32 %v2404, 0.125
    %2568 = vst.msk [vmem:[#allocation11] sm:$0xff] %vm470, %v2566
    %2569 = vst.msk [vmem:[#allocation11 + $0x8] sm:$0xff] %vm470, %v2567
    // Predicated region
    $region66: #{tpu_custom_call.1} parent=1 // pred_check
      _
    $region67: #{tpu_custom_call.1} parent=1 // pred_check_branch
      %2571 = sbr.rel (0) target = $region69
    $region68: #{tpu_custom_call.1} parent=1 // pred_region
      %s2573 = ssub.s32 256, 256
      %2574 = vsyncadd [#allocation4], %s2573
      %s2575 = sshll.u32 [#allocation10], 4
      %s2576 = int_to_ptr.vmem [resolvable:$true] %s2575
      %2581 = dma.vmem_to_hbm [thread:$0]  %s2576, 256, %s12, [#allocation4], 128, 128, 8
    $region69: #{tpu_custom_call.1} parent=1 // pred_fallthru
      _
    // Predicated region
    $region70: #{tpu_custom_call.1} parent=1 // pred_check
      _
    $region71: #{tpu_custom_call.1} parent=1 // pred_check_branch
      %2583 = sbr.rel (0) target = $region73
    $region72: #{tpu_custom_call.1} parent=1 // pred_region
      %s2585 = ssub.s32 256, 256
      %2586 = vsyncadd [#allocation12], %s2585
      %s2587 = sshll.u32 [#allocation11], 4
      %s2588 = int_to_ptr.vmem [resolvable:$true] %s2587
      %2593 = dma.vmem_to_hbm [thread:$0]  %s2588, 256, %s13, [#allocation12], 128, 128, 8
    $region73: #{tpu_custom_call.1} parent=1 // pred_fallthru
      _
    // Predicated region
    $region74: #{tpu_custom_call.1} parent=1 // pred_check
      _
    $region75: #{tpu_custom_call.1} parent=1 // pred_check_branch
      %2595 = sbr.rel (0) target = $region77
    $region76: #{tpu_custom_call.1} parent=1 // pred_region
      %2596 = dma.done [#allocation4], 256
    $region77: #{tpu_custom_call.1} parent=1 // pred_fallthru
      _
    // Predicated region
    $region78: #{tpu_custom_call.1} parent=1 // pred_check
      _
    $region79: #{tpu_custom_call.1} parent=1 // pred_check_branch
      %2598 = sbr.rel (0) target = $region81
    $region80: #{tpu_custom_call.1} parent=1 // pred_region
      %2599 = dma.done [#allocation12], 256
    $region81: #{tpu_custom_call.1} parent=1 // pred_fallthru
      _
    %2600 = vsyncpa [#allocation3], 1
    %2601 = vsyncpa [#allocation6], 1
    %2602 = vsyncpa [#allocation9], 1
    %2603 = vsyncpa [#allocation4], 1
    %2604 = vsyncpa [#allocation12], 1

</llo_original>
